<compile_context>
chip_gen: v6e
topology: v6e:2x2x1
jax: 0.10.0
libtpu: 0.0.40
codegen_flags: <defaults>
</compile_context>

<pallas_src>
import functools
from typing import NamedTuple

import numpy as np
import jax
import jax.numpy as jnp
from jax.experimental import pallas as pl
from jax.experimental.pallas import tpu as pltpu


class Predictions(NamedTuple):
    loss: jnp.ndarray


def _round_up(x, m):
    return ((x + m - 1) // m) * m


# --------------------------------------------------------------------------- #
# Pallas kernel: continuous conv (sim points) + LeakyReLU + Linear + Softplus  #
# --------------------------------------------------------------------------- #
def _head_kernel(dt_ref, msk_ref, emb_ref, w1e_ref, b1e_ref, mexp_ref,
                 r_ref, t_ref, w2e_ref, wl_ref, bl_ref, sc_ref, lam_ref,
                 *, K, H, CIN, neg=0.1):
    """One tile of TM query points.

    dt_ref  : (TM, K)  f32     time deltas to the K most recent events
    msk_ref : (TM, K)  f32     validity mask for each window slot
    emb_ref : (K, TM, CIN) bf16  gathered window embeddings (per-k slabs)
    w1e_ref : (K, K*(H+1)) f32   block-diag expansion of kernel-MLP w1 (+0 col)
    b1e_ref : (1, K*(H+1)) f32   tiled kernel-MLP b1 (+1 in the "ones" slot)
    mexp_ref: (K, K*(H+1)) f32   kron(I_K, 1_{H+1}) mask expansion
    r_ref   : (H+1, (H+1)*CIN) bf16  kron(I_{H+1}, 1_{CIN}) lane expansion of hm_k
    t_ref   : (CIN, (H+1)*CIN) bf16  kron(1_{H+1}, I_CIN) lane tiling of emb_k
    w2e_ref : ((H+1)*CIN, COUT) f32  stacked [W2 ; b2] kernel-MLP second layer
    wl/bl   : (COUT, T), (1, T) f32  head Linear(nb_filters -> num_types)
    sc_ref  : (1, T)   f32     exp(softplus_params)
    lam_ref : (TM, T)  f32     output intensities
    """
    HP1 = H + 1
    TM = dt_ref.shape[0]

    dt = dt_ref[...]                                    # (TM, K)
    msk = msk_ref[...]                                  # (TM, K)

    # Kernel-MLP hidden activations for every (k, h) at once, plus one extra
    # always-one slot per k that routes the bias matrix b2 through the same
    # outer-product machinery:  pre[:, k*(H+1)+h] = dt_k * w1[h] + b1[h],
    # pre[:, k*(H+1)+H] = 1.  LeakyReLU(1) == 1, so the slot stays 1.
    pre = jnp.dot(dt, w1e_ref[...], preferred_element_type=jnp.float32) \
        + b1e_ref[...]                                  # (TM, K*(H+1))
    act = jnp.where(pre >= 0, pre, neg * pre)
    hm = act * jnp.dot(msk, mexp_ref[...],
                       preferred_element_type=jnp.float32)   # masked, (TM, K*(H+1))
    # One bf16 rounding of hm; the 0/1 expansion matmuls below are then exact
    # and run at full bf16 MXU rate.  Accumulation stays f32.
    hm_bf = hm.astype(jnp.bfloat16)

    r_mat = r_ref[...]                                  # (HP1, HP1*CIN) bf16
    t_mat = t_ref[...]                                  # (CIN, HP1*CIN) bf16

    # Accumulate  X[:, h*CIN + i] = sum_k hm[:, k*(H+1)+h] * emb_k[:, i]
    xe = jnp.zeros((TM, HP1 * CIN), jnp.float32)
    for k in range(K):                                  # K is small & static
        hm_k = hm_bf[:, k * HP1:(k + 1) * HP1]          # (TM, HP1)   bf16
        e_k = emb_ref[k]                                # (TM, CIN)   bf16
        # outer product realised as two bf16 MXU expansions + one f32 VPU mul
        he = jnp.dot(hm_k, r_mat, preferred_element_type=jnp.float32)
        ee = jnp.dot(e_k, t_mat, preferred_element_type=jnp.float32)
        xe = xe + he * ee

    # One 288-deep MXU contraction replaces K*(H+1) tiny matmuls:
    #   conv = sum_h S_h @ W2[h] + E_acc @ b2        (kept in f32 for accuracy)
    conv = jnp.dot(xe, w2e_ref[...], preferred_element_type=jnp.float32)  # (TM, COUT)

    # self.activation = LeakyReLU(0.1)
    conv = jnp.where(conv >= 0, conv, neg * conv)

    # self.layer = Linear(nb_filters, num_types)
    z = jnp.dot(conv, wl_ref[...], preferred_element_type=jnp.float32) + bl_ref[...]

    # self.softplus(.) * self.softplus_params.exp()
    sp = jnp.maximum(z, 0.0) + jnp.log1p(jnp.exp(-jnp.abs(z)))
    lam_ref[...] = sp * sc_ref[...]


# --------------------------------------------------------------------------- #
# Glue: window construction (gathers), pallas_call wrapper, loss assembly      #
# --------------------------------------------------------------------------- #
def _build_windows(times, uniform_sample, K, L_out, scale):
    """Builds query-time deltas / masks / window indices (pure JAX glue).

    Returns dt (B, L_out, K), msk (B, L_out, K), jc (L_out, K) with L_out
    possibly larger than the true number of query points (padded rows are
    garbage and are sliced off after the kernel).
    """
    B, S = times.shape
    N = uniform_sample.shape[0]
    NP1 = N + 1

    p = jnp.arange(L_out)
    a = jnp.minimum(p // NP1, S - 1)                   # anchor event index
    r = p % NP1
    u_full = jnp.concatenate([jnp.zeros((1,), times.dtype), uniform_sample])[r]
    t_a = times[:, a]                                                    # (B, L)
    t_next = times[:, jnp.minimum(a + 1, S - 1)]                         # (B, L)
    tau = t_a + u_full[None, :] * (t_next - t_a)                         # (B, L)

    j = a[:, None] - jnp.arange(K)[None, :]            # (L, K) event indices
    valid = (j >= 0)
    jc = jnp.maximum(j, 0)
    t_win = times[:, jc]                               # (B, L, K)

    msk = jnp.broadcast_to(valid[None, :, :], (B, L_out, K)).astype(jnp.float32)
    dt = (tau[:, :, None] - t_win) * msk               # (B, L, K)
    if scale:
        mx = jnp.max(times, axis=1)
        mx = jnp.where(mx > 0, mx, 1.0)                # guard fully-padded seqs
        dt = dt / mx[:, None, None]
    return dt.astype(jnp.float32), msk, jc


def compute_lambdas_pallas(params, times, embeddings, uniform_sample,
                           scale=True, tile_m=256):
    B, S = times.shape
    C = embeddings.shape[-1]
    T = params["num_types"]
    H = params["hidden"]
    K = min(params["kernel_size"], S)
    N = int(uniform_sample.shape[0])
    NP1 = N + 1
    HP1 = H + 1
    KH = K * HP1
    E = HP1 * C
    L = (S - 1) * NP1 + 1

    # Choose a tile size <= tile_m that keeps padding waste small.
    n_tiles = max(1, -(-L // tile_m))
    tm = _round_up(-(-L // n_tiles), 8)
    L_pad = tm * n_tiles

    dt, msk, jc = _build_windows(times, uniform_sample, K, L_pad, scale)
    # Gathered windows go to HBM in bf16 and in a (B, K, L_pad, C) layout so
    # the kernel can index window slot k with a free leading-axis index.
    emb_t = embeddings.astype(jnp.bfloat16)[:, jc.T, :]        # (B, K, L_pad, C)

    f32 = jnp.float32
    bf16 = jnp.bfloat16
    w1ext = jnp.concatenate([params["w1"][0], jnp.zeros((1,), f32)])   # (H+1,)
    b1ext = jnp.concatenate([params["b1"][0], jnp.ones((1,), f32)])    # (H+1,)
    w1e = jnp.kron(jnp.eye(K, dtype=f32), w1ext[None, :])              # (K, K*(H+1))
    b1e = jnp.tile(b1ext, (K,))[None, :]                               # (1, K*(H+1))
    mexp = jnp.kron(jnp.eye(K, dtype=f32), jnp.ones((1, HP1), f32))    # (K, K*(H+1))
    # 0/1 expansion matrices are exact in bf16 -> full-rate MXU inside kernel.
    r_exp = jnp.kron(jnp.eye(HP1, dtype=f32),
                     jnp.ones((1, C), f32)).astype(bf16)               # (H+1, E)
    t_exp = jnp.kron(jnp.ones((1, HP1), f32),
                     jnp.eye(C, dtype=f32)).astype(bf16)               # (C, E)
    w2e = jnp.concatenate([params["w2"], params["b2"]], axis=0)        # (E, C)
    sc = jnp.exp(params["softplus_params"])[0]                         # (1, T)

    kernel = functools.partial(_head_kernel, K=K, H=H, CIN=C)
    lam = pl.pallas_call(
        kernel,
        out_shape=jax.ShapeDtypeStruct((B, L_pad, T), jnp.float32),
        grid_spec=pltpu.PrefetchScalarGridSpec(
            num_scalar_prefetch=0,
            grid=(B, L_pad // tm),
            in_specs=[
                pl.BlockSpec((None, tm, K), lambda b, i: (b, i, 0)),       # dt
                pl.BlockSpec((None, tm, K), lambda b, i: (b, i, 0)),       # msk
                pl.BlockSpec((None, K, tm, C), lambda b, i: (b, 0, i, 0)),  # emb
                pl.BlockSpec((K, KH), lambda b, i: (0, 0)),                # w1e
                pl.BlockSpec((1, KH), lambda b, i: (0, 0)),                # b1e
                pl.BlockSpec((K, KH), lambda b, i: (0, 0)),                # mexp
                pl.BlockSpec((HP1, E), lambda b, i: (0, 0)),               # r_exp
                pl.BlockSpec((C, E), lambda b, i: (0, 0)),                 # t_exp
                pl.BlockSpec((E, C), lambda b, i: (0, 0)),                 # w2e
                pl.BlockSpec((C, T), lambda b, i: (0, 0)),                 # wl
                pl.BlockSpec((1, T), lambda b, i: (0, 0)),                 # bl
                pl.BlockSpec((1, T), lambda b, i: (0, 0)),                 # sc
            ],
            out_specs=pl.BlockSpec((None, tm, T), lambda b, i: (b, i, 0)),
        ),
        compiler_params=pltpu.CompilerParams(
            dimension_semantics=("parallel", "parallel")),
    )(dt, msk, emb_t, w1e, b1e, mexp, r_exp, t_exp, w2e,
      params["wl"], params["bl"], sc)

    return lam[:, :L, :]


def compute_lambdas_reference(params, times, embeddings, uniform_sample, scale=True):
    """Pure-JAX f32 reference for the Pallas kernel (sanity check only)."""
    B, S = times.shape
    C = embeddings.shape[-1]
    H = params["hidden"]
    K = min(params["kernel_size"], S)
    N = int(uniform_sample.shape[0])
    L = (S - 1) * (N + 1) + 1

    dt, msk, jc = _build_windows(times, uniform_sample, K, L, scale)
    emb_win = embeddings[:, jc, :]                                # (B, L, K, C)
    h = dt[..., None] * params["w1"][0] + params["b1"][0]         # (B, L, K, H)
    h = jnp.where(h >= 0, h, 0.1 * h)
    W2 = params["w2"].reshape(H, C, C)
    kv = jnp.einsum("blkh,hio->blkio", h, W2) + params["b2"]      # (B, L, K, C, C)
    conv = jnp.einsum("blki,blkio,blk->blo", emb_win, kv, msk)    # (B, L, C)
    conv = jnp.where(conv >= 0, conv, 0.1 * conv)
    z = conv @ params["wl"] + params["bl"][0]
    lam = jax.nn.softplus(z) * jnp.exp(params["softplus_params"])[0]
    return lam


def intensity_head_forward(params, times, events, embeddings, non_pad_mask,
                           uniform_sample):
    """Mirrors IntensityHeadLinear.forward."""
    B, S = times.shape
    T = params["num_types"]
    N = int(uniform_sample.shape[0])
    NP1 = N + 1

    lambdas = compute_lambdas_pallas(params, times, embeddings, uniform_sample,
                                     scale=True)                 # (B, L, T)

    # events_index = events - 1 ; events_index[events_index == -1] = 0
    events_index = events - 1
    events_index = jnp.where(events_index == -1, 0, events_index)

    # lambdas at the true event times (every (N+1)-th query point)
    ev_lam_all = lambdas[:, ::NP1, :]                             # (B, S, T)
    events_lambdas = jnp.take_along_axis(
        ev_lam_all, events_index[:, :, None], axis=2)[..., 0]     # (B, S)

    # non-event (simulated) points via structured reshape (no gather)
    non_event_lambdas = lambdas[:, :-1, :].reshape(B, S - 1, NP1, T)[:, :, 1:, :]

    integral = (non_event_lambdas.sum(axis=(-2, -1))
                * (times[:, 1:] - times[:, :-1]) / N)             # (B, S-1)

    loss = (jnp.sum(-jnp.log(events_lambdas + 1e-8) * non_pad_mask)
            + jnp.sum(integral * non_pad_mask[:, 1:]))
    return Predictions(loss=loss)


# --------------------------------------------------------------------------- #
# Deterministic parameter init (shapes from __init__ of the module)            #
# --------------------------------------------------------------------------- #
def init_params(key, kernel_size, nb_filters, num_types, hidden=8):
    ks = jax.random.split(key, 6)

    def u(kk, shape, fan_in):
        b = 1.0 / np.sqrt(fan_in)
        return jax.random.uniform(kk, shape, jnp.float32, -b, b)

    return dict(
        kernel_size=kernel_size,
        num_types=num_types,
        hidden=hidden,
        # ContinuousConv1DSim kernel network: Linear(1,H) -> LeakyReLU -> Linear(H, C*C)
        w1=u(ks[0], (1, hidden), 1),
        b1=u(ks[1], (1, hidden), 1),
        w2=u(ks[2], (hidden * nb_filters, nb_filters), hidden),   # (H*Cin, Cout)
        b2=u(ks[3], (nb_filters, nb_filters), hidden),            # (Cin, Cout)
        # self.layer = nn.Linear(nb_filters, num_types)  (stored as (in, out))
        wl=u(ks[4], (nb_filters, num_types), nb_filters),
        bl=u(ks[5], (1, num_types), nb_filters),
        # self.softplus_params = full((1,1,num_types), log(num_types))
        softplus_params=jnp.full((1, 1, num_types), np.log(num_types), jnp.float32),
    )


if __name__ == "__main__":
    B, S, C, T = 2, 8, 32, 5          # batch, seq, nb_filters, num_types
    KS, N = 5, 4                      # kernel_size, len(uniform_sample)

    key = jax.random.PRNGKey(0)
    k0, k1, k2, k3, k4 = jax.random.split(key, 5)

    incr = jax.random.uniform(k0, (B, S), jnp.float32, 0.1, 1.0)
    times = jnp.cumsum(incr, axis=1)                              # sorted event times
    embeddings = jax.random.normal(k1, (B, S, C), jnp.float32)
    events = jax.random.randint(k2, (B, S), 0, T + 1)             # 0 = padding type
    non_pad_mask = (events > 0).astype(jnp.float32)
    uniform_sample = jnp.sort(jax.random.uniform(k3, (N,), jnp.float32, 0.01, 0.99))

    params = init_params(k4, KS, C, T)

    # sanity check the Pallas hot path against a pure-JAX f32 reference
    # (the Pallas path stores the gathered embedding windows and hm in bf16)
    lam_pallas = compute_lambdas_pallas(params, times, embeddings, uniform_sample)
    lam_ref = compute_lambdas_reference(params, times, embeddings, uniform_sample)
    np.testing.assert_allclose(np.asarray(lam_pallas), np.asarray(lam_ref),
                               rtol=5e-2, atol=1e-2)

    out = intensity_head_forward(params, times, events, embeddings,
                                 non_pad_mask, uniform_sample)
    jax.block_until_ready(out.loss)
    assert np.isfinite(float(out.loss))
    print("KERNEL_OK")
</pallas_src>

<mosaic_0001>
module attributes {stable_mosaic.version = 11 : i64} {
  func.func @_head_kernel(%arg0: i32, %arg1: i32, %arg2: memref<1x40x5xf32, #tpu.memory_space<vmem>>, %arg3: memref<1x40x5xf32, #tpu.memory_space<vmem>>, %arg4: memref<1x5x40x32xbf16, #tpu.memory_space<vmem>>, %arg5: memref<5x45xf32, #tpu.memory_space<vmem>>, %arg6: memref<1x45xf32, #tpu.memory_space<vmem>>, %arg7: memref<5x45xf32, #tpu.memory_space<vmem>>, %arg8: memref<9x288xbf16, #tpu.memory_space<vmem>>, %arg9: memref<32x288xbf16, #tpu.memory_space<vmem>>, %arg10: memref<288x32xf32, #tpu.memory_space<vmem>>, %arg11: memref<32x5xf32, #tpu.memory_space<vmem>>, %arg12: memref<1x5xf32, #tpu.memory_space<vmem>>, %arg13: memref<1x5xf32, #tpu.memory_space<vmem>>, %arg14: memref<1x40x5xf32, #tpu.memory_space<vmem>>) attributes {dimension_semantics = [#tpu.dimension_semantics<parallel>, #tpu.dimension_semantics<parallel>], iteration_bounds = array<i64: 2, 1>, scalar_prefetch = 0 : i64, scratch_operands = 0 : i64, tpu.core_type = #tpu.core_type<tc>, window_params = [{transform_indices = @transform_0, window_bounds = array<i64: 1, 40, 5>}, {transform_indices = @transform_1, window_bounds = array<i64: 1, 40, 5>}, {transform_indices = @transform_2, window_bounds = array<i64: 1, 5, 40, 32>}, {pipeline_mode = #tpu.pipeline_mode<synchronous>, transform_indices = @transform_3, window_bounds = array<i64: 5, 45>}, {pipeline_mode = #tpu.pipeline_mode<synchronous>, transform_indices = @transform_4, window_bounds = array<i64: 1, 45>}, {pipeline_mode = #tpu.pipeline_mode<synchronous>, transform_indices = @transform_5, window_bounds = array<i64: 5, 45>}, {pipeline_mode = #tpu.pipeline_mode<synchronous>, transform_indices = @transform_6, window_bounds = array<i64: 9, 288>}, {pipeline_mode = #tpu.pipeline_mode<synchronous>, transform_indices = @transform_7, window_bounds = array<i64: 32, 288>}, {pipeline_mode = #tpu.pipeline_mode<synchronous>, transform_indices = @transform_8, window_bounds = array<i64: 288, 32>}, {pipeline_mode = #tpu.pipeline_mode<synchronous>, transform_indices = @transform_9, window_bounds = array<i64: 32, 5>}, {pipeline_mode = #tpu.pipeline_mode<synchronous>, transform_indices = @transform_10, window_bounds = array<i64: 1, 5>}, {pipeline_mode = #tpu.pipeline_mode<synchronous>, transform_indices = @transform_11, window_bounds = array<i64: 1, 5>}, {transform_indices = @transform_12, window_bounds = array<i64: 1, 40, 5>}]} {
    %c0 = arith.constant 0 : index
    %c0_0 = arith.constant 0 : index
    %c0_1 = arith.constant 0 : index
    %0 = vector.load %arg2[%c0, %c0_0, %c0_1] : memref<1x40x5xf32, #tpu.memory_space<vmem>>, vector<1x40x5xf32>
    %1 = vector.shape_cast %0 : vector<1x40x5xf32> to vector<40x5xf32>
    %c0_2 = arith.constant 0 : index
    %c0_3 = arith.constant 0 : index
    %c0_4 = arith.constant 0 : index
    %2 = vector.load %arg3[%c0_2, %c0_3, %c0_4] : memref<1x40x5xf32, #tpu.memory_space<vmem>>, vector<1x40x5xf32>
    %3 = vector.shape_cast %2 : vector<1x40x5xf32> to vector<40x5xf32>
    %c0_5 = arith.constant 0 : index
    %c0_6 = arith.constant 0 : index
    %4 = vector.load %arg5[%c0_5, %c0_6] : memref<5x45xf32, #tpu.memory_space<vmem>>, vector<5x45xf32>
    %cst = arith.constant dense<0.000000e+00> : vector<40x45xf32>
    %5 = tpu.matmul %1, %4, %cst {dimension_numbers = #tpu.dot_dimension_numbers<[1], [0], [0], [1], [0, 0, 1, 1], [], []>} : vector<40x5xf32>, vector<5x45xf32>, vector<40x45xf32> -> vector<40x45xf32>
    %c0_7 = arith.constant 0 : index
    %c0_8 = arith.constant 0 : index
    %6 = vector.load %arg6[%c0_7, %c0_8] : memref<1x45xf32, #tpu.memory_space<vmem>>, vector<1x45xf32>
    %7 = vector.broadcast %6 : vector<1x45xf32> to vector<40x45xf32>
    %8 = arith.addf %5, %7 : vector<40x45xf32>
    %cst_9 = arith.constant 0.000000e+00 : f32
    %9 = vector.broadcast %cst_9 : f32 to vector<40x45xf32>
    %10 = arith.cmpf oge, %8, %9 : vector<40x45xf32>
    %cst_10 = arith.constant 1.000000e-01 : f32
    %11 = vector.broadcast %cst_10 : f32 to vector<40x45xf32>
    %12 = arith.mulf %11, %8 : vector<40x45xf32>
    %13 = arith.select %10, %8, %12 : vector<40x45xi1>, vector<40x45xf32>
    %c0_11 = arith.constant 0 : index
    %c0_12 = arith.constant 0 : index
    %14 = vector.load %arg7[%c0_11, %c0_12] : memref<5x45xf32, #tpu.memory_space<vmem>>, vector<5x45xf32>
    %cst_13 = arith.constant dense<0.000000e+00> : vector<40x45xf32>
    %15 = tpu.matmul %3, %14, %cst_13 {dimension_numbers = #tpu.dot_dimension_numbers<[1], [0], [0], [1], [0, 0, 1, 1], [], []>} : vector<40x5xf32>, vector<5x45xf32>, vector<40x45xf32> -> vector<40x45xf32>
    %16 = arith.mulf %13, %15 : vector<40x45xf32>
    %17 = arith.truncf %16 : vector<40x45xf32> to vector<40x45xbf16>
    %c0_14 = arith.constant 0 : index
    %c0_15 = arith.constant 0 : index
    %18 = vector.load %arg8[%c0_14, %c0_15] : memref<9x288xbf16, #tpu.memory_space<vmem>>, vector<9x288xbf16>
    %c0_16 = arith.constant 0 : index
    %c0_17 = arith.constant 0 : index
    %19 = vector.load %arg9[%c0_16, %c0_17] : memref<32x288xbf16, #tpu.memory_space<vmem>>, vector<32x288xbf16>
    %cst_18 = arith.constant 0.000000e+00 : f32
    %20 = vector.broadcast %cst_18 : f32 to vector<40x288xf32>
    %21 = vector.extract_strided_slice %17 {offsets = [0, 0], sizes = [40, 9], strides = [1, 1]} : vector<40x45xbf16> to vector<40x9xbf16>
    %c0_19 = arith.constant 0 : index
    %c0_20 = arith.constant 0 : index
    %c0_21 = arith.constant 0 : index
    %c0_22 = arith.constant 0 : index
    %22 = vector.load %arg4[%c0_19, %c0_20, %c0_21, %c0_22] : memref<1x5x40x32xbf16, #tpu.memory_space<vmem>>, vector<1x1x40x32xbf16>
    %23 = vector.shape_cast %22 : vector<1x1x40x32xbf16> to vector<40x32xbf16>
    %cst_23 = arith.constant dense<0.000000e+00> : vector<40x288xf32>
    %24 = tpu.matmul %21, %18, %cst_23 {dimension_numbers = #tpu.dot_dimension_numbers<[1], [0], [0], [1], [0, 0, 1, 1], [], []>} : vector<40x9xbf16>, vector<9x288xbf16>, vector<40x288xf32> -> vector<40x288xf32>
    %cst_24 = arith.constant dense<0.000000e+00> : vector<40x288xf32>
    %25 = tpu.matmul %23, %19, %cst_24 {dimension_numbers = #tpu.dot_dimension_numbers<[1], [0], [0], [1], [0, 0, 1, 1], [], []>} : vector<40x32xbf16>, vector<32x288xbf16>, vector<40x288xf32> -> vector<40x288xf32>
    %26 = arith.mulf %24, %25 : vector<40x288xf32>
    %27 = arith.addf %20, %26 : vector<40x288xf32>
    %28 = vector.extract_strided_slice %17 {offsets = [0, 9], sizes = [40, 9], strides = [1, 1]} : vector<40x45xbf16> to vector<40x9xbf16>
    %c0_25 = arith.constant 0 : index
    %c1 = arith.constant 1 : index
    %c0_26 = arith.constant 0 : index
    %c0_27 = arith.constant 0 : index
    %29 = vector.load %arg4[%c0_25, %c1, %c0_26, %c0_27] : memref<1x5x40x32xbf16, #tpu.memory_space<vmem>>, vector<1x1x40x32xbf16>
    %30 = vector.shape_cast %29 : vector<1x1x40x32xbf16> to vector<40x32xbf16>
    %cst_28 = arith.constant dense<0.000000e+00> : vector<40x288xf32>
    %31 = tpu.matmul %28, %18, %cst_28 {dimension_numbers = #tpu.dot_dimension_numbers<[1], [0], [0], [1], [0, 0, 1, 1], [], []>} : vector<40x9xbf16>, vector<9x288xbf16>, vector<40x288xf32> -> vector<40x288xf32>
    %cst_29 = arith.constant dense<0.000000e+00> : vector<40x288xf32>
    %32 = tpu.matmul %30, %19, %cst_29 {dimension_numbers = #tpu.dot_dimension_numbers<[1], [0], [0], [1], [0, 0, 1, 1], [], []>} : vector<40x32xbf16>, vector<32x288xbf16>, vector<40x288xf32> -> vector<40x288xf32>
    %33 = arith.mulf %31, %32 : vector<40x288xf32>
    %34 = arith.addf %27, %33 : vector<40x288xf32>
    %35 = vector.extract_strided_slice %17 {offsets = [0, 18], sizes = [40, 9], strides = [1, 1]} : vector<40x45xbf16> to vector<40x9xbf16>
    %c0_30 = arith.constant 0 : index
    %c2 = arith.constant 2 : index
    %c0_31 = arith.constant 0 : index
    %c0_32 = arith.constant 0 : index
    %36 = vector.load %arg4[%c0_30, %c2, %c0_31, %c0_32] : memref<1x5x40x32xbf16, #tpu.memory_space<vmem>>, vector<1x1x40x32xbf16>
    %37 = vector.shape_cast %36 : vector<1x1x40x32xbf16> to vector<40x32xbf16>
    %cst_33 = arith.constant dense<0.000000e+00> : vector<40x288xf32>
    %38 = tpu.matmul %35, %18, %cst_33 {dimension_numbers = #tpu.dot_dimension_numbers<[1], [0], [0], [1], [0, 0, 1, 1], [], []>} : vector<40x9xbf16>, vector<9x288xbf16>, vector<40x288xf32> -> vector<40x288xf32>
    %cst_34 = arith.constant dense<0.000000e+00> : vector<40x288xf32>
    %39 = tpu.matmul %37, %19, %cst_34 {dimension_numbers = #tpu.dot_dimension_numbers<[1], [0], [0], [1], [0, 0, 1, 1], [], []>} : vector<40x32xbf16>, vector<32x288xbf16>, vector<40x288xf32> -> vector<40x288xf32>
    %40 = arith.mulf %38, %39 : vector<40x288xf32>
    %41 = arith.addf %34, %40 : vector<40x288xf32>
    %42 = vector.extract_strided_slice %17 {offsets = [0, 27], sizes = [40, 9], strides = [1, 1]} : vector<40x45xbf16> to vector<40x9xbf16>
    %c0_35 = arith.constant 0 : index
    %c3 = arith.constant 3 : index
    %c0_36 = arith.constant 0 : index
    %c0_37 = arith.constant 0 : index
    %43 = vector.load %arg4[%c0_35, %c3, %c0_36, %c0_37] : memref<1x5x40x32xbf16, #tpu.memory_space<vmem>>, vector<1x1x40x32xbf16>
    %44 = vector.shape_cast %43 : vector<1x1x40x32xbf16> to vector<40x32xbf16>
    %cst_38 = arith.constant dense<0.000000e+00> : vector<40x288xf32>
    %45 = tpu.matmul %42, %18, %cst_38 {dimension_numbers = #tpu.dot_dimension_numbers<[1], [0], [0], [1], [0, 0, 1, 1], [], []>} : vector<40x9xbf16>, vector<9x288xbf16>, vector<40x288xf32> -> vector<40x288xf32>
    %cst_39 = arith.constant dense<0.000000e+00> : vector<40x288xf32>
    %46 = tpu.matmul %44, %19, %cst_39 {dimension_numbers = #tpu.dot_dimension_numbers<[1], [0], [0], [1], [0, 0, 1, 1], [], []>} : vector<40x32xbf16>, vector<32x288xbf16>, vector<40x288xf32> -> vector<40x288xf32>
    %47 = arith.mulf %45, %46 : vector<40x288xf32>
    %48 = arith.addf %41, %47 : vector<40x288xf32>
    %49 = vector.extract_strided_slice %17 {offsets = [0, 36], sizes = [40, 9], strides = [1, 1]} : vector<40x45xbf16> to vector<40x9xbf16>
    %c0_40 = arith.constant 0 : index
    %c4 = arith.constant 4 : index
    %c0_41 = arith.constant 0 : index
    %c0_42 = arith.constant 0 : index
    %50 = vector.load %arg4[%c0_40, %c4, %c0_41, %c0_42] : memref<1x5x40x32xbf16, #tpu.memory_space<vmem>>, vector<1x1x40x32xbf16>
    %51 = vector.shape_cast %50 : vector<1x1x40x32xbf16> to vector<40x32xbf16>
    %cst_43 = arith.constant dense<0.000000e+00> : vector<40x288xf32>
    %52 = tpu.matmul %49, %18, %cst_43 {dimension_numbers = #tpu.dot_dimension_numbers<[1], [0], [0], [1], [0, 0, 1, 1], [], []>} : vector<40x9xbf16>, vector<9x288xbf16>, vector<40x288xf32> -> vector<40x288xf32>
    %cst_44 = arith.constant dense<0.000000e+00> : vector<40x288xf32>
    %53 = tpu.matmul %51, %19, %cst_44 {dimension_numbers = #tpu.dot_dimension_numbers<[1], [0], [0], [1], [0, 0, 1, 1], [], []>} : vector<40x32xbf16>, vector<32x288xbf16>, vector<40x288xf32> -> vector<40x288xf32>
    %54 = arith.mulf %52, %53 : vector<40x288xf32>
    %55 = arith.addf %48, %54 : vector<40x288xf32>
    %c0_45 = arith.constant 0 : index
    %c0_46 = arith.constant 0 : index
    %56 = vector.load %arg10[%c0_45, %c0_46] : memref<288x32xf32, #tpu.memory_space<vmem>>, vector<288x32xf32>
    %cst_47 = arith.constant dense<0.000000e+00> : vector<40x32xf32>
    %57 = tpu.matmul %55, %56, %cst_47 {dimension_numbers = #tpu.dot_dimension_numbers<[1], [0], [0], [1], [0, 0, 1, 1], [], []>} : vector<40x288xf32>, vector<288x32xf32>, vector<40x32xf32> -> vector<40x32xf32>
    %cst_48 = arith.constant 0.000000e+00 : f32
    %58 = vector.broadcast %cst_48 : f32 to vector<40x32xf32>
    %59 = arith.cmpf oge, %57, %58 : vector<40x32xf32>
    %cst_49 = arith.constant 1.000000e-01 : f32
    %60 = vector.broadcast %cst_49 : f32 to vector<40x32xf32>
    %61 = arith.mulf %60, %57 : vector<40x32xf32>
    %62 = arith.select %59, %57, %61 : vector<40x32xi1>, vector<40x32xf32>
    %c0_50 = arith.constant 0 : index
    %c0_51 = arith.constant 0 : index
    %63 = vector.load %arg11[%c0_50, %c0_51] : memref<32x5xf32, #tpu.memory_space<vmem>>, vector<32x5xf32>
    %cst_52 = arith.constant dense<0.000000e+00> : vector<40x5xf32>
    %64 = tpu.matmul %62, %63, %cst_52 {dimension_numbers = #tpu.dot_dimension_numbers<[1], [0], [0], [1], [0, 0, 1, 1], [], []>} : vector<40x32xf32>, vector<32x5xf32>, vector<40x5xf32> -> vector<40x5xf32>
    %c0_53 = arith.constant 0 : index
    %c0_54 = arith.constant 0 : index
    %65 = vector.load %arg12[%c0_53, %c0_54] : memref<1x5xf32, #tpu.memory_space<vmem>>, vector<1x5xf32>
    %66 = vector.broadcast %65 : vector<1x5xf32> to vector<40x5xf32>
    %67 = arith.addf %64, %66 : vector<40x5xf32>
    %cst_55 = arith.constant 0.000000e+00 : f32
    %68 = vector.broadcast %cst_55 : f32 to vector<40x5xf32>
    %69 = arith.maximumf %67, %68 : vector<40x5xf32>
    %70 = math.absf %67 : vector<40x5xf32>
    %cst_56 = arith.constant 0.000000e+00 : f32
    %71 = vector.broadcast %cst_56 : f32 to vector<40x5xf32>
    %72 = arith.subf %71, %70 : vector<40x5xf32>
    %73 = math.exp %72 : vector<40x5xf32>
    %74 = math.log1p %73 : vector<40x5xf32>
    %75 = arith.addf %69, %74 : vector<40x5xf32>
    %c0_57 = arith.constant 0 : index
    %c0_58 = arith.constant 0 : index
    %76 = vector.load %arg13[%c0_57, %c0_58] : memref<1x5xf32, #tpu.memory_space<vmem>>, vector<1x5xf32>
    %77 = vector.broadcast %76 : vector<1x5xf32> to vector<40x5xf32>
    %78 = arith.mulf %75, %77 : vector<40x5xf32>
    %c0_59 = arith.constant 0 : index
    %c0_60 = arith.constant 0 : index
    %c0_61 = arith.constant 0 : index
    %79 = vector.load %arg14[%c0_59, %c0_60, %c0_61] : memref<1x40x5xf32, #tpu.memory_space<vmem>>, vector<1x40x5xf32>
    %80 = vector.shape_cast %79 : vector<1x40x5xf32> to vector<40x5xf32>
    %81 = vector.shape_cast %78 : vector<40x5xf32> to vector<1x40x5xf32>
    tpu.vector_store %arg14[%c0_59, %c0_60, %c0_61], %81 {strides = array<i32>} : memref<1x40x5xf32, #tpu.memory_space<vmem>>, vector<1x40x5xf32>,
    return
  }
  func.func @transform_0(%arg0: i32, %arg1: i32) -> (i32, i32, i32) {
    %c0_i32 = arith.constant 0 : i32
    %c0_i32_0 = arith.constant 0 : i32
    return %arg0, %arg1, %c0_i32 : i32, i32, i32
  }
  func.func @transform_1(%arg0: i32, %arg1: i32) -> (i32, i32, i32) {
    %c0_i32 = arith.constant 0 : i32
    %c0_i32_0 = arith.constant 0 : i32
    return %arg0, %arg1, %c0_i32 : i32, i32, i32
  }
  func.func @transform_2(%arg0: i32, %arg1: i32) -> (i32, i32, i32, i32) {
    %c0_i32 = arith.constant 0 : i32
    %c0_i32_0 = arith.constant 0 : i32
    %c0_i32_1 = arith.constant 0 : i32
    return %arg0, %c0_i32, %arg1, %c0_i32_0 : i32, i32, i32, i32
  }
  func.func @transform_3(%arg0: i32, %arg1: i32) -> (i32, i32) {
    %c0_i32 = arith.constant 0 : i32
    %c0_i32_0 = arith.constant 0 : i32
    %c0_i32_1 = arith.constant 0 : i32
    return %c0_i32, %c0_i32_0 : i32, i32
  }
  func.func @transform_4(%arg0: i32, %arg1: i32) -> (i32, i32) {
    %c0_i32 = arith.constant 0 : i32
    %c0_i32_0 = arith.constant 0 : i32
    %c0_i32_1 = arith.constant 0 : i32
    return %c0_i32, %c0_i32_0 : i32, i32
  }
  func.func @transform_5(%arg0: i32, %arg1: i32) -> (i32, i32) {
    %c0_i32 = arith.constant 0 : i32
    %c0_i32_0 = arith.constant 0 : i32
    %c0_i32_1 = arith.constant 0 : i32
    return %c0_i32, %c0_i32_0 : i32, i32
  }
  func.func @transform_6(%arg0: i32, %arg1: i32) -> (i32, i32) {
    %c0_i32 = arith.constant 0 : i32
    %c0_i32_0 = arith.constant 0 : i32
    %c0_i32_1 = arith.constant 0 : i32
    return %c0_i32, %c0_i32_0 : i32, i32
  }
  func.func @transform_7(%arg0: i32, %arg1: i32) -> (i32, i32) {
    %c0_i32 = arith.constant 0 : i32
    %c0_i32_0 = arith.constant 0 : i32
    %c0_i32_1 = arith.constant 0 : i32
    return %c0_i32, %c0_i32_0 : i32, i32
  }
  func.func @transform_8(%arg0: i32, %arg1: i32) -> (i32, i32) {
    %c0_i32 = arith.constant 0 : i32
    %c0_i32_0 = arith.constant 0 : i32
    %c0_i32_1 = arith.constant 0 : i32
    return %c0_i32, %c0_i32_0 : i32, i32
  }
  func.func @transform_9(%arg0: i32, %arg1: i32) -> (i32, i32) {
    %c0_i32 = arith.constant 0 : i32
    %c0_i32_0 = arith.constant 0 : i32
    %c0_i32_1 = arith.constant 0 : i32
    return %c0_i32, %c0_i32_0 : i32, i32
  }
  func.func @transform_10(%arg0: i32, %arg1: i32) -> (i32, i32) {
    %c0_i32 = arith.constant 0 : i32
    %c0_i32_0 = arith.constant 0 : i32
    %c0_i32_1 = arith.constant 0 : i32
    return %c0_i32, %c0_i32_0 : i32, i32
  }
  func.func @transform_11(%arg0: i32, %arg1: i32) -> (i32, i32) {
    %c0_i32 = arith.constant 0 : i32
    %c0_i32_0 = arith.constant 0 : i32
    %c0_i32_1 = arith.constant 0 : i32
    return %c0_i32, %c0_i32_0 : i32, i32
  }
  func.func @transform_12(%arg0: i32, %arg1: i32) -> (i32, i32, i32) {
    %c0_i32 = arith.constant 0 : i32
    %c0_i32_0 = arith.constant 0 : i32
    return %arg0, %arg1, %c0_i32 : i32, i32, i32
  }
}

</mosaic_0001>

<llo_original>
// kernel: tpu_custom_call.1
$region0: #{tpu_custom_call.1}
  #allocation0 [shape = 'u32[]', space=smem, size = 0x4, offset = 0x4, fixed_abs, tag = 'smem constant byte address 0x4 - core index']
  #allocation1 [shape = 'u32[144,128]{1,0:T(1,128)}', space=vmem, size = 0x12000, scoped, tag = 'internal scratch']
  %s0 = inlined_call_operand.vmem [shape: f32[2,40,5], index: 0, kind: input, shape index: {}]
  %s1 = inlined_call_operand.vmem [shape: f32[2,40,5], index: 1, kind: input, shape index: {}]
  %s2 = inlined_call_operand.vmem [shape: bf16[2,5,40,32], index: 2, kind: input, shape index: {}]
  %s3 = inlined_call_operand.vmem [shape: f32[5,45], index: 3, kind: input, shape index: {}]
  %s4 = inlined_call_operand.vmem [shape: f32[1,45], index: 4, kind: input, shape index: {}]
  %s5 = inlined_call_operand.vmem [shape: f32[5,45], index: 5, kind: input, shape index: {}]
  %s6 = inlined_call_operand.vmem [shape: bf16[9,288], index: 6, kind: input, shape index: {}]
  %s7 = inlined_call_operand.vmem [shape: bf16[32,288], index: 7, kind: input, shape index: {}]
  %s8 = inlined_call_operand.vmem [shape: f32[288,32], index: 8, kind: input, shape index: {}]
  %s9 = inlined_call_operand.vmem [shape: f32[32,5], index: 9, kind: input, shape index: {}]
  %s10 = inlined_call_operand.vmem [shape: f32[1,5], index: 10, kind: input, shape index: {}]
  %s11 = inlined_call_operand.vmem [shape: f32[1,5], index: 11, kind: input, shape index: {}]
  %s12 = inlined_call_operand.vmem [shape: f32[2,40,5], index: 12, kind: output, shape index: {}]
  %s13 = sld [smem:[#allocation0]]
  $region81: #{tpu_custom_call.1} parent=0
    _
  %s15 = ssub.s32 1, %s13
  %s16 = scalar_select 0, %s15, %s13
  loop: start=0, step=1, limit=4
  $region2: #{tpu_custom_call.1} parent=0 // loop_pre_header
    _
  $region3: #{tpu_custom_call.1} parent=0 // loop_header
    %s18 = sphi 0, %s22
    %p19 = scmp.ge.s32.totalorder %s18, 4
    %s25 = sphi 0, %s37
    %s26 = sphi 0, %s33
    %s27 = sphi 0, %s25
    %s28 = sphi 0, %s26
    %s29 = sphi 0, %s27
    %s30 = sphi 0, %s28
    %s42 = sphi 0, %s44
    %s45 = sphi 0, %s42
    %s46 = sphi 0, %s45
    %s62 = sphi 0, %s46
    %s70 = sphi 0, %s72
    %s73 = sphi 0, %s70
    %s74 = sphi 0, %s73
    %s90 = sphi 0, %s74
    %s98 = sphi 0, %s100
    %s101 = sphi 0, %s98
    %s102 = sphi 0, %s101
    %s118 = sphi 0, %s102
    %s122 = sphi 0, %s122
    %s124 = sphi 0, %s122
    %s125 = sphi 0, %s124
    %s139 = sphi 0, %s125
    %s143 = sphi 0, %s143
    %s145 = sphi 0, %s143
    %s146 = sphi 0, %s145
    %s160 = sphi 0, %s146
    %s164 = sphi 0, %s164
    %s166 = sphi 0, %s164
    %s167 = sphi 0, %s166
    %s181 = sphi 0, %s167
    %s185 = sphi 0, %s185
    %s187 = sphi 0, %s185
    %s188 = sphi 0, %s187
    %s202 = sphi 0, %s188
    %s206 = sphi 0, %s206
    %s208 = sphi 0, %s206
    %s209 = sphi 0, %s208
    %s223 = sphi 0, %s209
    %s227 = sphi 0, %s227
    %s229 = sphi 0, %s227
    %s230 = sphi 0, %s229
    %s244 = sphi 0, %s230
    %s248 = sphi 0, %s248
    %s250 = sphi 0, %s248
    %s251 = sphi 0, %s250
    %s265 = sphi 0, %s251
    %s269 = sphi 0, %s269
    %s271 = sphi 0, %s269
    %s272 = sphi 0, %s271
    %s286 = sphi 0, %s272
    %s290 = sphi 0, %s290
    %s292 = sphi 0, %s290
    %s293 = sphi 0, %s292
    %s307 = sphi 0, %s293
    %s315 = sphi 0, %s317
    %s318 = sphi 0, %s315
    %s319 = sphi 0, %s318
    %s335 = sphi 0, %s319
  $region4: #{tpu_custom_call.1} parent=0 // loop_header_branch
    %21 = sbr.rel (%p19) target = $region8
  $region5: #{tpu_custom_call.1} parent=0 // loop_body
    %s23 = ssub.s32 %s18, 1
    %s24 = ssub.s32 %s18, 2
    %s31 = sadd.s32 1, %s26
    %p32 = scmp.ge.s32.totalorder %s31, 1
    %s33 = scalar_select %p32, 0, %s31
    %s34 = sadd.s32 1, %s25
    %s35 = scalar_select %p32, %s34, %s25
    %p36 = scmp.ge.s32.totalorder %s35, 2
    %s37 = scalar_select %p36, 0, %s35
    %s38 = ssub.s32 %s25, %s37
    %s39 = ssub.s32 %s26, %s33
    %s40 = sor.u32 %s38, %s39
    %p41 = scmp.eq.s32.totalorder %s40, 0
    %s43 = sadd.s32 %s42, 1
    %s44 = scalar_select %p41, %s42, %s43
    %p47 = pneg %p41
    %p48 = scmp.eq.s32.totalorder %s18, 1
    %p49 = por %p47, %p48
    %p50 = scmp.ne.s32.totalorder %s42, %s45
    %p51 = scmp.eq.s32.totalorder %s18, 0
    %p52 = por %p50, %p51
    %p53 = scmp.ne.s32.totalorder %s42, %s45
    %p54 = scmp.eq.s32.totalorder %s23, 1
    %p55 = por %p53, %p54
    %p56 = scmp.ne.s32.totalorder %s45, %s46
    %p57 = scmp.eq.s32.totalorder %s23, 0
    %p58 = por %p56, %p57
    %p59 = scmp.ne.s32.totalorder %s45, %s46
    %p60 = scmp.eq.s32.totalorder %s24, 1
    %p61 = por %p59, %p60
    %p63 = scmp.ne.s32.totalorder %s46, %s62
    %p64 = scmp.eq.s32.totalorder %s24, 0
    %p65 = por %p63, %p64
    %s66 = ssub.s32 %s25, %s37
    %s67 = ssub.s32 %s26, %s33
    %s68 = sor.u32 %s66, %s67
    %p69 = scmp.eq.s32.totalorder %s68, 0
    %s71 = sadd.s32 %s70, 1
    %s72 = scalar_select %p69, %s70, %s71
    %p75 = pneg %p69
    %p76 = scmp.eq.s32.totalorder %s18, 1
    %p77 = por %p75, %p76
    %p78 = scmp.ne.s32.totalorder %s70, %s73
    %p79 = scmp.eq.s32.totalorder %s18, 0
    %p80 = por %p78, %p79
    %p81 = scmp.ne.s32.totalorder %s70, %s73
    %p82 = scmp.eq.s32.totalorder %s23, 1
    %p83 = por %p81, %p82
    %p84 = scmp.ne.s32.totalorder %s73, %s74
    %p85 = scmp.eq.s32.totalorder %s23, 0
    %p86 = por %p84, %p85
    %p87 = scmp.ne.s32.totalorder %s73, %s74
    %p88 = scmp.eq.s32.totalorder %s24, 1
    %p89 = por %p87, %p88
    %p91 = scmp.ne.s32.totalorder %s74, %s90
    %p92 = scmp.eq.s32.totalorder %s24, 0
    %p93 = por %p91, %p92
    %s94 = ssub.s32 %s25, %s37
    %s95 = ssub.s32 %s26, %s33
    %s96 = sor.u32 %s94, %s95
    %p97 = scmp.eq.s32.totalorder %s96, 0
    %s99 = sadd.s32 %s98, 1
    %s100 = scalar_select %p97, %s98, %s99
    %p103 = pneg %p97
    %p104 = scmp.eq.s32.totalorder %s18, 1
    %p105 = por %p103, %p104
    %p106 = scmp.ne.s32.totalorder %s98, %s101
    %p107 = scmp.eq.s32.totalorder %s18, 0
    %p108 = por %p106, %p107
    %p109 = scmp.ne.s32.totalorder %s98, %s101
    %p110 = scmp.eq.s32.totalorder %s23, 1
    %p111 = por %p109, %p110
    %p112 = scmp.ne.s32.totalorder %s101, %s102
    %p113 = scmp.eq.s32.totalorder %s23, 0
    %p114 = por %p112, %p113
    %p115 = scmp.ne.s32.totalorder %s101, %s102
    %p116 = scmp.eq.s32.totalorder %s24, 1
    %p117 = por %p115, %p116
    %p119 = scmp.ne.s32.totalorder %s102, %s118
    %p120 = scmp.eq.s32.totalorder %s24, 0
    %p121 = por %p119, %p120
    %s123 = sadd.s32 %s122, 1
    %p126 = scmp.eq.s32.totalorder %s18, 1
    %p127 = scmp.ne.s32.totalorder %s122, %s124
    %p128 = scmp.eq.s32.totalorder %s18, 0
    %p129 = por %p127, %p128
    %p130 = scmp.ne.s32.totalorder %s122, %s124
    %p131 = scmp.eq.s32.totalorder %s23, 1
    %p132 = por %p130, %p131
    %p133 = scmp.ne.s32.totalorder %s124, %s125
    %p134 = scmp.eq.s32.totalorder %s23, 0
    %p135 = por %p133, %p134
    %p136 = scmp.ne.s32.totalorder %s124, %s125
    %p137 = scmp.eq.s32.totalorder %s24, 1
    %p138 = por %p136, %p137
    %p140 = scmp.ne.s32.totalorder %s125, %s139
    %p141 = scmp.eq.s32.totalorder %s24, 0
    %p142 = por %p140, %p141
    %s144 = sadd.s32 %s143, 1
    %p147 = scmp.eq.s32.totalorder %s18, 1
    %p148 = scmp.ne.s32.totalorder %s143, %s145
    %p149 = scmp.eq.s32.totalorder %s18, 0
    %p150 = por %p148, %p149
    %p151 = scmp.ne.s32.totalorder %s143, %s145
    %p152 = scmp.eq.s32.totalorder %s23, 1
    %p153 = por %p151, %p152
    %p154 = scmp.ne.s32.totalorder %s145, %s146
    %p155 = scmp.eq.s32.totalorder %s23, 0
    %p156 = por %p154, %p155
    %p157 = scmp.ne.s32.totalorder %s145, %s146
    %p158 = scmp.eq.s32.totalorder %s24, 1
    %p159 = por %p157, %p158
    %p161 = scmp.ne.s32.totalorder %s146, %s160
    %p162 = scmp.eq.s32.totalorder %s24, 0
    %p163 = por %p161, %p162
    %s165 = sadd.s32 %s164, 1
    %p168 = scmp.eq.s32.totalorder %s18, 1
    %p169 = scmp.ne.s32.totalorder %s164, %s166
    %p170 = scmp.eq.s32.totalorder %s18, 0
    %p171 = por %p169, %p170
    %p172 = scmp.ne.s32.totalorder %s164, %s166
    %p173 = scmp.eq.s32.totalorder %s23, 1
    %p174 = por %p172, %p173
    %p175 = scmp.ne.s32.totalorder %s166, %s167
    %p176 = scmp.eq.s32.totalorder %s23, 0
    %p177 = por %p175, %p176
    %p178 = scmp.ne.s32.totalorder %s166, %s167
    %p179 = scmp.eq.s32.totalorder %s24, 1
    %p180 = por %p178, %p179
    %p182 = scmp.ne.s32.totalorder %s167, %s181
    %p183 = scmp.eq.s32.totalorder %s24, 0
    %p184 = por %p182, %p183
    %s186 = sadd.s32 %s185, 1
    %p189 = scmp.eq.s32.totalorder %s18, 1
    %p190 = scmp.ne.s32.totalorder %s185, %s187
    %p191 = scmp.eq.s32.totalorder %s18, 0
    %p192 = por %p190, %p191
    %p193 = scmp.ne.s32.totalorder %s185, %s187
    %p194 = scmp.eq.s32.totalorder %s23, 1
    %p195 = por %p193, %p194
    %p196 = scmp.ne.s32.totalorder %s187, %s188
    %p197 = scmp.eq.s32.totalorder %s23, 0
    %p198 = por %p196, %p197
    %p199 = scmp.ne.s32.totalorder %s187, %s188
    %p200 = scmp.eq.s32.totalorder %s24, 1
    %p201 = por %p199, %p200
    %p203 = scmp.ne.s32.totalorder %s188, %s202
    %p204 = scmp.eq.s32.totalorder %s24, 0
    %p205 = por %p203, %p204
    %s207 = sadd.s32 %s206, 1
    %p210 = scmp.eq.s32.totalorder %s18, 1
    %p211 = scmp.ne.s32.totalorder %s206, %s208
    %p212 = scmp.eq.s32.totalorder %s18, 0
    %p213 = por %p211, %p212
    %p214 = scmp.ne.s32.totalorder %s206, %s208
    %p215 = scmp.eq.s32.totalorder %s23, 1
    %p216 = por %p214, %p215
    %p217 = scmp.ne.s32.totalorder %s208, %s209
    %p218 = scmp.eq.s32.totalorder %s23, 0
    %p219 = por %p217, %p218
    %p220 = scmp.ne.s32.totalorder %s208, %s209
    %p221 = scmp.eq.s32.totalorder %s24, 1
    %p222 = por %p220, %p221
    %p224 = scmp.ne.s32.totalorder %s209, %s223
    %p225 = scmp.eq.s32.totalorder %s24, 0
    %p226 = por %p224, %p225
    %s228 = sadd.s32 %s227, 1
    %p231 = scmp.eq.s32.totalorder %s18, 1
    %p232 = scmp.ne.s32.totalorder %s227, %s229
    %p233 = scmp.eq.s32.totalorder %s18, 0
    %p234 = por %p232, %p233
    %p235 = scmp.ne.s32.totalorder %s227, %s229
    %p236 = scmp.eq.s32.totalorder %s23, 1
    %p237 = por %p235, %p236
    %p238 = scmp.ne.s32.totalorder %s229, %s230
    %p239 = scmp.eq.s32.totalorder %s23, 0
    %p240 = por %p238, %p239
    %p241 = scmp.ne.s32.totalorder %s229, %s230
    %p242 = scmp.eq.s32.totalorder %s24, 1
    %p243 = por %p241, %p242
    %p245 = scmp.ne.s32.totalorder %s230, %s244
    %p246 = scmp.eq.s32.totalorder %s24, 0
    %p247 = por %p245, %p246
    %s249 = sadd.s32 %s248, 1
    %p252 = scmp.eq.s32.totalorder %s18, 1
    %p253 = scmp.ne.s32.totalorder %s248, %s250
    %p254 = scmp.eq.s32.totalorder %s18, 0
    %p255 = por %p253, %p254
    %p256 = scmp.ne.s32.totalorder %s248, %s250
    %p257 = scmp.eq.s32.totalorder %s23, 1
    %p258 = por %p256, %p257
    %p259 = scmp.ne.s32.totalorder %s250, %s251
    %p260 = scmp.eq.s32.totalorder %s23, 0
    %p261 = por %p259, %p260
    %p262 = scmp.ne.s32.totalorder %s250, %s251
    %p263 = scmp.eq.s32.totalorder %s24, 1
    %p264 = por %p262, %p263
    %p266 = scmp.ne.s32.totalorder %s251, %s265
    %p267 = scmp.eq.s32.totalorder %s24, 0
    %p268 = por %p266, %p267
    %s270 = sadd.s32 %s269, 1
    %p273 = scmp.eq.s32.totalorder %s18, 1
    %p274 = scmp.ne.s32.totalorder %s269, %s271
    %p275 = scmp.eq.s32.totalorder %s18, 0
    %p276 = por %p274, %p275
    %p277 = scmp.ne.s32.totalorder %s269, %s271
    %p278 = scmp.eq.s32.totalorder %s23, 1
    %p279 = por %p277, %p278
    %p280 = scmp.ne.s32.totalorder %s271, %s272
    %p281 = scmp.eq.s32.totalorder %s23, 0
    %p282 = por %p280, %p281
    %p283 = scmp.ne.s32.totalorder %s271, %s272
    %p284 = scmp.eq.s32.totalorder %s24, 1
    %p285 = por %p283, %p284
    %p287 = scmp.ne.s32.totalorder %s272, %s286
    %p288 = scmp.eq.s32.totalorder %s24, 0
    %p289 = por %p287, %p288
    %s291 = sadd.s32 %s290, 1
    %p294 = scmp.eq.s32.totalorder %s18, 1
    %p295 = scmp.ne.s32.totalorder %s290, %s292
    %p296 = scmp.eq.s32.totalorder %s18, 0
    %p297 = por %p295, %p296
    %p298 = scmp.ne.s32.totalorder %s290, %s292
    %p299 = scmp.eq.s32.totalorder %s23, 1
    %p300 = por %p298, %p299
    %p301 = scmp.ne.s32.totalorder %s292, %s293
    %p302 = scmp.eq.s32.totalorder %s23, 0
    %p303 = por %p301, %p302
    %p304 = scmp.ne.s32.totalorder %s292, %s293
    %p305 = scmp.eq.s32.totalorder %s24, 1
    %p306 = por %p304, %p305
    %p308 = scmp.ne.s32.totalorder %s293, %s307
    %p309 = scmp.eq.s32.totalorder %s24, 0
    %p310 = por %p308, %p309
    %s311 = ssub.s32 %s25, %s37
    %s312 = ssub.s32 %s26, %s33
    %s313 = sor.u32 %s311, %s312
    %p314 = scmp.eq.s32.totalorder %s313, 0
    %s316 = sadd.s32 %s315, 1
    %s317 = scalar_select %p314, %s315, %s316
    %p320 = pneg %p314
    %p321 = scmp.eq.s32.totalorder %s18, 1
    %p322 = por %p320, %p321
    %p323 = scmp.ne.s32.totalorder %s315, %s318
    %p324 = scmp.eq.s32.totalorder %s18, 0
    %p325 = por %p323, %p324
    %p326 = scmp.ne.s32.totalorder %s315, %s318
    %p327 = scmp.eq.s32.totalorder %s23, 1
    %p328 = por %p326, %p327
    %p329 = scmp.ne.s32.totalorder %s318, %s319
    %p330 = scmp.eq.s32.totalorder %s23, 0
    %p331 = por %p329, %p330
    %p332 = scmp.ne.s32.totalorder %s318, %s319
    %p333 = scmp.eq.s32.totalorder %s24, 1
    %p334 = por %p332, %p333
    %p336 = scmp.ne.s32.totalorder %s319, %s335
    %p337 = scmp.eq.s32.totalorder %s24, 0
    %p338 = por %p336, %p337
    %p339 = scmp.le.s32.totalorder 1, %s18
    %p340 = scmp.lt.s32.totalorder %s18, 3
    %p341 = pnand %p339, %p340
    %p342 = pneg %p341
    // Predicated region
    $region9: #{tpu_custom_call.1} parent=5 // pred_check
      _
    $region10: #{tpu_custom_call.1} parent=5 // pred_check_branch
      %344 = sbr.rel (%p341) target = $region12
    $region11: #{tpu_custom_call.1} parent=5 // pred_region
      %s345 = ssub.s32 %s18, 1
      // Predicated region
      $region13: #{tpu_custom_call.1} parent=11 // pred_check
        %p346 = pneg %p135
      $region14: #{tpu_custom_call.1} parent=11 // pred_check_branch
        %348 = sbr.rel (%p346) target = $region16
      $region15: #{tpu_custom_call.1} parent=11 // pred_region
        _
      $region16: #{tpu_custom_call.1} parent=11 // pred_fallthru
        _
      // Predicated region
      $region17: #{tpu_custom_call.1} parent=11 // pred_check
        %p349 = pneg %p156
      $region18: #{tpu_custom_call.1} parent=11 // pred_check_branch
        %351 = sbr.rel (%p349) target = $region20
      $region19: #{tpu_custom_call.1} parent=11 // pred_region
        _
      $region20: #{tpu_custom_call.1} parent=11 // pred_fallthru
        _
      // Predicated region
      $region21: #{tpu_custom_call.1} parent=11 // pred_check
        %p352 = pneg %p177
      $region22: #{tpu_custom_call.1} parent=11 // pred_check_branch
        %354 = sbr.rel (%p352) target = $region24
      $region23: #{tpu_custom_call.1} parent=11 // pred_region
        _
      $region24: #{tpu_custom_call.1} parent=11 // pred_fallthru
        _
      // Predicated region
      $region25: #{tpu_custom_call.1} parent=11 // pred_check
        %p355 = pneg %p198
      $region26: #{tpu_custom_call.1} parent=11 // pred_check_branch
        %357 = sbr.rel (%p355) target = $region28
      $region27: #{tpu_custom_call.1} parent=11 // pred_region
        _
      $region28: #{tpu_custom_call.1} parent=11 // pred_fallthru
        _
      // Predicated region
      $region29: #{tpu_custom_call.1} parent=11 // pred_check
        %p358 = pneg %p219
      $region30: #{tpu_custom_call.1} parent=11 // pred_check_branch
        %360 = sbr.rel (%p358) target = $region32
      $region31: #{tpu_custom_call.1} parent=11 // pred_region
        _
      $region32: #{tpu_custom_call.1} parent=11 // pred_fallthru
        _
      // Predicated region
      $region33: #{tpu_custom_call.1} parent=11 // pred_check
        %p361 = pneg %p240
      $region34: #{tpu_custom_call.1} parent=11 // pred_check_branch
        %363 = sbr.rel (%p361) target = $region36
      $region35: #{tpu_custom_call.1} parent=11 // pred_region
        _
      $region36: #{tpu_custom_call.1} parent=11 // pred_fallthru
        _
      // Predicated region
      $region37: #{tpu_custom_call.1} parent=11 // pred_check
        %p364 = pneg %p261
      $region38: #{tpu_custom_call.1} parent=11 // pred_check_branch
        %366 = sbr.rel (%p364) target = $region40
      $region39: #{tpu_custom_call.1} parent=11 // pred_region
        _
      $region40: #{tpu_custom_call.1} parent=11 // pred_fallthru
        _
      // Predicated region
      $region41: #{tpu_custom_call.1} parent=11 // pred_check
        %p367 = pneg %p282
      $region42: #{tpu_custom_call.1} parent=11 // pred_check_branch
        %369 = sbr.rel (%p367) target = $region44
      $region43: #{tpu_custom_call.1} parent=11 // pred_region
        _
      $region44: #{tpu_custom_call.1} parent=11 // pred_fallthru
        _
      // Predicated region
      $region45: #{tpu_custom_call.1} parent=11 // pred_check
        %p370 = pneg %p303
      $region46: #{tpu_custom_call.1} parent=11 // pred_check_branch
        %372 = sbr.rel (%p370) target = $region48
      $region47: #{tpu_custom_call.1} parent=11 // pred_region
        _
      $region48: #{tpu_custom_call.1} parent=11 // pred_fallthru
        _
    $region12: #{tpu_custom_call.1} parent=5 // pred_fallthru
      _
    %p373 = scmp.lt.s32.totalorder %s18, 2
    // Predicated region
    $region49: #{tpu_custom_call.1} parent=5 // pred_check
      %p374 = pneg %p373
    $region50: #{tpu_custom_call.1} parent=5 // pred_check_branch
      %376 = sbr.rel (%p374) target = $region52
    $region51: #{tpu_custom_call.1} parent=5 // pred_region
      // Predicated region
      $region53: #{tpu_custom_call.1} parent=51 // pred_check
        %p377 = pneg %p52
      $region54: #{tpu_custom_call.1} parent=51 // pred_check_branch
        %379 = sbr.rel (%p377) target = $region56
      $region55: #{tpu_custom_call.1} parent=51 // pred_region
        %s380 = smul.u32 5, %s26
        %p381 = scmp.lt.s32.totalorder %s25, 1
        %s382 = scalar_select %p381, %s25, 1
        %p383 = scmp.lt.s32.totalorder %s380, 4
        %s384 = scalar_select %p383, %s380, 4
        %s385 = smul.addr %s382, 5
        %s386 = sadd.s32 %s384, %s385
        %s387 = smul.addr %s386, 8
        %s388 = scalar_lea.vmem %s0, %s387
        %s389 = smul.u32 5, %s26
      $region56: #{tpu_custom_call.1} parent=51 // pred_fallthru
        _
      // Predicated region
      $region57: #{tpu_custom_call.1} parent=51 // pred_check
        %p390 = pneg %p80
      $region58: #{tpu_custom_call.1} parent=51 // pred_check_branch
        %392 = sbr.rel (%p390) target = $region60
      $region59: #{tpu_custom_call.1} parent=51 // pred_region
        %s393 = smul.u32 5, %s26
        %p394 = scmp.lt.s32.totalorder %s25, 1
        %s395 = scalar_select %p394, %s25, 1
        %p396 = scmp.lt.s32.totalorder %s393, 4
        %s397 = scalar_select %p396, %s393, 4
        %s398 = smul.addr %s395, 5
        %s399 = sadd.s32 %s397, %s398
        %s400 = smul.addr %s399, 8
        %s401 = scalar_lea.vmem %s1, %s400
        %s402 = smul.u32 5, %s26
      $region60: #{tpu_custom_call.1} parent=51 // pred_fallthru
        _
      // Predicated region
      $region61: #{tpu_custom_call.1} parent=51 // pred_check
        %p403 = pneg %p108
      $region62: #{tpu_custom_call.1} parent=51 // pred_check_branch
        %405 = sbr.rel (%p403) target = $region64
      $region63: #{tpu_custom_call.1} parent=51 // pred_region
        %s406 = smul.u32 5, %s26
        %p407 = scmp.lt.s32.totalorder %s25, 1
        %s408 = scalar_select %p407, %s25, 1
        %p409 = scmp.lt.s32.totalorder %s406, 4
        %s410 = scalar_select %p409, %s406, 4
        %s411 = smul.addr %s408, 25
        %s412 = sadd.s32 %s410, %s411
        %s413 = smul.addr %s412, 4
        %s414 = scalar_lea.vmem %s2, %s413
        %s415 = smul.u32 5, %s26
      $region64: #{tpu_custom_call.1} parent=51 // pred_fallthru
        _
    $region52: #{tpu_custom_call.1} parent=5 // pred_fallthru
      _
    %p416 = scmp.le.s32.totalorder 1, %s18
    %p417 = scmp.lt.s32.totalorder %s18, 3
    %p418 = pnand %p416, %p417
    %p419 = pneg %p418
    // Predicated region
    $region65: #{tpu_custom_call.1} parent=5 // pred_check
      _
    $region66: #{tpu_custom_call.1} parent=5 // pred_check_branch
      %421 = sbr.rel (%p418) target = $region68
    $region67: #{tpu_custom_call.1} parent=5 // pred_region
      %s422 = ssub.s32 %s18, 1
      %s423 = smul.u32 5, %s28
      %p424 = scmp.lt.s32.totalorder %s27, 1
      %s425 = scalar_select %p424, %s27, 1
      %p426 = scmp.lt.s32.totalorder %s423, 4
      %s427 = scalar_select %p426, %s423, 4
      %s428 = smul.addr %s425, 5
      %s429 = sadd.s32 %s427, %s428
      %s430 = smul.addr %s429, 8
      %s431 = scalar_lea.vmem %s0, %s430
      %p432 = pneg %p58
      %p433 = pneg %p55
      %s434 = smul.u32 5, %s28
      %p435 = scmp.lt.s32.totalorder %s27, 1
      %s436 = scalar_select %p435, %s27, 1
      %p437 = scmp.lt.s32.totalorder %s434, 4
      %s438 = scalar_select %p437, %s434, 4
      %s439 = smul.addr %s436, 5
      %s440 = sadd.s32 %s438, %s439
      %s441 = smul.addr %s440, 8
      %s442 = scalar_lea.vmem %s1, %s441
      %p443 = pneg %p86
      %p444 = pneg %p83
      %s445 = smul.u32 5, %s28
      %p446 = scmp.lt.s32.totalorder %s27, 1
      %s447 = scalar_select %p446, %s27, 1
      %p448 = scmp.lt.s32.totalorder %s445, 4
      %s449 = scalar_select %p448, %s445, 4
      %s450 = smul.addr %s447, 25
      %s451 = sadd.s32 %s449, %s450
      %s452 = smul.addr %s451, 4
      %s453 = scalar_lea.vmem %s2, %s452
      %p454 = pneg %p114
      %p455 = pneg %p111
      %p456 = pneg %p135
      %p457 = pneg %p132
      %p458 = pneg %p156
      %p459 = pneg %p153
      %p460 = pneg %p177
      %p461 = pneg %p174
      %p462 = pneg %p198
      %p463 = pneg %p195
      %p464 = pneg %p219
      %p465 = pneg %p216
      %p466 = pneg %p240
      %p467 = pneg %p237
      %p468 = pneg %p261
      %p469 = pneg %p258
      %p470 = pneg %p282
      %p471 = pneg %p279
      %p472 = pneg %p303
      %p473 = pneg %p300
      %p474 = pneg %p331
      %p475 = pneg %p328
      %s476 = smul.u32 5, %s28
      %p477 = scmp.lt.s32.totalorder %s27, 1
      %s478 = scalar_select %p477, %s27, 1
      %p479 = scmp.lt.s32.totalorder %s476, 4
      %s480 = scalar_select %p479, %s476, 4
      %s481 = smul.addr %s478, 5
      %s482 = sadd.s32 %s480, %s481
      %s483 = smul.addr %s482, 8
      %s484 = scalar_lea.vmem %s12, %s483
      %s485 = smul.u32 5, %s28
      %p486 = scmp.lt.s32.totalorder %s27, 1
      %s487 = scalar_select %p486, %s27, 1
      %p488 = scmp.lt.s32.totalorder %s485, 4
      %s489 = scalar_select %p488, %s485, 4
      %s490 = smul.addr %s487, 5
      %s491 = sadd.s32 %s489, %s490
      %s492 = smul.addr %s491, 8
      %s493 = scalar_lea.vmem %s0, %s492
      %s494 = smul.u32 5, %s28
      %s495 = smul.u32 5, %s28
      %p496 = scmp.lt.s32.totalorder %s27, 1
      %s497 = scalar_select %p496, %s27, 1
      %p498 = scmp.lt.s32.totalorder %s495, 4
      %s499 = scalar_select %p498, %s495, 4
      %s500 = smul.addr %s497, 5
      %s501 = sadd.s32 %s499, %s500
      %s502 = smul.addr %s501, 8
      %s503 = scalar_lea.vmem %s1, %s502
      %s504 = smul.u32 5, %s28
      %s505 = smul.u32 5, %s28
      %p506 = scmp.lt.s32.totalorder %s27, 1
      %s507 = scalar_select %p506, %s27, 1
      %p508 = scmp.lt.s32.totalorder %s505, 4
      %s509 = scalar_select %p508, %s505, 4
      %s510 = smul.addr %s507, 25
      %s511 = sadd.s32 %s509, %s510
      %s512 = smul.addr %s511, 4
      %s513 = scalar_lea.vmem %s2, %s512
      %s514 = smul.u32 5, %s28
      %s515 = smul.u32 5, %s28
      %p516 = scmp.lt.s32.totalorder %s27, 1
      %s517 = scalar_select %p516, %s27, 1
      %p518 = scmp.lt.s32.totalorder %s515, 4
      %s519 = scalar_select %p518, %s515, 4
      %s520 = smul.addr %s517, 5
      %s521 = sadd.s32 %s519, %s520
      %s522 = smul.addr %s521, 8
      %s523 = scalar_lea.vmem %s12, %s522
      %s524 = smul.u32 5, %s28
      %v526 = vld [vmem:[%s493] sm:$0xff]
      %v527 = vld [vmem:[%s493 + $0x8] sm:$0xff]
      %v528 = vld [vmem:[%s493 + $0x10] sm:$0xff]
      %v529 = vld [vmem:[%s493 + $0x18] sm:$0xff]
      %v530 = vld [vmem:[%s493 + $0x20] sm:$0xff]
      %v531 = vld [vmem:[%s503] sm:$0xff]
      %v532 = vld [vmem:[%s503 + $0x8] sm:$0xff]
      %v533 = vld [vmem:[%s503 + $0x10] sm:$0xff]
      %v534 = vld [vmem:[%s503 + $0x18] sm:$0xff]
      %v535 = vld [vmem:[%s503 + $0x20] sm:$0xff]
      %v536 = vld [vmem:[%s3] sm:$0x1f]
      %v537 = vld [vmem:[%s4] sm:$0x1]
      %v539 = vlaneseq
      %v540 = vshrl.u32 %v539, 7
      %v541 = vsub.s32 0, %v540
      %v542 = vrot.slane %v537, %v541
      %vm544 = vcmask 39936
      %v546 = vsel %vm544, %v526, 0
      %v549 = vsel %vm544, %v527, 0
      %v552 = vsel %vm544, %v528, 0
      %v555 = vsel %vm544, %v529, 0
      %v558 = vsel %vm544, %v530, 0
      %vm560 = vcmask 1044480
      %v562 = vsel %vm560, %v536, 0
      %564 = vmatprep.subr.mxu0 0.0
      %565 = vmatpush1.msra.mxu0 0.0
      %566 = vmatprep.subr.mxu0 0.0
      %567 = vmatpush1.msra.mxu0 0.0
      %568 = vmatprep.subr.mxu0 0.0
      %569 = vmatpush1.msra.mxu0 0.0
      %570 = vmatprep.subr.mxu0 0.0
      %571 = vmatpush1.msra.mxu0 0.0
      %572 = vmatprep.subr.mxu0 0.0
      %573 = vmatpush1.msra.mxu0 0.0
      %574 = vmatprep.subr.mxu0 0.0
      %575 = vmatpush1.msra.mxu0 0.0
      %576 = vmatprep.subr.mxu0 0.0
      %577 = vmatpush1.msra.mxu0 0.0
      %578 = vmatprep.subr.mxu0 0.0
      %579 = vmatpush1.msra.mxu0 0.0
      %580 = vmatprep.subr.mxu0 0.0
      %581 = vmatpush1.msra.mxu0 0.0
      %582 = vmatprep.subr.mxu0 0.0
      %583 = vmatpush1.msra.mxu0 0.0
      %584 = vmatprep.subr.mxu0 0.0
      %585 = vmatpush1.msra.mxu0 0.0
      %586 = vmatprep.subr.mxu0 0.0
      %587 = vmatpush1.msra.mxu0 0.0
      %588 = vmatprep.subr.mxu0 0.0
      %589 = vmatpush1.msra.mxu0 0.0
      %590 = vmatprep.subr.mxu0 0.0
      %591 = vmatpush1.msra.mxu0 0.0
      %592 = vmatprep.subr.mxu0 0.0
      %593 = vmatpush1.msra.mxu0 0.0
      %594 = vmatprep.subr.mxu0 0.0
      %595 = vmatpush1.msra.mxu0 %v562
      %596 = vmatprep.subr.mxu0 0.0
      %597 = vmatpush2.msra.mxu0 0.0
      %598 = vmatprep.subr.mxu0 0.0
      %599 = vmatpush2.msra.mxu0 0.0
      %600 = vmatprep.subr.mxu0 0.0
      %601 = vmatpush2.msra.mxu0 0.0
      %602 = vmatprep.subr.mxu0 0.0
      %603 = vmatpush2.msra.mxu0 0.0
      %604 = vmatprep.subr.mxu0 0.0
      %605 = vmatpush2.msra.mxu0 0.0
      %606 = vmatprep.subr.mxu0 0.0
      %607 = vmatpush2.msra.mxu0 0.0
      %608 = vmatprep.subr.mxu0 0.0
      %609 = vmatpush2.msra.mxu0 0.0
      %610 = vmatprep.subr.mxu0 0.0
      %611 = vmatpush2.msra.mxu0 0.0
      %612 = vmatprep.subr.mxu0 0.0
      %613 = vmatpush2.msra.mxu0 0.0
      %614 = vmatprep.subr.mxu0 0.0
      %615 = vmatpush2.msra.mxu0 0.0
      %616 = vmatprep.subr.mxu0 0.0
      %617 = vmatpush2.msra.mxu0 0.0
      %618 = vmatprep.subr.mxu0 0.0
      %619 = vmatpush2.msra.mxu0 0.0
      %620 = vmatprep.subr.mxu0 0.0
      %621 = vmatpush2.msra.mxu0 0.0
      %622 = vmatprep.subr.mxu0 0.0
      %623 = vmatpush2.msra.mxu0 0.0
      %624 = vmatprep.subr.mxu0 0.0
      %625 = vmatpush2.msra.mxu0 0.0
      %626 = vmatprep.subr.mxu0 0.0
      %627 = vmatpush2.msra.mxu0 0.0
      %628 = vmatprep.mubr.f32.mxu0 0.0
      %629 = vmatmul.mubr.f32.gmra.mxu0 %v546
      %v630 = vpop.f32.mrf.mxu0
      %v631 = vadd.f32 %v542, %v630
      %v632 = vpop.f32.mrf.mxu0
      %633 = vmatprep.mubr.f32.mxu0 0.0
      %634 = vmatmul.mubr.f32.gmra.mxu0 %v549
      %v635 = vpop.f32.mrf.mxu0
      %v636 = vadd.f32 %v542, %v635
      %v637 = vpop.f32.mrf.mxu0
      %638 = vmatprep.mubr.f32.mxu0 0.0
      %639 = vmatmul.mubr.f32.gmra.mxu0 %v552
      %v640 = vpop.f32.mrf.mxu0
      %v641 = vadd.f32 %v542, %v640
      %v642 = vpop.f32.mrf.mxu0
      %643 = vmatprep.mubr.f32.mxu0 0.0
      %644 = vmatmul.mubr.f32.gmra.mxu0 %v555
      %v645 = vpop.f32.mrf.mxu0
      %v646 = vadd.f32 %v542, %v645
      %v647 = vpop.f32.mrf.mxu0
      %648 = vmatprep.mubr.f32.mxu0 0.0
      %649 = vmatmul.mubr.f32.gmra.mxu0 %v558
      %v650 = vpop.f32.mrf.mxu0
      %v651 = vadd.f32 %v542, %v650
      %v652 = vpop.f32.mrf.mxu0
      %653 = vdwg.mxu0
      %vm654 = vcmp.ge.f32.partialorder %v631, 0.0
      %vm655 = vcmp.ge.f32.partialorder %v636, 0.0
      %vm656 = vcmp.ge.f32.partialorder %v641, 0.0
      %vm657 = vcmp.ge.f32.partialorder %v646, 0.0
      %vm658 = vcmp.ge.f32.partialorder %v651, 0.0
      %v659 = vmul.f32 %v631, 0.1
      %v660 = vmul.f32 %v636, 0.1
      %v661 = vmul.f32 %v641, 0.1
      %v662 = vmul.f32 %v646, 0.1
      %v663 = vmul.f32 %v651, 0.1
      %v664 = vsel %vm654, %v631, %v659
      %v665 = vsel %vm655, %v636, %v660
      %v666 = vsel %vm656, %v641, %v661
      %v667 = vsel %vm657, %v646, %v662
      %v668 = vsel %vm658, %v651, %v663
      %v669 = vld [vmem:[%s5] sm:$0x1f]
      %v671 = vsel %vm544, %v531, 0
      %v674 = vsel %vm544, %v532, 0
      %v677 = vsel %vm544, %v533, 0
      %v680 = vsel %vm544, %v534, 0
      %v683 = vsel %vm544, %v535, 0
      %v686 = vsel %vm560, %v669, 0
      %688 = vmatprep.subr.mxu0 0.0
      %689 = vmatpush1.msra.mxu0 0.0
      %690 = vmatprep.subr.mxu0 0.0
      %691 = vmatpush1.msra.mxu0 0.0
      %692 = vmatprep.subr.mxu0 0.0
      %693 = vmatpush1.msra.mxu0 0.0
      %694 = vmatprep.subr.mxu0 0.0
      %695 = vmatpush1.msra.mxu0 0.0
      %696 = vmatprep.subr.mxu0 0.0
      %697 = vmatpush1.msra.mxu0 0.0
      %698 = vmatprep.subr.mxu0 0.0
      %699 = vmatpush1.msra.mxu0 0.0
      %700 = vmatprep.subr.mxu0 0.0
      %701 = vmatpush1.msra.mxu0 0.0
      %702 = vmatprep.subr.mxu0 0.0
      %703 = vmatpush1.msra.mxu0 0.0
      %704 = vmatprep.subr.mxu0 0.0
      %705 = vmatpush1.msra.mxu0 0.0
      %706 = vmatprep.subr.mxu0 0.0
      %707 = vmatpush1.msra.mxu0 0.0
      %708 = vmatprep.subr.mxu0 0.0
      %709 = vmatpush1.msra.mxu0 0.0
      %710 = vmatprep.subr.mxu0 0.0
      %711 = vmatpush1.msra.mxu0 0.0
      %712 = vmatprep.subr.mxu0 0.0
      %713 = vmatpush1.msra.mxu0 0.0
      %714 = vmatprep.subr.mxu0 0.0
      %715 = vmatpush1.msra.mxu0 0.0
      %716 = vmatprep.subr.mxu0 0.0
      %717 = vmatpush1.msra.mxu0 0.0
      %718 = vmatprep.subr.mxu0 0.0
      %719 = vmatpush1.msra.mxu0 %v686
      %720 = vmatprep.subr.mxu0 0.0
      %721 = vmatpush2.msra.mxu0 0.0
      %722 = vmatprep.subr.mxu0 0.0
      %723 = vmatpush2.msra.mxu0 0.0
      %724 = vmatprep.subr.mxu0 0.0
      %725 = vmatpush2.msra.mxu0 0.0
      %726 = vmatprep.subr.mxu0 0.0
      %727 = vmatpush2.msra.mxu0 0.0
      %728 = vmatprep.subr.mxu0 0.0
      %729 = vmatpush2.msra.mxu0 0.0
      %730 = vmatprep.subr.mxu0 0.0
      %731 = vmatpush2.msra.mxu0 0.0
      %732 = vmatprep.subr.mxu0 0.0
      %733 = vmatpush2.msra.mxu0 0.0
      %734 = vmatprep.subr.mxu0 0.0
      %735 = vmatpush2.msra.mxu0 0.0
      %736 = vmatprep.subr.mxu0 0.0
      %737 = vmatpush2.msra.mxu0 0.0
      %738 = vmatprep.subr.mxu0 0.0
      %739 = vmatpush2.msra.mxu0 0.0
      %740 = vmatprep.subr.mxu0 0.0
      %741 = vmatpush2.msra.mxu0 0.0
      %742 = vmatprep.subr.mxu0 0.0
      %743 = vmatpush2.msra.mxu0 0.0
      %744 = vmatprep.subr.mxu0 0.0
      %745 = vmatpush2.msra.mxu0 0.0
      %746 = vmatprep.subr.mxu0 0.0
      %747 = vmatpush2.msra.mxu0 0.0
      %748 = vmatprep.subr.mxu0 0.0
      %749 = vmatpush2.msra.mxu0 0.0
      %750 = vmatprep.subr.mxu0 0.0
      %751 = vmatpush2.msra.mxu0 0.0
      %752 = vmatprep.mubr.f32.mxu0 0.0
      %753 = vmatmul.mubr.f32.gmra.mxu0 %v671
      %v754 = vpop.f32.mrf.mxu0
      %v755 = vadd.f32 0.0, %v754
      %v756 = vpop.f32.mrf.mxu0
      %757 = vmatprep.mubr.f32.mxu0 0.0
      %758 = vmatmul.mubr.f32.gmra.mxu0 %v674
      %v759 = vpop.f32.mrf.mxu0
      %v760 = vadd.f32 0.0, %v759
      %v761 = vpop.f32.mrf.mxu0
      %762 = vmatprep.mubr.f32.mxu0 0.0
      %763 = vmatmul.mubr.f32.gmra.mxu0 %v677
      %v764 = vpop.f32.mrf.mxu0
      %v765 = vadd.f32 0.0, %v764
      %v766 = vpop.f32.mrf.mxu0
      %767 = vmatprep.mubr.f32.mxu0 0.0
      %768 = vmatmul.mubr.f32.gmra.mxu0 %v680
      %v769 = vpop.f32.mrf.mxu0
      %v770 = vadd.f32 0.0, %v769
      %v771 = vpop.f32.mrf.mxu0
      %772 = vmatprep.mubr.f32.mxu0 0.0
      %773 = vmatmul.mubr.f32.gmra.mxu0 %v683
      %v774 = vpop.f32.mrf.mxu0
      %v775 = vadd.f32 0.0, %v774
      %v776 = vpop.f32.mrf.mxu0
      %777 = vdwg.mxu0
      %v778 = vmul.f32 %v664, %v755
      %v779 = vmul.f32 %v665, %v760
      %v780 = vmul.f32 %v666, %v765
      %v781 = vmul.f32 %v667, %v770
      %v782 = vmul.f32 %v668, %v775
      %v783 = vpack.c.bf16 %v779, %v778
      %v784 = vpack.c.bf16 %v781, %v780
      %v785 = vpack.c.bf16 %v782, %v782
      %v786 = vld [vmem:[%s6] sm:$0xff]
      %v787 = vld [vmem:[%s6 + $0x8] sm:$0xf]
      %v788 = vld [vmem:[%s6 + $0xc] sm:$0x11]
      %v789 = vld [vmem:[%s6 + $0x14] sm:$0x1]
      %v790 = vld [vmem:[%s7] sm:$0xff]
      %v791 = vld [vmem:[%s7 + $0x8] sm:$0xf]
      %v792 = vld [vmem:[%s7 + $0xc] sm:$0xff]
      %v793 = vld [vmem:[%s7 + $0x14] sm:$0xf]
      %v794 = vld [vmem:[%s7 + $0x18] sm:$0xff]
      %v795 = vld [vmem:[%s7 + $0x20] sm:$0xf]
      %v796 = vld [vmem:[%s7 + $0x24] sm:$0xff]
      %v797 = vld [vmem:[%s7 + $0x2c] sm:$0xf]
      %v798 = vld [vmem:[%s513] sm:$0xf]
      %v799 = vld [vmem:[%s513 + $0x4] sm:$0xf]
      %v800 = vld [vmem:[%s513 + $0x8] sm:$0xf]
      %v801 = vld [vmem:[%s513 + $0xc] sm:$0xf]
      %v802 = vld [vmem:[%s513 + $0x10] sm:$0xf]
      %v807 = vunpack.c.l.b16 %v786
      %v808 = vunpack.c.h.b16 %v786
      %v809 = vunpack.c.l.b16 %v787
      %v810 = vunpack.c.l.b16 %v788
      %v811 = vunpack.c.h.b16 %v788
      %v812 = vunpack.c.l.b16 %v789
      %v813 = vpack.c.b16 %v810, %v807
      %v814 = vpack.c.b16 %v811, %v808
      %v815 = vpack.c.b16 %v812, %v809
      %vm816 = vcmask 72704
      %v818 = vsel %vm816, %v783, 0
      %v821 = vsel %vm816, %v784, 0
      %v824 = vsel %vm816, %v785, 0
      %vm826 = vcmask 1043456
      %v827 = vsel %vm826, 4294967295, 65535
      %v828 = vsel %vm560, %v827, 0
      %v830 = vand.u32 %v813, %v828
      %v833 = vand.u32 %v814, %v828
      %v836 = vand.u32 %v815, %v828
      %838 = vmatprep.subr.bf16.mxu0 0
      %839 = vmatpush1.bf16.msra.mxu0 0
      %840 = vmatprep.subr.bf16.mxu0 0
      %841 = vmatpush1.bf16.msra.mxu0 0
      %842 = vmatprep.subr.bf16.mxu0 0
      %843 = vmatpush1.bf16.msra.mxu0 0
      %844 = vmatprep.subr.bf16.mxu0 0
      %845 = vmatpush1.bf16.msra.mxu0 0
      %846 = vmatprep.subr.bf16.mxu0 0
      %847 = vmatpush1.bf16.msra.mxu0 0
      %848 = vmatprep.subr.bf16.mxu0 0
      %849 = vmatpush1.bf16.msra.mxu0 0
      %850 = vmatprep.subr.bf16.mxu0 0
      %851 = vmatpush1.bf16.msra.mxu0 0
      %852 = vmatprep.subr.bf16.mxu0 %v833
      %853 = vmatpush1.bf16.msra.mxu0 %v830
      %854 = vmatprep.subr.bf16.mxu0 0
      %855 = vmatpush2.bf16.msra.mxu0 0
      %856 = vmatprep.subr.bf16.mxu0 0
      %857 = vmatpush2.bf16.msra.mxu0 0
      %858 = vmatprep.subr.bf16.mxu0 0
      %859 = vmatpush2.bf16.msra.mxu0 0
      %860 = vmatprep.subr.bf16.mxu0 0
      %861 = vmatpush2.bf16.msra.mxu0 0
      %862 = vmatprep.subr.bf16.mxu0 0
      %863 = vmatpush2.bf16.msra.mxu0 0
      %864 = vmatprep.subr.bf16.mxu0 0
      %865 = vmatpush2.bf16.msra.mxu0 0
      %866 = vmatprep.subr.bf16.mxu0 0
      %867 = vmatpush2.bf16.msra.mxu0 0
      %868 = vmatprep.subr.bf16.mxu0 0
      %869 = vmatpush2.bf16.msra.mxu0 0
      %870 = vmatprep.mubr.bf16.mxu0 0
      %871 = vmatmul.mubr.bf16.gmra.mxu0 %v818
      %v872 = vpop.f32.mrf.mxu0
      %v873 = vadd.f32 0.0, %v872
      %v874 = vpop.f32.mrf.mxu0
      %v875 = vadd.f32 0.0, %v874
      %v876 = vpop.f32.mrf.mxu0
      %v877 = vadd.f32 0.0, %v876
      %v878 = vpop.f32.mrf.mxu0
      %v879 = vadd.f32 0.0, %v878
      %880 = vmatprep.mubr.bf16.mxu0 0
      %881 = vmatmul.mubr.bf16.gmra.mxu0 %v821
      %v882 = vpop.f32.mrf.mxu0
      %v883 = vadd.f32 0.0, %v882
      %v884 = vpop.f32.mrf.mxu0
      %v885 = vadd.f32 0.0, %v884
      %v886 = vpop.f32.mrf.mxu0
      %v887 = vadd.f32 0.0, %v886
      %v888 = vpop.f32.mrf.mxu0
      %v889 = vadd.f32 0.0, %v888
      %890 = vmatprep.mubr.bf16.mxu0 0
      %891 = vmatmul.mubr.bf16.gmra.mxu0 %v824
      %v892 = vpop.f32.mrf.mxu0
      %v893 = vadd.f32 0.0, %v892
      %v894 = vpop.f32.mrf.mxu0
      %v895 = vadd.f32 0.0, %v894
      %v896 = vpop.f32.mrf.mxu0
      %v897 = vpop.f32.mrf.mxu0
      %898 = vdwg.mxu0
      %899 = vmatprep.subr.bf16.mxu0 0
      %900 = vmatpush1.bf16.msra.mxu0 0
      %901 = vmatprep.subr.bf16.mxu0 0
      %902 = vmatpush1.bf16.msra.mxu0 0
      %903 = vmatprep.subr.bf16.mxu0 0
      %904 = vmatpush1.bf16.msra.mxu0 0
      %905 = vmatprep.subr.bf16.mxu0 0
      %906 = vmatpush1.bf16.msra.mxu0 0
      %907 = vmatprep.subr.bf16.mxu0 0
      %908 = vmatpush1.bf16.msra.mxu0 0
      %909 = vmatprep.subr.bf16.mxu0 0
      %910 = vmatpush1.bf16.msra.mxu0 0
      %911 = vmatprep.subr.bf16.mxu0 0
      %912 = vmatpush1.bf16.msra.mxu0 0
      %913 = vmatprep.subr.bf16.mxu0 0
      %914 = vmatpush1.bf16.msra.mxu0 %v836
      %915 = vmatprep.subr.bf16.mxu0 0
      %916 = vmatpush2.bf16.msra.mxu0 0
      %917 = vmatprep.subr.bf16.mxu0 0
      %918 = vmatpush2.bf16.msra.mxu0 0
      %919 = vmatprep.subr.bf16.mxu0 0
      %920 = vmatpush2.bf16.msra.mxu0 0
      %921 = vmatprep.subr.bf16.mxu0 0
      %922 = vmatpush2.bf16.msra.mxu0 0
      %923 = vmatprep.subr.bf16.mxu0 0
      %924 = vmatpush2.bf16.msra.mxu0 0
      %925 = vmatprep.subr.bf16.mxu0 0
      %926 = vmatpush2.bf16.msra.mxu0 0
      %927 = vmatprep.subr.bf16.mxu0 0
      %928 = vmatpush2.bf16.msra.mxu0 0
      %929 = vmatprep.subr.bf16.mxu0 0
      %930 = vmatpush2.bf16.msra.mxu0 0
      %931 = vmatprep.mubr.bf16.mxu0 0
      %932 = vmatmul.mubr.bf16.gmra.mxu0 %v818
      %v933 = vpop.f32.mrf.mxu0
      %v934 = vadd.f32 0.0, %v933
      %v935 = vpop.f32.mrf.mxu0
      %v936 = vpop.f32.mrf.mxu0
      %v937 = vadd.f32 0.0, %v936
      %v938 = vpop.f32.mrf.mxu0
      %939 = vmatprep.mubr.bf16.mxu0 0
      %940 = vmatmul.mubr.bf16.gmra.mxu0 %v821
      %v941 = vpop.f32.mrf.mxu0
      %v942 = vadd.f32 0.0, %v941
      %v943 = vpop.f32.mrf.mxu0
      %v944 = vpop.f32.mrf.mxu0
      %v945 = vadd.f32 0.0, %v944
      %v946 = vpop.f32.mrf.mxu0
      %947 = vmatprep.mubr.bf16.mxu0 0
      %948 = vmatmul.mubr.bf16.gmra.mxu0 %v824
      %v949 = vpop.f32.mrf.mxu0
      %v950 = vadd.f32 0.0, %v949
      %v951 = vpop.f32.mrf.mxu0
      %v952 = vpop.f32.mrf.mxu0
      %v953 = vpop.f32.mrf.mxu0
      %954 = vdwg.mxu0
      %v960 = vunpack.c.l.b16 %v798
      %v961 = vunpack.c.l.b16 %v799
      %v962 = vunpack.c.l.b16 %v800
      %v963 = vunpack.c.l.b16 %v801
      %v964 = vunpack.c.l.b16 %v802
      %v965 = vpack.c.b16 %v961, %v960
      %v966 = vpack.c.b16 %v963, %v962
      %v967 = vpack.c.b16 %v964, %v964
      %v976 = vunpack.c.l.b16 %v790
      %v977 = vunpack.c.h.b16 %v790
      %v978 = vunpack.c.l.b16 %v791
      %v979 = vunpack.c.l.b16 %v792
      %v980 = vunpack.c.h.b16 %v792
      %v981 = vunpack.c.l.b16 %v793
      %v982 = vunpack.c.l.b16 %v794
      %v983 = vunpack.c.h.b16 %v794
      %v984 = vunpack.c.l.b16 %v795
      %v985 = vunpack.c.l.b16 %v796
      %v986 = vunpack.c.h.b16 %v796
      %v987 = vunpack.c.l.b16 %v797
      %v988 = vpack.c.b16 %v979, %v976
      %v989 = vpack.c.b16 %v980, %v977
      %v990 = vpack.c.b16 %v981, %v978
      %v991 = vpack.c.b16 %v985, %v982
      %v992 = vpack.c.b16 %v986, %v983
      %v993 = vpack.c.b16 %v987, %v984
      %vm1000 = vcmask 261120
      %v1002 = vsel %vm1000, %v965, 0
      %v1005 = vsel %vm1000, %v966, 0
      %v1008 = vsel %vm1000, %v967, 0
      %1010 = vmatprep.subr.bf16.mxu0 0
      %1011 = vmatpush1.bf16.msra.mxu0 0
      %1012 = vmatprep.subr.bf16.mxu0 0
      %1013 = vmatpush1.bf16.msra.mxu0 0
      %1014 = vmatprep.subr.bf16.mxu0 0
      %1015 = vmatpush1.bf16.msra.mxu0 0
      %1016 = vmatprep.subr.bf16.mxu0 0
      %1017 = vmatpush1.bf16.msra.mxu0 0
      %1018 = vmatprep.subr.bf16.mxu0 0
      %1019 = vmatpush1.bf16.msra.mxu0 0
      %1020 = vmatprep.subr.bf16.mxu0 0
      %1021 = vmatpush1.bf16.msra.mxu0 0
      %1022 = vmatprep.subr.bf16.mxu0 %v992
      %1023 = vmatpush1.bf16.msra.mxu0 %v991
      %1024 = vmatprep.subr.bf16.mxu0 %v989
      %1025 = vmatpush1.bf16.msra.mxu0 %v988
      %1026 = vmatprep.subr.bf16.mxu0 0
      %1027 = vmatpush2.bf16.msra.mxu0 0
      %1028 = vmatprep.subr.bf16.mxu0 0
      %1029 = vmatpush2.bf16.msra.mxu0 0
      %1030 = vmatprep.subr.bf16.mxu0 0
      %1031 = vmatpush2.bf16.msra.mxu0 0
      %1032 = vmatprep.subr.bf16.mxu0 0
      %1033 = vmatpush2.bf16.msra.mxu0 0
      %1034 = vmatprep.subr.bf16.mxu0 0
      %1035 = vmatpush2.bf16.msra.mxu0 0
      %1036 = vmatprep.subr.bf16.mxu0 0
      %1037 = vmatpush2.bf16.msra.mxu0 0
      %1038 = vmatprep.subr.bf16.mxu0 0
      %1039 = vmatpush2.bf16.msra.mxu0 0
      %1040 = vmatprep.subr.bf16.mxu0 0
      %1041 = vmatpush2.bf16.msra.mxu0 0
      %1042 = vmatprep.mubr.bf16.mxu0 0
      %1043 = vmatmul.mubr.bf16.gmra.mxu0 %v1002
      %v1044 = vpop.f32.mrf.mxu0
      %v1045 = vadd.f32 0.0, %v1044
      %v1046 = vpop.f32.mrf.mxu0
      %v1047 = vadd.f32 0.0, %v1046
      %v1048 = vpop.f32.mrf.mxu0
      %v1049 = vadd.f32 0.0, %v1048
      %v1050 = vpop.f32.mrf.mxu0
      %v1051 = vadd.f32 0.0, %v1050
      %1052 = vmatprep.mubr.bf16.mxu0 0
      %1053 = vmatmul.mubr.bf16.gmra.mxu0 %v1005
      %v1054 = vpop.f32.mrf.mxu0
      %v1055 = vadd.f32 0.0, %v1054
      %v1056 = vpop.f32.mrf.mxu0
      %v1057 = vadd.f32 0.0, %v1056
      %v1058 = vpop.f32.mrf.mxu0
      %v1059 = vadd.f32 0.0, %v1058
      %v1060 = vpop.f32.mrf.mxu0
      %v1061 = vadd.f32 0.0, %v1060
      %1062 = vmatprep.mubr.bf16.mxu0 0
      %1063 = vmatmul.mubr.bf16.gmra.mxu0 %v1008
      %v1064 = vpop.f32.mrf.mxu0
      %v1065 = vadd.f32 0.0, %v1064
      %v1066 = vpop.f32.mrf.mxu0
      %v1067 = vadd.f32 0.0, %v1066
      %v1068 = vpop.f32.mrf.mxu0
      %v1069 = vpop.f32.mrf.mxu0
      %1070 = vdwg.mxu0
      %1071 = vmatprep.subr.bf16.mxu0 0
      %1072 = vmatpush1.bf16.msra.mxu0 0
      %1073 = vmatprep.subr.bf16.mxu0 0
      %1074 = vmatpush1.bf16.msra.mxu0 0
      %1075 = vmatprep.subr.bf16.mxu0 0
      %1076 = vmatpush1.bf16.msra.mxu0 0
      %1077 = vmatprep.subr.bf16.mxu0 0
      %1078 = vmatpush1.bf16.msra.mxu0 0
      %1079 = vmatprep.subr.bf16.mxu0 0
      %1080 = vmatpush1.bf16.msra.mxu0 0
      %1081 = vmatprep.subr.bf16.mxu0 0
      %1082 = vmatpush1.bf16.msra.mxu0 0
      %1083 = vmatprep.subr.bf16.mxu0 0
      %1084 = vmatpush1.bf16.msra.mxu0 %v993
      %1085 = vmatprep.subr.bf16.mxu0 0
      %1086 = vmatpush1.bf16.msra.mxu0 %v990
      %1087 = vmatprep.subr.bf16.mxu0 0
      %1088 = vmatpush2.bf16.msra.mxu0 0
      %1089 = vmatprep.subr.bf16.mxu0 0
      %1090 = vmatpush2.bf16.msra.mxu0 0
      %1091 = vmatprep.subr.bf16.mxu0 0
      %1092 = vmatpush2.bf16.msra.mxu0 0
      %1093 = vmatprep.subr.bf16.mxu0 0
      %1094 = vmatpush2.bf16.msra.mxu0 0
      %1095 = vmatprep.subr.bf16.mxu0 0
      %1096 = vmatpush2.bf16.msra.mxu0 0
      %1097 = vmatprep.subr.bf16.mxu0 0
      %1098 = vmatpush2.bf16.msra.mxu0 0
      %1099 = vmatprep.subr.bf16.mxu0 0
      %1100 = vmatpush2.bf16.msra.mxu0 0
      %1101 = vmatprep.subr.bf16.mxu0 0
      %1102 = vmatpush2.bf16.msra.mxu0 0
      %1103 = vmatprep.mubr.bf16.mxu0 0
      %1104 = vmatmul.mubr.bf16.gmra.mxu0 %v1002
      %v1105 = vpop.f32.mrf.mxu0
      %v1106 = vadd.f32 0.0, %v1105
      %v1107 = vpop.f32.mrf.mxu0
      %v1108 = vpop.f32.mrf.mxu0
      %v1109 = vadd.f32 0.0, %v1108
      %v1110 = vpop.f32.mrf.mxu0
      %1111 = vmatprep.mubr.bf16.mxu0 0
      %1112 = vmatmul.mubr.bf16.gmra.mxu0 %v1005
      %v1113 = vpop.f32.mrf.mxu0
      %v1114 = vadd.f32 0.0, %v1113
      %v1115 = vpop.f32.mrf.mxu0
      %v1116 = vpop.f32.mrf.mxu0
      %v1117 = vadd.f32 0.0, %v1116
      %v1118 = vpop.f32.mrf.mxu0
      %1119 = vmatprep.mubr.bf16.mxu0 0
      %1120 = vmatmul.mubr.bf16.gmra.mxu0 %v1008
      %v1121 = vpop.f32.mrf.mxu0
      %v1122 = vadd.f32 0.0, %v1121
      %v1123 = vpop.f32.mrf.mxu0
      %v1124 = vpop.f32.mrf.mxu0
      %v1125 = vpop.f32.mrf.mxu0
      %1126 = vdwg.mxu0
      %v1127 = vmul.f32 %v873, %v1045
      %v1128 = vmul.f32 %v875, %v1047
      %v1129 = vmul.f32 %v934, %v1106
      %v1130 = vmul.f32 %v877, %v1049
      %v1131 = vmul.f32 %v879, %v1051
      %v1132 = vmul.f32 %v937, %v1109
      %v1133 = vmul.f32 %v883, %v1055
      %v1134 = vmul.f32 %v885, %v1057
      %v1135 = vmul.f32 %v942, %v1114
      %v1136 = vmul.f32 %v887, %v1059
      %v1137 = vmul.f32 %v889, %v1061
      %v1138 = vmul.f32 %v945, %v1117
      %v1139 = vmul.f32 %v893, %v1065
      %v1140 = vmul.f32 %v895, %v1067
      %v1141 = vmul.f32 %v950, %v1122
      %v1142 = vadd.f32 %v1127, 0.0
      %v1143 = vadd.f32 %v1128, 0.0
      %v1144 = vadd.f32 %v1129, 0.0
      %v1145 = vadd.f32 %v1130, 0.0
      %v1146 = vadd.f32 %v1131, 0.0
      %v1147 = vadd.f32 %v1132, 0.0
      %v1148 = vadd.f32 %v1133, 0.0
      %v1149 = vadd.f32 %v1134, 0.0
      %v1150 = vadd.f32 %v1135, 0.0
      %v1151 = vadd.f32 %v1136, 0.0
      %v1152 = vadd.f32 %v1137, 0.0
      %v1153 = vadd.f32 %v1138, 0.0
      %v1154 = vadd.f32 %v1139, 0.0
      %v1155 = vadd.f32 %v1140, 0.0
      %v1156 = vadd.f32 %v1141, 0.0
      %s1157 = scalar_lea.vmem %s513, 20
      %v1158 = vld [vmem:[%s1157] sm:$0xf]
      %v1159 = vld [vmem:[%s1157 + $0x4] sm:$0xf]
      %v1160 = vld [vmem:[%s1157 + $0x8] sm:$0xf]
      %v1161 = vld [vmem:[%s1157 + $0xc] sm:$0xf]
      %v1162 = vld [vmem:[%s1157 + $0x10] sm:$0xf]
      %1166 = vrot.lane.b32.xlu0 %v783, 119
      %v1167 = vpop.permute.xlu0 %1166
      %1168 = vrot.lane.b32.xlu0 %v784, 119
      %v1169 = vpop.permute.xlu0 %1168
      %1170 = vrot.lane.b32.xlu0 %v785, 119
      %v1171 = vpop.permute.xlu0 %1170
      %v1173 = vsel %vm816, %v1167, 0
      %v1176 = vsel %vm816, %v1169, 0
      %v1179 = vsel %vm816, %v1171, 0
      %1181 = vmatprep.subr.bf16.mxu0 0
      %1182 = vmatpush1.bf16.msra.mxu0 0
      %1183 = vmatprep.subr.bf16.mxu0 0
      %1184 = vmatpush1.bf16.msra.mxu0 0
      %1185 = vmatprep.subr.bf16.mxu0 0
      %1186 = vmatpush1.bf16.msra.mxu0 0
      %1187 = vmatprep.subr.bf16.mxu0 0
      %1188 = vmatpush1.bf16.msra.mxu0 0
      %1189 = vmatprep.subr.bf16.mxu0 0
      %1190 = vmatpush1.bf16.msra.mxu0 0
      %1191 = vmatprep.subr.bf16.mxu0 0
      %1192 = vmatpush1.bf16.msra.mxu0 0
      %1193 = vmatprep.subr.bf16.mxu0 0
      %1194 = vmatpush1.bf16.msra.mxu0 0
      %1195 = vmatprep.subr.bf16.mxu0 %v833
      %1196 = vmatpush1.bf16.msra.mxu0 %v830
      %1197 = vmatprep.subr.bf16.mxu0 0
      %1198 = vmatpush2.bf16.msra.mxu0 0
      %1199 = vmatprep.subr.bf16.mxu0 0
      %1200 = vmatpush2.bf16.msra.mxu0 0
      %1201 = vmatprep.subr.bf16.mxu0 0
      %1202 = vmatpush2.bf16.msra.mxu0 0
      %1203 = vmatprep.subr.bf16.mxu0 0
      %1204 = vmatpush2.bf16.msra.mxu0 0
      %1205 = vmatprep.subr.bf16.mxu0 0
      %1206 = vmatpush2.bf16.msra.mxu0 0
      %1207 = vmatprep.subr.bf16.mxu0 0
      %1208 = vmatpush2.bf16.msra.mxu0 0
      %1209 = vmatprep.subr.bf16.mxu0 0
      %1210 = vmatpush2.bf16.msra.mxu0 0
      %1211 = vmatprep.subr.bf16.mxu0 0
      %1212 = vmatpush2.bf16.msra.mxu0 0
      %1213 = vmatprep.mubr.bf16.mxu0 0
      %1214 = vmatmul.mubr.bf16.gmra.mxu0 %v1173
      %v1215 = vpop.f32.mrf.mxu0
      %v1216 = vadd.f32 0.0, %v1215
      %v1217 = vpop.f32.mrf.mxu0
      %v1218 = vadd.f32 0.0, %v1217
      %v1219 = vpop.f32.mrf.mxu0
      %v1220 = vadd.f32 0.0, %v1219
      %v1221 = vpop.f32.mrf.mxu0
      %v1222 = vadd.f32 0.0, %v1221
      %1223 = vmatprep.mubr.bf16.mxu0 0
      %1224 = vmatmul.mubr.bf16.gmra.mxu0 %v1176
      %v1225 = vpop.f32.mrf.mxu0
      %v1226 = vadd.f32 0.0, %v1225
      %v1227 = vpop.f32.mrf.mxu0
      %v1228 = vadd.f32 0.0, %v1227
      %v1229 = vpop.f32.mrf.mxu0
      %v1230 = vadd.f32 0.0, %v1229
      %v1231 = vpop.f32.mrf.mxu0
      %v1232 = vadd.f32 0.0, %v1231
      %1233 = vmatprep.mubr.bf16.mxu0 0
      %1234 = vmatmul.mubr.bf16.gmra.mxu0 %v1179
      %v1235 = vpop.f32.mrf.mxu0
      %v1236 = vadd.f32 0.0, %v1235
      %v1237 = vpop.f32.mrf.mxu0
      %v1238 = vadd.f32 0.0, %v1237
      %v1239 = vpop.f32.mrf.mxu0
      %v1240 = vpop.f32.mrf.mxu0
      %1241 = vdwg.mxu0
      %1242 = vmatprep.subr.bf16.mxu0 0
      %1243 = vmatpush1.bf16.msra.mxu0 0
      %1244 = vmatprep.subr.bf16.mxu0 0
      %1245 = vmatpush1.bf16.msra.mxu0 0
      %1246 = vmatprep.subr.bf16.mxu0 0
      %1247 = vmatpush1.bf16.msra.mxu0 0
      %1248 = vmatprep.subr.bf16.mxu0 0
      %1249 = vmatpush1.bf16.msra.mxu0 0
      %1250 = vmatprep.subr.bf16.mxu0 0
      %1251 = vmatpush1.bf16.msra.mxu0 0
      %1252 = vmatprep.subr.bf16.mxu0 0
      %1253 = vmatpush1.bf16.msra.mxu0 0
      %1254 = vmatprep.subr.bf16.mxu0 0
      %1255 = vmatpush1.bf16.msra.mxu0 0
      %1256 = vmatprep.subr.bf16.mxu0 0
      %1257 = vmatpush1.bf16.msra.mxu0 %v836
      %1258 = vmatprep.subr.bf16.mxu0 0
      %1259 = vmatpush2.bf16.msra.mxu0 0
      %1260 = vmatprep.subr.bf16.mxu0 0
      %1261 = vmatpush2.bf16.msra.mxu0 0
      %1262 = vmatprep.subr.bf16.mxu0 0
      %1263 = vmatpush2.bf16.msra.mxu0 0
      %1264 = vmatprep.subr.bf16.mxu0 0
      %1265 = vmatpush2.bf16.msra.mxu0 0
      %1266 = vmatprep.subr.bf16.mxu0 0
      %1267 = vmatpush2.bf16.msra.mxu0 0
      %1268 = vmatprep.subr.bf16.mxu0 0
      %1269 = vmatpush2.bf16.msra.mxu0 0
      %1270 = vmatprep.subr.bf16.mxu0 0
      %1271 = vmatpush2.bf16.msra.mxu0 0
      %1272 = vmatprep.subr.bf16.mxu0 0
      %1273 = vmatpush2.bf16.msra.mxu0 0
      %1274 = vmatprep.mubr.bf16.mxu0 0
      %1275 = vmatmul.mubr.bf16.gmra.mxu0 %v1173
      %v1276 = vpop.f32.mrf.mxu0
      %v1277 = vadd.f32 0.0, %v1276
      %v1278 = vpop.f32.mrf.mxu0
      %v1279 = vpop.f32.mrf.mxu0
      %v1280 = vadd.f32 0.0, %v1279
      %v1281 = vpop.f32.mrf.mxu0
      %1282 = vmatprep.mubr.bf16.mxu0 0
      %1283 = vmatmul.mubr.bf16.gmra.mxu0 %v1176
      %v1284 = vpop.f32.mrf.mxu0
      %v1285 = vadd.f32 0.0, %v1284
      %v1286 = vpop.f32.mrf.mxu0
      %v1287 = vpop.f32.mrf.mxu0
      %v1288 = vadd.f32 0.0, %v1287
      %v1289 = vpop.f32.mrf.mxu0
      %1290 = vmatprep.mubr.bf16.mxu0 0
      %1291 = vmatmul.mubr.bf16.gmra.mxu0 %v1179
      %v1292 = vpop.f32.mrf.mxu0
      %v1293 = vadd.f32 0.0, %v1292
      %v1294 = vpop.f32.mrf.mxu0
      %v1295 = vpop.f32.mrf.mxu0
      %v1296 = vpop.f32.mrf.mxu0
      %1297 = vdwg.mxu0
      %v1303 = vunpack.c.l.b16 %v1158
      %v1304 = vunpack.c.l.b16 %v1159
      %v1305 = vunpack.c.l.b16 %v1160
      %v1306 = vunpack.c.l.b16 %v1161
      %v1307 = vunpack.c.l.b16 %v1162
      %v1308 = vpack.c.b16 %v1304, %v1303
      %v1309 = vpack.c.b16 %v1306, %v1305
      %v1310 = vpack.c.b16 %v1307, %v1307
      %v1312 = vsel %vm1000, %v1308, 0
      %v1315 = vsel %vm1000, %v1309, 0
      %v1318 = vsel %vm1000, %v1310, 0
      %1320 = vmatprep.subr.bf16.mxu0 0
      %1321 = vmatpush1.bf16.msra.mxu0 0
      %1322 = vmatprep.subr.bf16.mxu0 0
      %1323 = vmatpush1.bf16.msra.mxu0 0
      %1324 = vmatprep.subr.bf16.mxu0 0
      %1325 = vmatpush1.bf16.msra.mxu0 0
      %1326 = vmatprep.subr.bf16.mxu0 0
      %1327 = vmatpush1.bf16.msra.mxu0 0
      %1328 = vmatprep.subr.bf16.mxu0 0
      %1329 = vmatpush1.bf16.msra.mxu0 0
      %1330 = vmatprep.subr.bf16.mxu0 0
      %1331 = vmatpush1.bf16.msra.mxu0 0
      %1332 = vmatprep.subr.bf16.mxu0 %v992
      %1333 = vmatpush1.bf16.msra.mxu0 %v991
      %1334 = vmatprep.subr.bf16.mxu0 %v989
      %1335 = vmatpush1.bf16.msra.mxu0 %v988
      %1336 = vmatprep.subr.bf16.mxu0 0
      %1337 = vmatpush2.bf16.msra.mxu0 0
      %1338 = vmatprep.subr.bf16.mxu0 0
      %1339 = vmatpush2.bf16.msra.mxu0 0
      %1340 = vmatprep.subr.bf16.mxu0 0
      %1341 = vmatpush2.bf16.msra.mxu0 0
      %1342 = vmatprep.subr.bf16.mxu0 0
      %1343 = vmatpush2.bf16.msra.mxu0 0
      %1344 = vmatprep.subr.bf16.mxu0 0
      %1345 = vmatpush2.bf16.msra.mxu0 0
      %1346 = vmatprep.subr.bf16.mxu0 0
      %1347 = vmatpush2.bf16.msra.mxu0 0
      %1348 = vmatprep.subr.bf16.mxu0 0
      %1349 = vmatpush2.bf16.msra.mxu0 0
      %1350 = vmatprep.subr.bf16.mxu0 0
      %1351 = vmatpush2.bf16.msra.mxu0 0
      %1352 = vmatprep.mubr.bf16.mxu0 0
      %1353 = vmatmul.mubr.bf16.gmra.mxu0 %v1312
      %v1354 = vpop.f32.mrf.mxu0
      %v1355 = vadd.f32 0.0, %v1354
      %v1356 = vpop.f32.mrf.mxu0
      %v1357 = vadd.f32 0.0, %v1356
      %v1358 = vpop.f32.mrf.mxu0
      %v1359 = vadd.f32 0.0, %v1358
      %v1360 = vpop.f32.mrf.mxu0
      %v1361 = vadd.f32 0.0, %v1360
      %1362 = vmatprep.mubr.bf16.mxu0 0
      %1363 = vmatmul.mubr.bf16.gmra.mxu0 %v1315
      %v1364 = vpop.f32.mrf.mxu0
      %v1365 = vadd.f32 0.0, %v1364
      %v1366 = vpop.f32.mrf.mxu0
      %v1367 = vadd.f32 0.0, %v1366
      %v1368 = vpop.f32.mrf.mxu0
      %v1369 = vadd.f32 0.0, %v1368
      %v1370 = vpop.f32.mrf.mxu0
      %v1371 = vadd.f32 0.0, %v1370
      %1372 = vmatprep.mubr.bf16.mxu0 0
      %1373 = vmatmul.mubr.bf16.gmra.mxu0 %v1318
      %v1374 = vpop.f32.mrf.mxu0
      %v1375 = vadd.f32 0.0, %v1374
      %v1376 = vpop.f32.mrf.mxu0
      %v1377 = vadd.f32 0.0, %v1376
      %v1378 = vpop.f32.mrf.mxu0
      %v1379 = vpop.f32.mrf.mxu0
      %1380 = vdwg.mxu0
      %1381 = vmatprep.subr.bf16.mxu0 0
      %1382 = vmatpush1.bf16.msra.mxu0 0
      %1383 = vmatprep.subr.bf16.mxu0 0
      %1384 = vmatpush1.bf16.msra.mxu0 0
      %1385 = vmatprep.subr.bf16.mxu0 0
      %1386 = vmatpush1.bf16.msra.mxu0 0
      %1387 = vmatprep.subr.bf16.mxu0 0
      %1388 = vmatpush1.bf16.msra.mxu0 0
      %1389 = vmatprep.subr.bf16.mxu0 0
      %1390 = vmatpush1.bf16.msra.mxu0 0
      %1391 = vmatprep.subr.bf16.mxu0 0
      %1392 = vmatpush1.bf16.msra.mxu0 0
      %1393 = vmatprep.subr.bf16.mxu0 0
      %1394 = vmatpush1.bf16.msra.mxu0 %v993
      %1395 = vmatprep.subr.bf16.mxu0 0
      %1396 = vmatpush1.bf16.msra.mxu0 %v990
      %1397 = vmatprep.subr.bf16.mxu0 0
      %1398 = vmatpush2.bf16.msra.mxu0 0
      %1399 = vmatprep.subr.bf16.mxu0 0
      %1400 = vmatpush2.bf16.msra.mxu0 0
      %1401 = vmatprep.subr.bf16.mxu0 0
      %1402 = vmatpush2.bf16.msra.mxu0 0
      %1403 = vmatprep.subr.bf16.mxu0 0
      %1404 = vmatpush2.bf16.msra.mxu0 0
      %1405 = vmatprep.subr.bf16.mxu0 0
      %1406 = vmatpush2.bf16.msra.mxu0 0
      %1407 = vmatprep.subr.bf16.mxu0 0
      %1408 = vmatpush2.bf16.msra.mxu0 0
      %1409 = vmatprep.subr.bf16.mxu0 0
      %1410 = vmatpush2.bf16.msra.mxu0 0
      %1411 = vmatprep.subr.bf16.mxu0 0
      %1412 = vmatpush2.bf16.msra.mxu0 0
      %1413 = vmatprep.mubr.bf16.mxu0 0
      %1414 = vmatmul.mubr.bf16.gmra.mxu0 %v1312
      %v1415 = vpop.f32.mrf.mxu0
      %v1416 = vadd.f32 0.0, %v1415
      %v1417 = vpop.f32.mrf.mxu0
      %v1418 = vpop.f32.mrf.mxu0
      %v1419 = vadd.f32 0.0, %v1418
      %v1420 = vpop.f32.mrf.mxu0
      %1421 = vmatprep.mubr.bf16.mxu0 0
      %1422 = vmatmul.mubr.bf16.gmra.mxu0 %v1315
      %v1423 = vpop.f32.mrf.mxu0
      %v1424 = vadd.f32 0.0, %v1423
      %v1425 = vpop.f32.mrf.mxu0
      %v1426 = vpop.f32.mrf.mxu0
      %v1427 = vadd.f32 0.0, %v1426
      %v1428 = vpop.f32.mrf.mxu0
      %1429 = vmatprep.mubr.bf16.mxu0 0
      %1430 = vmatmul.mubr.bf16.gmra.mxu0 %v1318
      %v1431 = vpop.f32.mrf.mxu0
      %v1432 = vadd.f32 0.0, %v1431
      %v1433 = vpop.f32.mrf.mxu0
      %v1434 = vpop.f32.mrf.mxu0
      %v1435 = vpop.f32.mrf.mxu0
      %1436 = vdwg.mxu0
      %v1437 = vmul.f32 %v1216, %v1355
      %v1438 = vmul.f32 %v1218, %v1357
      %v1439 = vmul.f32 %v1277, %v1416
      %v1440 = vmul.f32 %v1220, %v1359
      %v1441 = vmul.f32 %v1222, %v1361
      %v1442 = vmul.f32 %v1280, %v1419
      %v1443 = vmul.f32 %v1226, %v1365
      %v1444 = vmul.f32 %v1228, %v1367
      %v1445 = vmul.f32 %v1285, %v1424
      %v1446 = vmul.f32 %v1230, %v1369
      %v1447 = vmul.f32 %v1232, %v1371
      %v1448 = vmul.f32 %v1288, %v1427
      %v1449 = vmul.f32 %v1236, %v1375
      %v1450 = vmul.f32 %v1238, %v1377
      %v1451 = vmul.f32 %v1293, %v1432
      %v1452 = vadd.f32 %v1142, %v1437
      %v1453 = vadd.f32 %v1143, %v1438
      %v1454 = vadd.f32 %v1144, %v1439
      %v1455 = vadd.f32 %v1145, %v1440
      %v1456 = vadd.f32 %v1146, %v1441
      %v1457 = vadd.f32 %v1147, %v1442
      %v1458 = vadd.f32 %v1148, %v1443
      %v1459 = vadd.f32 %v1149, %v1444
      %v1460 = vadd.f32 %v1150, %v1445
      %v1461 = vadd.f32 %v1151, %v1446
      %v1462 = vadd.f32 %v1152, %v1447
      %v1463 = vadd.f32 %v1153, %v1448
      %v1464 = vadd.f32 %v1154, %v1449
      %v1465 = vadd.f32 %v1155, %v1450
      %v1466 = vadd.f32 %v1156, %v1451
      %s1467 = scalar_lea.vmem %s513, 40
      %v1468 = vld [vmem:[%s1467] sm:$0xf]
      %v1469 = vld [vmem:[%s1467 + $0x4] sm:$0xf]
      %v1470 = vld [vmem:[%s1467 + $0x8] sm:$0xf]
      %v1471 = vld [vmem:[%s1467 + $0xc] sm:$0xf]
      %v1472 = vld [vmem:[%s1467 + $0x10] sm:$0xf]
      %1473 = vrot.lane.b32.xlu0 %v783, 110
      %v1474 = vpop.permute.xlu0 %1473
      %1475 = vrot.lane.b32.xlu0 %v784, 110
      %v1476 = vpop.permute.xlu0 %1475
      %1477 = vrot.lane.b32.xlu0 %v785, 110
      %v1478 = vpop.permute.xlu0 %1477
      %v1480 = vsel %vm816, %v1474, 0
      %v1483 = vsel %vm816, %v1476, 0
      %v1486 = vsel %vm816, %v1478, 0
      %1488 = vmatprep.subr.bf16.mxu0 0
      %1489 = vmatpush1.bf16.msra.mxu0 0
      %1490 = vmatprep.subr.bf16.mxu0 0
      %1491 = vmatpush1.bf16.msra.mxu0 0
      %1492 = vmatprep.subr.bf16.mxu0 0
      %1493 = vmatpush1.bf16.msra.mxu0 0
      %1494 = vmatprep.subr.bf16.mxu0 0
      %1495 = vmatpush1.bf16.msra.mxu0 0
      %1496 = vmatprep.subr.bf16.mxu0 0
      %1497 = vmatpush1.bf16.msra.mxu0 0
      %1498 = vmatprep.subr.bf16.mxu0 0
      %1499 = vmatpush1.bf16.msra.mxu0 0
      %1500 = vmatprep.subr.bf16.mxu0 0
      %1501 = vmatpush1.bf16.msra.mxu0 0
      %1502 = vmatprep.subr.bf16.mxu0 %v833
      %1503 = vmatpush1.bf16.msra.mxu0 %v830
      %1504 = vmatprep.subr.bf16.mxu0 0
      %1505 = vmatpush2.bf16.msra.mxu0 0
      %1506 = vmatprep.subr.bf16.mxu0 0
      %1507 = vmatpush2.bf16.msra.mxu0 0
      %1508 = vmatprep.subr.bf16.mxu0 0
      %1509 = vmatpush2.bf16.msra.mxu0 0
      %1510 = vmatprep.subr.bf16.mxu0 0
      %1511 = vmatpush2.bf16.msra.mxu0 0
      %1512 = vmatprep.subr.bf16.mxu0 0
      %1513 = vmatpush2.bf16.msra.mxu0 0
      %1514 = vmatprep.subr.bf16.mxu0 0
      %1515 = vmatpush2.bf16.msra.mxu0 0
      %1516 = vmatprep.subr.bf16.mxu0 0
      %1517 = vmatpush2.bf16.msra.mxu0 0
      %1518 = vmatprep.subr.bf16.mxu0 0
      %1519 = vmatpush2.bf16.msra.mxu0 0
      %1520 = vmatprep.mubr.bf16.mxu0 0
      %1521 = vmatmul.mubr.bf16.gmra.mxu0 %v1480
      %v1522 = vpop.f32.mrf.mxu0
      %v1523 = vadd.f32 0.0, %v1522
      %v1524 = vpop.f32.mrf.mxu0
      %v1525 = vadd.f32 0.0, %v1524
      %v1526 = vpop.f32.mrf.mxu0
      %v1527 = vadd.f32 0.0, %v1526
      %v1528 = vpop.f32.mrf.mxu0
      %v1529 = vadd.f32 0.0, %v1528
      %1530 = vmatprep.mubr.bf16.mxu0 0
      %1531 = vmatmul.mubr.bf16.gmra.mxu0 %v1483
      %v1532 = vpop.f32.mrf.mxu0
      %v1533 = vadd.f32 0.0, %v1532
      %v1534 = vpop.f32.mrf.mxu0
      %v1535 = vadd.f32 0.0, %v1534
      %v1536 = vpop.f32.mrf.mxu0
      %v1537 = vadd.f32 0.0, %v1536
      %v1538 = vpop.f32.mrf.mxu0
      %v1539 = vadd.f32 0.0, %v1538
      %1540 = vmatprep.mubr.bf16.mxu0 0
      %1541 = vmatmul.mubr.bf16.gmra.mxu0 %v1486
      %v1542 = vpop.f32.mrf.mxu0
      %v1543 = vadd.f32 0.0, %v1542
      %v1544 = vpop.f32.mrf.mxu0
      %v1545 = vadd.f32 0.0, %v1544
      %v1546 = vpop.f32.mrf.mxu0
      %v1547 = vpop.f32.mrf.mxu0
      %1548 = vdwg.mxu0
      %1549 = vmatprep.subr.bf16.mxu0 0
      %1550 = vmatpush1.bf16.msra.mxu0 0
      %1551 = vmatprep.subr.bf16.mxu0 0
      %1552 = vmatpush1.bf16.msra.mxu0 0
      %1553 = vmatprep.subr.bf16.mxu0 0
      %1554 = vmatpush1.bf16.msra.mxu0 0
      %1555 = vmatprep.subr.bf16.mxu0 0
      %1556 = vmatpush1.bf16.msra.mxu0 0
      %1557 = vmatprep.subr.bf16.mxu0 0
      %1558 = vmatpush1.bf16.msra.mxu0 0
      %1559 = vmatprep.subr.bf16.mxu0 0
      %1560 = vmatpush1.bf16.msra.mxu0 0
      %1561 = vmatprep.subr.bf16.mxu0 0
      %1562 = vmatpush1.bf16.msra.mxu0 0
      %1563 = vmatprep.subr.bf16.mxu0 0
      %1564 = vmatpush1.bf16.msra.mxu0 %v836
      %1565 = vmatprep.subr.bf16.mxu0 0
      %1566 = vmatpush2.bf16.msra.mxu0 0
      %1567 = vmatprep.subr.bf16.mxu0 0
      %1568 = vmatpush2.bf16.msra.mxu0 0
      %1569 = vmatprep.subr.bf16.mxu0 0
      %1570 = vmatpush2.bf16.msra.mxu0 0
      %1571 = vmatprep.subr.bf16.mxu0 0
      %1572 = vmatpush2.bf16.msra.mxu0 0
      %1573 = vmatprep.subr.bf16.mxu0 0
      %1574 = vmatpush2.bf16.msra.mxu0 0
      %1575 = vmatprep.subr.bf16.mxu0 0
      %1576 = vmatpush2.bf16.msra.mxu0 0
      %1577 = vmatprep.subr.bf16.mxu0 0
      %1578 = vmatpush2.bf16.msra.mxu0 0
      %1579 = vmatprep.subr.bf16.mxu0 0
      %1580 = vmatpush2.bf16.msra.mxu0 0
      %1581 = vmatprep.mubr.bf16.mxu0 0
      %1582 = vmatmul.mubr.bf16.gmra.mxu0 %v1480
      %v1583 = vpop.f32.mrf.mxu0
      %v1584 = vadd.f32 0.0, %v1583
      %v1585 = vpop.f32.mrf.mxu0
      %v1586 = vpop.f32.mrf.mxu0
      %v1587 = vadd.f32 0.0, %v1586
      %v1588 = vpop.f32.mrf.mxu0
      %1589 = vmatprep.mubr.bf16.mxu0 0
      %1590 = vmatmul.mubr.bf16.gmra.mxu0 %v1483
      %v1591 = vpop.f32.mrf.mxu0
      %v1592 = vadd.f32 0.0, %v1591
      %v1593 = vpop.f32.mrf.mxu0
      %v1594 = vpop.f32.mrf.mxu0
      %v1595 = vadd.f32 0.0, %v1594
      %v1596 = vpop.f32.mrf.mxu0
      %1597 = vmatprep.mubr.bf16.mxu0 0
      %1598 = vmatmul.mubr.bf16.gmra.mxu0 %v1486
      %v1599 = vpop.f32.mrf.mxu0
      %v1600 = vadd.f32 0.0, %v1599
      %v1601 = vpop.f32.mrf.mxu0
      %v1602 = vpop.f32.mrf.mxu0
      %v1603 = vpop.f32.mrf.mxu0
      %1604 = vdwg.mxu0
      %v1610 = vunpack.c.l.b16 %v1468
      %v1611 = vunpack.c.l.b16 %v1469
      %v1612 = vunpack.c.l.b16 %v1470
      %v1613 = vunpack.c.l.b16 %v1471
      %v1614 = vunpack.c.l.b16 %v1472
      %v1615 = vpack.c.b16 %v1611, %v1610
      %v1616 = vpack.c.b16 %v1613, %v1612
      %v1617 = vpack.c.b16 %v1614, %v1614
      %v1619 = vsel %vm1000, %v1615, 0
      %v1622 = vsel %vm1000, %v1616, 0
      %v1625 = vsel %vm1000, %v1617, 0
      %1627 = vmatprep.subr.bf16.mxu0 0
      %1628 = vmatpush1.bf16.msra.mxu0 0
      %1629 = vmatprep.subr.bf16.mxu0 0
      %1630 = vmatpush1.bf16.msra.mxu0 0
      %1631 = vmatprep.subr.bf16.mxu0 0
      %1632 = vmatpush1.bf16.msra.mxu0 0
      %1633 = vmatprep.subr.bf16.mxu0 0
      %1634 = vmatpush1.bf16.msra.mxu0 0
      %1635 = vmatprep.subr.bf16.mxu0 0
      %1636 = vmatpush1.bf16.msra.mxu0 0
      %1637 = vmatprep.subr.bf16.mxu0 0
      %1638 = vmatpush1.bf16.msra.mxu0 0
      %1639 = vmatprep.subr.bf16.mxu0 %v992
      %1640 = vmatpush1.bf16.msra.mxu0 %v991
      %1641 = vmatprep.subr.bf16.mxu0 %v989
      %1642 = vmatpush1.bf16.msra.mxu0 %v988
      %1643 = vmatprep.subr.bf16.mxu0 0
      %1644 = vmatpush2.bf16.msra.mxu0 0
      %1645 = vmatprep.subr.bf16.mxu0 0
      %1646 = vmatpush2.bf16.msra.mxu0 0
      %1647 = vmatprep.subr.bf16.mxu0 0
      %1648 = vmatpush2.bf16.msra.mxu0 0
      %1649 = vmatprep.subr.bf16.mxu0 0
      %1650 = vmatpush2.bf16.msra.mxu0 0
      %1651 = vmatprep.subr.bf16.mxu0 0
      %1652 = vmatpush2.bf16.msra.mxu0 0
      %1653 = vmatprep.subr.bf16.mxu0 0
      %1654 = vmatpush2.bf16.msra.mxu0 0
      %1655 = vmatprep.subr.bf16.mxu0 0
      %1656 = vmatpush2.bf16.msra.mxu0 0
      %1657 = vmatprep.subr.bf16.mxu0 0
      %1658 = vmatpush2.bf16.msra.mxu0 0
      %1659 = vmatprep.mubr.bf16.mxu0 0
      %1660 = vmatmul.mubr.bf16.gmra.mxu0 %v1619
      %v1661 = vpop.f32.mrf.mxu0
      %v1662 = vadd.f32 0.0, %v1661
      %v1663 = vpop.f32.mrf.mxu0
      %v1664 = vadd.f32 0.0, %v1663
      %v1665 = vpop.f32.mrf.mxu0
      %v1666 = vadd.f32 0.0, %v1665
      %v1667 = vpop.f32.mrf.mxu0
      %v1668 = vadd.f32 0.0, %v1667
      %1669 = vmatprep.mubr.bf16.mxu0 0
      %1670 = vmatmul.mubr.bf16.gmra.mxu0 %v1622
      %v1671 = vpop.f32.mrf.mxu0
      %v1672 = vadd.f32 0.0, %v1671
      %v1673 = vpop.f32.mrf.mxu0
      %v1674 = vadd.f32 0.0, %v1673
      %v1675 = vpop.f32.mrf.mxu0
      %v1676 = vadd.f32 0.0, %v1675
      %v1677 = vpop.f32.mrf.mxu0
      %v1678 = vadd.f32 0.0, %v1677
      %1679 = vmatprep.mubr.bf16.mxu0 0
      %1680 = vmatmul.mubr.bf16.gmra.mxu0 %v1625
      %v1681 = vpop.f32.mrf.mxu0
      %v1682 = vadd.f32 0.0, %v1681
      %v1683 = vpop.f32.mrf.mxu0
      %v1684 = vadd.f32 0.0, %v1683
      %v1685 = vpop.f32.mrf.mxu0
      %v1686 = vpop.f32.mrf.mxu0
      %1687 = vdwg.mxu0
      %1688 = vmatprep.subr.bf16.mxu0 0
      %1689 = vmatpush1.bf16.msra.mxu0 0
      %1690 = vmatprep.subr.bf16.mxu0 0
      %1691 = vmatpush1.bf16.msra.mxu0 0
      %1692 = vmatprep.subr.bf16.mxu0 0
      %1693 = vmatpush1.bf16.msra.mxu0 0
      %1694 = vmatprep.subr.bf16.mxu0 0
      %1695 = vmatpush1.bf16.msra.mxu0 0
      %1696 = vmatprep.subr.bf16.mxu0 0
      %1697 = vmatpush1.bf16.msra.mxu0 0
      %1698 = vmatprep.subr.bf16.mxu0 0
      %1699 = vmatpush1.bf16.msra.mxu0 0
      %1700 = vmatprep.subr.bf16.mxu0 0
      %1701 = vmatpush1.bf16.msra.mxu0 %v993
      %1702 = vmatprep.subr.bf16.mxu0 0
      %1703 = vmatpush1.bf16.msra.mxu0 %v990
      %1704 = vmatprep.subr.bf16.mxu0 0
      %1705 = vmatpush2.bf16.msra.mxu0 0
      %1706 = vmatprep.subr.bf16.mxu0 0
      %1707 = vmatpush2.bf16.msra.mxu0 0
      %1708 = vmatprep.subr.bf16.mxu0 0
      %1709 = vmatpush2.bf16.msra.mxu0 0
      %1710 = vmatprep.subr.bf16.mxu0 0
      %1711 = vmatpush2.bf16.msra.mxu0 0
      %1712 = vmatprep.subr.bf16.mxu0 0
      %1713 = vmatpush2.bf16.msra.mxu0 0
      %1714 = vmatprep.subr.bf16.mxu0 0
      %1715 = vmatpush2.bf16.msra.mxu0 0
      %1716 = vmatprep.subr.bf16.mxu0 0
      %1717 = vmatpush2.bf16.msra.mxu0 0
      %1718 = vmatprep.subr.bf16.mxu0 0
      %1719 = vmatpush2.bf16.msra.mxu0 0
      %1720 = vmatprep.mubr.bf16.mxu0 0
      %1721 = vmatmul.mubr.bf16.gmra.mxu0 %v1619
      %v1722 = vpop.f32.mrf.mxu0
      %v1723 = vadd.f32 0.0, %v1722
      %v1724 = vpop.f32.mrf.mxu0
      %v1725 = vpop.f32.mrf.mxu0
      %v1726 = vadd.f32 0.0, %v1725
      %v1727 = vpop.f32.mrf.mxu0
      %1728 = vmatprep.mubr.bf16.mxu0 0
      %1729 = vmatmul.mubr.bf16.gmra.mxu0 %v1622
      %v1730 = vpop.f32.mrf.mxu0
      %v1731 = vadd.f32 0.0, %v1730
      %v1732 = vpop.f32.mrf.mxu0
      %v1733 = vpop.f32.mrf.mxu0
      %v1734 = vadd.f32 0.0, %v1733
      %v1735 = vpop.f32.mrf.mxu0
      %1736 = vmatprep.mubr.bf16.mxu0 0
      %1737 = vmatmul.mubr.bf16.gmra.mxu0 %v1625
      %v1738 = vpop.f32.mrf.mxu0
      %v1739 = vadd.f32 0.0, %v1738
      %v1740 = vpop.f32.mrf.mxu0
      %v1741 = vpop.f32.mrf.mxu0
      %v1742 = vpop.f32.mrf.mxu0
      %1743 = vdwg.mxu0
      %v1744 = vmul.f32 %v1523, %v1662
      %v1745 = vmul.f32 %v1525, %v1664
      %v1746 = vmul.f32 %v1584, %v1723
      %v1747 = vmul.f32 %v1527, %v1666
      %v1748 = vmul.f32 %v1529, %v1668
      %v1749 = vmul.f32 %v1587, %v1726
      %v1750 = vmul.f32 %v1533, %v1672
      %v1751 = vmul.f32 %v1535, %v1674
      %v1752 = vmul.f32 %v1592, %v1731
      %v1753 = vmul.f32 %v1537, %v1676
      %v1754 = vmul.f32 %v1539, %v1678
      %v1755 = vmul.f32 %v1595, %v1734
      %v1756 = vmul.f32 %v1543, %v1682
      %v1757 = vmul.f32 %v1545, %v1684
      %v1758 = vmul.f32 %v1600, %v1739
      %v1759 = vadd.f32 %v1452, %v1744
      %v1760 = vadd.f32 %v1453, %v1745
      %v1761 = vadd.f32 %v1454, %v1746
      %v1762 = vadd.f32 %v1455, %v1747
      %v1763 = vadd.f32 %v1456, %v1748
      %v1764 = vadd.f32 %v1457, %v1749
      %v1765 = vadd.f32 %v1458, %v1750
      %v1766 = vadd.f32 %v1459, %v1751
      %v1767 = vadd.f32 %v1460, %v1752
      %v1768 = vadd.f32 %v1461, %v1753
      %v1769 = vadd.f32 %v1462, %v1754
      %v1770 = vadd.f32 %v1463, %v1755
      %v1771 = vadd.f32 %v1464, %v1756
      %v1772 = vadd.f32 %v1465, %v1757
      %v1773 = vadd.f32 %v1466, %v1758
      %s1774 = scalar_lea.vmem %s513, 60
      %v1775 = vld [vmem:[%s1774] sm:$0xf]
      %v1776 = vld [vmem:[%s1774 + $0x4] sm:$0xf]
      %v1777 = vld [vmem:[%s1774 + $0x8] sm:$0xf]
      %v1778 = vld [vmem:[%s1774 + $0xc] sm:$0xf]
      %v1779 = vld [vmem:[%s1774 + $0x10] sm:$0xf]
      %1780 = vrot.lane.b32.xlu0 %v783, 101
      %v1781 = vpop.permute.xlu0 %1780
      %1782 = vrot.lane.b32.xlu0 %v784, 101
      %v1783 = vpop.permute.xlu0 %1782
      %1784 = vrot.lane.b32.xlu0 %v785, 101
      %v1785 = vpop.permute.xlu0 %1784
      %v1787 = vsel %vm816, %v1781, 0
      %v1790 = vsel %vm816, %v1783, 0
      %v1793 = vsel %vm816, %v1785, 0
      %1795 = vmatprep.subr.bf16.mxu0 0
      %1796 = vmatpush1.bf16.msra.mxu0 0
      %1797 = vmatprep.subr.bf16.mxu0 0
      %1798 = vmatpush1.bf16.msra.mxu0 0
      %1799 = vmatprep.subr.bf16.mxu0 0
      %1800 = vmatpush1.bf16.msra.mxu0 0
      %1801 = vmatprep.subr.bf16.mxu0 0
      %1802 = vmatpush1.bf16.msra.mxu0 0
      %1803 = vmatprep.subr.bf16.mxu0 0
      %1804 = vmatpush1.bf16.msra.mxu0 0
      %1805 = vmatprep.subr.bf16.mxu0 0
      %1806 = vmatpush1.bf16.msra.mxu0 0
      %1807 = vmatprep.subr.bf16.mxu0 0
      %1808 = vmatpush1.bf16.msra.mxu0 0
      %1809 = vmatprep.subr.bf16.mxu0 %v833
      %1810 = vmatpush1.bf16.msra.mxu0 %v830
      %1811 = vmatprep.subr.bf16.mxu0 0
      %1812 = vmatpush2.bf16.msra.mxu0 0
      %1813 = vmatprep.subr.bf16.mxu0 0
      %1814 = vmatpush2.bf16.msra.mxu0 0
      %1815 = vmatprep.subr.bf16.mxu0 0
      %1816 = vmatpush2.bf16.msra.mxu0 0
      %1817 = vmatprep.subr.bf16.mxu0 0
      %1818 = vmatpush2.bf16.msra.mxu0 0
      %1819 = vmatprep.subr.bf16.mxu0 0
      %1820 = vmatpush2.bf16.msra.mxu0 0
      %1821 = vmatprep.subr.bf16.mxu0 0
      %1822 = vmatpush2.bf16.msra.mxu0 0
      %1823 = vmatprep.subr.bf16.mxu0 0
      %1824 = vmatpush2.bf16.msra.mxu0 0
      %1825 = vmatprep.subr.bf16.mxu0 0
      %1826 = vmatpush2.bf16.msra.mxu0 0
      %1827 = vmatprep.mubr.bf16.mxu0 0
      %1828 = vmatmul.mubr.bf16.gmra.mxu0 %v1787
      %v1829 = vpop.f32.mrf.mxu0
      %v1830 = vadd.f32 0.0, %v1829
      %v1831 = vpop.f32.mrf.mxu0
      %v1832 = vadd.f32 0.0, %v1831
      %v1833 = vpop.f32.mrf.mxu0
      %v1834 = vadd.f32 0.0, %v1833
      %v1835 = vpop.f32.mrf.mxu0
      %v1836 = vadd.f32 0.0, %v1835
      %1837 = vmatprep.mubr.bf16.mxu0 0
      %1838 = vmatmul.mubr.bf16.gmra.mxu0 %v1790
      %v1839 = vpop.f32.mrf.mxu0
      %v1840 = vadd.f32 0.0, %v1839
      %v1841 = vpop.f32.mrf.mxu0
      %v1842 = vadd.f32 0.0, %v1841
      %v1843 = vpop.f32.mrf.mxu0
      %v1844 = vadd.f32 0.0, %v1843
      %v1845 = vpop.f32.mrf.mxu0
      %v1846 = vadd.f32 0.0, %v1845
      %1847 = vmatprep.mubr.bf16.mxu0 0
      %1848 = vmatmul.mubr.bf16.gmra.mxu0 %v1793
      %v1849 = vpop.f32.mrf.mxu0
      %v1850 = vadd.f32 0.0, %v1849
      %v1851 = vpop.f32.mrf.mxu0
      %v1852 = vadd.f32 0.0, %v1851
      %v1853 = vpop.f32.mrf.mxu0
      %v1854 = vpop.f32.mrf.mxu0
      %1855 = vdwg.mxu0
      %1856 = vmatprep.subr.bf16.mxu0 0
      %1857 = vmatpush1.bf16.msra.mxu0 0
      %1858 = vmatprep.subr.bf16.mxu0 0
      %1859 = vmatpush1.bf16.msra.mxu0 0
      %1860 = vmatprep.subr.bf16.mxu0 0
      %1861 = vmatpush1.bf16.msra.mxu0 0
      %1862 = vmatprep.subr.bf16.mxu0 0
      %1863 = vmatpush1.bf16.msra.mxu0 0
      %1864 = vmatprep.subr.bf16.mxu0 0
      %1865 = vmatpush1.bf16.msra.mxu0 0
      %1866 = vmatprep.subr.bf16.mxu0 0
      %1867 = vmatpush1.bf16.msra.mxu0 0
      %1868 = vmatprep.subr.bf16.mxu0 0
      %1869 = vmatpush1.bf16.msra.mxu0 0
      %1870 = vmatprep.subr.bf16.mxu0 0
      %1871 = vmatpush1.bf16.msra.mxu0 %v836
      %1872 = vmatprep.subr.bf16.mxu0 0
      %1873 = vmatpush2.bf16.msra.mxu0 0
      %1874 = vmatprep.subr.bf16.mxu0 0
      %1875 = vmatpush2.bf16.msra.mxu0 0
      %1876 = vmatprep.subr.bf16.mxu0 0
      %1877 = vmatpush2.bf16.msra.mxu0 0
      %1878 = vmatprep.subr.bf16.mxu0 0
      %1879 = vmatpush2.bf16.msra.mxu0 0
      %1880 = vmatprep.subr.bf16.mxu0 0
      %1881 = vmatpush2.bf16.msra.mxu0 0
      %1882 = vmatprep.subr.bf16.mxu0 0
      %1883 = vmatpush2.bf16.msra.mxu0 0
      %1884 = vmatprep.subr.bf16.mxu0 0
      %1885 = vmatpush2.bf16.msra.mxu0 0
      %1886 = vmatprep.subr.bf16.mxu0 0
      %1887 = vmatpush2.bf16.msra.mxu0 0
      %1888 = vmatprep.mubr.bf16.mxu0 0
      %1889 = vmatmul.mubr.bf16.gmra.mxu0 %v1787
      %v1890 = vpop.f32.mrf.mxu0
      %v1891 = vadd.f32 0.0, %v1890
      %v1892 = vpop.f32.mrf.mxu0
      %v1893 = vpop.f32.mrf.mxu0
      %v1894 = vadd.f32 0.0, %v1893
      %v1895 = vpop.f32.mrf.mxu0
      %1896 = vmatprep.mubr.bf16.mxu0 0
      %1897 = vmatmul.mubr.bf16.gmra.mxu0 %v1790
      %v1898 = vpop.f32.mrf.mxu0
      %v1899 = vadd.f32 0.0, %v1898
      %v1900 = vpop.f32.mrf.mxu0
      %v1901 = vpop.f32.mrf.mxu0
      %v1902 = vadd.f32 0.0, %v1901
      %v1903 = vpop.f32.mrf.mxu0
      %1904 = vmatprep.mubr.bf16.mxu0 0
      %1905 = vmatmul.mubr.bf16.gmra.mxu0 %v1793
      %v1906 = vpop.f32.mrf.mxu0
      %v1907 = vadd.f32 0.0, %v1906
      %v1908 = vpop.f32.mrf.mxu0
      %v1909 = vpop.f32.mrf.mxu0
      %v1910 = vpop.f32.mrf.mxu0
      %1911 = vdwg.mxu0
      %v1917 = vunpack.c.l.b16 %v1775
      %v1918 = vunpack.c.l.b16 %v1776
      %v1919 = vunpack.c.l.b16 %v1777
      %v1920 = vunpack.c.l.b16 %v1778
      %v1921 = vunpack.c.l.b16 %v1779
      %v1922 = vpack.c.b16 %v1918, %v1917
      %v1923 = vpack.c.b16 %v1920, %v1919
      %v1924 = vpack.c.b16 %v1921, %v1921
      %v1926 = vsel %vm1000, %v1922, 0
      %v1929 = vsel %vm1000, %v1923, 0
      %v1932 = vsel %vm1000, %v1924, 0
      %1934 = vmatprep.subr.bf16.mxu0 0
      %1935 = vmatpush1.bf16.msra.mxu0 0
      %1936 = vmatprep.subr.bf16.mxu0 0
      %1937 = vmatpush1.bf16.msra.mxu0 0
      %1938 = vmatprep.subr.bf16.mxu0 0
      %1939 = vmatpush1.bf16.msra.mxu0 0
      %1940 = vmatprep.subr.bf16.mxu0 0
      %1941 = vmatpush1.bf16.msra.mxu0 0
      %1942 = vmatprep.subr.bf16.mxu0 0
      %1943 = vmatpush1.bf16.msra.mxu0 0
      %1944 = vmatprep.subr.bf16.mxu0 0
      %1945 = vmatpush1.bf16.msra.mxu0 0
      %1946 = vmatprep.subr.bf16.mxu0 %v992
      %1947 = vmatpush1.bf16.msra.mxu0 %v991
      %1948 = vmatprep.subr.bf16.mxu0 %v989
      %1949 = vmatpush1.bf16.msra.mxu0 %v988
      %1950 = vmatprep.subr.bf16.mxu0 0
      %1951 = vmatpush2.bf16.msra.mxu0 0
      %1952 = vmatprep.subr.bf16.mxu0 0
      %1953 = vmatpush2.bf16.msra.mxu0 0
      %1954 = vmatprep.subr.bf16.mxu0 0
      %1955 = vmatpush2.bf16.msra.mxu0 0
      %1956 = vmatprep.subr.bf16.mxu0 0
      %1957 = vmatpush2.bf16.msra.mxu0 0
      %1958 = vmatprep.subr.bf16.mxu0 0
      %1959 = vmatpush2.bf16.msra.mxu0 0
      %1960 = vmatprep.subr.bf16.mxu0 0
      %1961 = vmatpush2.bf16.msra.mxu0 0
      %1962 = vmatprep.subr.bf16.mxu0 0
      %1963 = vmatpush2.bf16.msra.mxu0 0
      %1964 = vmatprep.subr.bf16.mxu0 0
      %1965 = vmatpush2.bf16.msra.mxu0 0
      %1966 = vmatprep.mubr.bf16.mxu0 0
      %1967 = vmatmul.mubr.bf16.gmra.mxu0 %v1926
      %v1968 = vpop.f32.mrf.mxu0
      %v1969 = vadd.f32 0.0, %v1968
      %v1970 = vpop.f32.mrf.mxu0
      %v1971 = vadd.f32 0.0, %v1970
      %v1972 = vpop.f32.mrf.mxu0
      %v1973 = vadd.f32 0.0, %v1972
      %v1974 = vpop.f32.mrf.mxu0
      %v1975 = vadd.f32 0.0, %v1974
      %1976 = vmatprep.mubr.bf16.mxu0 0
      %1977 = vmatmul.mubr.bf16.gmra.mxu0 %v1929
      %v1978 = vpop.f32.mrf.mxu0
      %v1979 = vadd.f32 0.0, %v1978
      %v1980 = vpop.f32.mrf.mxu0
      %v1981 = vadd.f32 0.0, %v1980
      %v1982 = vpop.f32.mrf.mxu0
      %v1983 = vadd.f32 0.0, %v1982
      %v1984 = vpop.f32.mrf.mxu0
      %v1985 = vadd.f32 0.0, %v1984
      %1986 = vmatprep.mubr.bf16.mxu0 0
      %1987 = vmatmul.mubr.bf16.gmra.mxu0 %v1932
      %v1988 = vpop.f32.mrf.mxu0
      %v1989 = vadd.f32 0.0, %v1988
      %v1990 = vpop.f32.mrf.mxu0
      %v1991 = vadd.f32 0.0, %v1990
      %v1992 = vpop.f32.mrf.mxu0
      %v1993 = vpop.f32.mrf.mxu0
      %1994 = vdwg.mxu0
      %1995 = vmatprep.subr.bf16.mxu0 0
      %1996 = vmatpush1.bf16.msra.mxu0 0
      %1997 = vmatprep.subr.bf16.mxu0 0
      %1998 = vmatpush1.bf16.msra.mxu0 0
      %1999 = vmatprep.subr.bf16.mxu0 0
      %2000 = vmatpush1.bf16.msra.mxu0 0
      %2001 = vmatprep.subr.bf16.mxu0 0
      %2002 = vmatpush1.bf16.msra.mxu0 0
      %2003 = vmatprep.subr.bf16.mxu0 0
      %2004 = vmatpush1.bf16.msra.mxu0 0
      %2005 = vmatprep.subr.bf16.mxu0 0
      %2006 = vmatpush1.bf16.msra.mxu0 0
      %2007 = vmatprep.subr.bf16.mxu0 0
      %2008 = vmatpush1.bf16.msra.mxu0 %v993
      %2009 = vmatprep.subr.bf16.mxu0 0
      %2010 = vmatpush1.bf16.msra.mxu0 %v990
      %2011 = vmatprep.subr.bf16.mxu0 0
      %2012 = vmatpush2.bf16.msra.mxu0 0
      %2013 = vmatprep.subr.bf16.mxu0 0
      %2014 = vmatpush2.bf16.msra.mxu0 0
      %2015 = vmatprep.subr.bf16.mxu0 0
      %2016 = vmatpush2.bf16.msra.mxu0 0
      %2017 = vmatprep.subr.bf16.mxu0 0
      %2018 = vmatpush2.bf16.msra.mxu0 0
      %2019 = vmatprep.subr.bf16.mxu0 0
      %2020 = vmatpush2.bf16.msra.mxu0 0
      %2021 = vmatprep.subr.bf16.mxu0 0
      %2022 = vmatpush2.bf16.msra.mxu0 0
      %2023 = vmatprep.subr.bf16.mxu0 0
      %2024 = vmatpush2.bf16.msra.mxu0 0
      %2025 = vmatprep.subr.bf16.mxu0 0
      %2026 = vmatpush2.bf16.msra.mxu0 0
      %2027 = vmatprep.mubr.bf16.mxu0 0
      %2028 = vmatmul.mubr.bf16.gmra.mxu0 %v1926
      %v2029 = vpop.f32.mrf.mxu0
      %v2030 = vadd.f32 0.0, %v2029
      %v2031 = vpop.f32.mrf.mxu0
      %v2032 = vpop.f32.mrf.mxu0
      %v2033 = vadd.f32 0.0, %v2032
      %v2034 = vpop.f32.mrf.mxu0
      %2035 = vmatprep.mubr.bf16.mxu0 0
      %2036 = vmatmul.mubr.bf16.gmra.mxu0 %v1929
      %v2037 = vpop.f32.mrf.mxu0
      %v2038 = vadd.f32 0.0, %v2037
      %v2039 = vpop.f32.mrf.mxu0
      %v2040 = vpop.f32.mrf.mxu0
      %v2041 = vadd.f32 0.0, %v2040
      %v2042 = vpop.f32.mrf.mxu0
      %2043 = vmatprep.mubr.bf16.mxu0 0
      %2044 = vmatmul.mubr.bf16.gmra.mxu0 %v1932
      %v2045 = vpop.f32.mrf.mxu0
      %v2046 = vadd.f32 0.0, %v2045
      %v2047 = vpop.f32.mrf.mxu0
      %v2048 = vpop.f32.mrf.mxu0
      %v2049 = vpop.f32.mrf.mxu0
      %2050 = vdwg.mxu0
      %v2051 = vmul.f32 %v1830, %v1969
      %v2052 = vmul.f32 %v1832, %v1971
      %v2053 = vmul.f32 %v1891, %v2030
      %v2054 = vmul.f32 %v1834, %v1973
      %v2055 = vmul.f32 %v1836, %v1975
      %v2056 = vmul.f32 %v1894, %v2033
      %v2057 = vmul.f32 %v1840, %v1979
      %v2058 = vmul.f32 %v1842, %v1981
      %v2059 = vmul.f32 %v1899, %v2038
      %v2060 = vmul.f32 %v1844, %v1983
      %v2061 = vmul.f32 %v1846, %v1985
      %v2062 = vmul.f32 %v1902, %v2041
      %v2063 = vmul.f32 %v1850, %v1989
      %v2064 = vmul.f32 %v1852, %v1991
      %v2065 = vmul.f32 %v1907, %v2046
      %v2066 = vadd.f32 %v1759, %v2051
      %v2067 = vadd.f32 %v1760, %v2052
      %v2068 = vadd.f32 %v1761, %v2053
      %v2069 = vadd.f32 %v1762, %v2054
      %v2070 = vadd.f32 %v1763, %v2055
      %v2071 = vadd.f32 %v1764, %v2056
      %v2072 = vadd.f32 %v1765, %v2057
      %v2073 = vadd.f32 %v1766, %v2058
      %v2074 = vadd.f32 %v1767, %v2059
      %v2075 = vadd.f32 %v1768, %v2060
      %v2076 = vadd.f32 %v1769, %v2061
      %v2077 = vadd.f32 %v1770, %v2062
      %v2078 = vadd.f32 %v1771, %v2063
      %v2079 = vadd.f32 %v1772, %v2064
      %v2080 = vadd.f32 %v1773, %v2065
      %s2081 = scalar_lea.vmem %s513, 80
      %v2082 = vld [vmem:[%s2081] sm:$0xf]
      %v2083 = vld [vmem:[%s2081 + $0x4] sm:$0xf]
      %v2084 = vld [vmem:[%s2081 + $0x8] sm:$0xf]
      %v2085 = vld [vmem:[%s2081 + $0xc] sm:$0xf]
      %v2086 = vld [vmem:[%s2081 + $0x10] sm:$0xf]
      %2087 = vrot.lane.b32.xlu0 %v783, 92
      %v2088 = vpop.permute.xlu0 %2087
      %2089 = vrot.lane.b32.xlu0 %v784, 92
      %v2090 = vpop.permute.xlu0 %2089
      %2091 = vrot.lane.b32.xlu0 %v785, 92
      %v2092 = vpop.permute.xlu0 %2091
      %v2094 = vsel %vm816, %v2088, 0
      %v2097 = vsel %vm816, %v2090, 0
      %v2100 = vsel %vm816, %v2092, 0
      %2102 = vmatprep.subr.bf16.mxu0 0
      %2103 = vmatpush1.bf16.msra.mxu0 0
      %2104 = vmatprep.subr.bf16.mxu0 0
      %2105 = vmatpush1.bf16.msra.mxu0 0
      %2106 = vmatprep.subr.bf16.mxu0 0
      %2107 = vmatpush1.bf16.msra.mxu0 0
      %2108 = vmatprep.subr.bf16.mxu0 0
      %2109 = vmatpush1.bf16.msra.mxu0 0
      %2110 = vmatprep.subr.bf16.mxu0 0
      %2111 = vmatpush1.bf16.msra.mxu0 0
      %2112 = vmatprep.subr.bf16.mxu0 0
      %2113 = vmatpush1.bf16.msra.mxu0 0
      %2114 = vmatprep.subr.bf16.mxu0 0
      %2115 = vmatpush1.bf16.msra.mxu0 0
      %2116 = vmatprep.subr.bf16.mxu0 %v833
      %2117 = vmatpush1.bf16.msra.mxu0 %v830
      %2118 = vmatprep.subr.bf16.mxu0 0
      %2119 = vmatpush2.bf16.msra.mxu0 0
      %2120 = vmatprep.subr.bf16.mxu0 0
      %2121 = vmatpush2.bf16.msra.mxu0 0
      %2122 = vmatprep.subr.bf16.mxu0 0
      %2123 = vmatpush2.bf16.msra.mxu0 0
      %2124 = vmatprep.subr.bf16.mxu0 0
      %2125 = vmatpush2.bf16.msra.mxu0 0
      %2126 = vmatprep.subr.bf16.mxu0 0
      %2127 = vmatpush2.bf16.msra.mxu0 0
      %2128 = vmatprep.subr.bf16.mxu0 0
      %2129 = vmatpush2.bf16.msra.mxu0 0
      %2130 = vmatprep.subr.bf16.mxu0 0
      %2131 = vmatpush2.bf16.msra.mxu0 0
      %2132 = vmatprep.subr.bf16.mxu0 0
      %2133 = vmatpush2.bf16.msra.mxu0 0
      %2134 = vmatprep.mubr.bf16.mxu0 0
      %2135 = vmatmul.mubr.bf16.gmra.mxu0 %v2094
      %v2136 = vpop.f32.mrf.mxu0
      %v2137 = vadd.f32 0.0, %v2136
      %v2138 = vpop.f32.mrf.mxu0
      %v2139 = vadd.f32 0.0, %v2138
      %v2140 = vpop.f32.mrf.mxu0
      %v2141 = vadd.f32 0.0, %v2140
      %v2142 = vpop.f32.mrf.mxu0
      %v2143 = vadd.f32 0.0, %v2142
      %2144 = vmatprep.mubr.bf16.mxu0 0
      %2145 = vmatmul.mubr.bf16.gmra.mxu0 %v2097
      %v2146 = vpop.f32.mrf.mxu0
      %v2147 = vadd.f32 0.0, %v2146
      %v2148 = vpop.f32.mrf.mxu0
      %v2149 = vadd.f32 0.0, %v2148
      %v2150 = vpop.f32.mrf.mxu0
      %v2151 = vadd.f32 0.0, %v2150
      %v2152 = vpop.f32.mrf.mxu0
      %v2153 = vadd.f32 0.0, %v2152
      %2154 = vmatprep.mubr.bf16.mxu0 0
      %2155 = vmatmul.mubr.bf16.gmra.mxu0 %v2100
      %v2156 = vpop.f32.mrf.mxu0
      %v2157 = vadd.f32 0.0, %v2156
      %v2158 = vpop.f32.mrf.mxu0
      %v2159 = vadd.f32 0.0, %v2158
      %v2160 = vpop.f32.mrf.mxu0
      %v2161 = vpop.f32.mrf.mxu0
      %2162 = vdwg.mxu0
      %2163 = vmatprep.subr.bf16.mxu0 0
      %2164 = vmatpush1.bf16.msra.mxu0 0
      %2165 = vmatprep.subr.bf16.mxu0 0
      %2166 = vmatpush1.bf16.msra.mxu0 0
      %2167 = vmatprep.subr.bf16.mxu0 0
      %2168 = vmatpush1.bf16.msra.mxu0 0
      %2169 = vmatprep.subr.bf16.mxu0 0
      %2170 = vmatpush1.bf16.msra.mxu0 0
      %2171 = vmatprep.subr.bf16.mxu0 0
      %2172 = vmatpush1.bf16.msra.mxu0 0
      %2173 = vmatprep.subr.bf16.mxu0 0
      %2174 = vmatpush1.bf16.msra.mxu0 0
      %2175 = vmatprep.subr.bf16.mxu0 0
      %2176 = vmatpush1.bf16.msra.mxu0 0
      %2177 = vmatprep.subr.bf16.mxu0 0
      %2178 = vmatpush1.bf16.msra.mxu0 %v836
      %2179 = vmatprep.subr.bf16.mxu0 0
      %2180 = vmatpush2.bf16.msra.mxu0 0
      %2181 = vmatprep.subr.bf16.mxu0 0
      %2182 = vmatpush2.bf16.msra.mxu0 0
      %2183 = vmatprep.subr.bf16.mxu0 0
      %2184 = vmatpush2.bf16.msra.mxu0 0
      %2185 = vmatprep.subr.bf16.mxu0 0
      %2186 = vmatpush2.bf16.msra.mxu0 0
      %2187 = vmatprep.subr.bf16.mxu0 0
      %2188 = vmatpush2.bf16.msra.mxu0 0
      %2189 = vmatprep.subr.bf16.mxu0 0
      %2190 = vmatpush2.bf16.msra.mxu0 0
      %2191 = vmatprep.subr.bf16.mxu0 0
      %2192 = vmatpush2.bf16.msra.mxu0 0
      %2193 = vmatprep.subr.bf16.mxu0 0
      %2194 = vmatpush2.bf16.msra.mxu0 0
      %2195 = vmatprep.mubr.bf16.mxu0 0
      %2196 = vmatmul.mubr.bf16.gmra.mxu0 %v2094
      %v2197 = vpop.f32.mrf.mxu0
      %v2198 = vadd.f32 0.0, %v2197
      %v2199 = vpop.f32.mrf.mxu0
      %v2200 = vpop.f32.mrf.mxu0
      %v2201 = vadd.f32 0.0, %v2200
      %v2202 = vpop.f32.mrf.mxu0
      %2203 = vmatprep.mubr.bf16.mxu0 0
      %2204 = vmatmul.mubr.bf16.gmra.mxu0 %v2097
      %v2205 = vpop.f32.mrf.mxu0
      %v2206 = vadd.f32 0.0, %v2205
      %v2207 = vpop.f32.mrf.mxu0
      %v2208 = vpop.f32.mrf.mxu0
      %v2209 = vadd.f32 0.0, %v2208
      %v2210 = vpop.f32.mrf.mxu0
      %2211 = vmatprep.mubr.bf16.mxu0 0
      %2212 = vmatmul.mubr.bf16.gmra.mxu0 %v2100
      %v2213 = vpop.f32.mrf.mxu0
      %v2214 = vadd.f32 0.0, %v2213
      %v2215 = vpop.f32.mrf.mxu0
      %v2216 = vpop.f32.mrf.mxu0
      %v2217 = vpop.f32.mrf.mxu0
      %2218 = vdwg.mxu0
      %v2224 = vunpack.c.l.b16 %v2082
      %v2225 = vunpack.c.l.b16 %v2083
      %v2226 = vunpack.c.l.b16 %v2084
      %v2227 = vunpack.c.l.b16 %v2085
      %v2228 = vunpack.c.l.b16 %v2086
      %v2229 = vpack.c.b16 %v2225, %v2224
      %v2230 = vpack.c.b16 %v2227, %v2226
      %v2231 = vpack.c.b16 %v2228, %v2228
      %v2233 = vsel %vm1000, %v2229, 0
      %v2236 = vsel %vm1000, %v2230, 0
      %v2239 = vsel %vm1000, %v2231, 0
      %2241 = vmatprep.subr.bf16.mxu0 0
      %2242 = vmatpush1.bf16.msra.mxu0 0
      %2243 = vmatprep.subr.bf16.mxu0 0
      %2244 = vmatpush1.bf16.msra.mxu0 0
      %2245 = vmatprep.subr.bf16.mxu0 0
      %2246 = vmatpush1.bf16.msra.mxu0 0
      %2247 = vmatprep.subr.bf16.mxu0 0
      %2248 = vmatpush1.bf16.msra.mxu0 0
      %2249 = vmatprep.subr.bf16.mxu0 0
      %2250 = vmatpush1.bf16.msra.mxu0 0
      %2251 = vmatprep.subr.bf16.mxu0 0
      %2252 = vmatpush1.bf16.msra.mxu0 0
      %2253 = vmatprep.subr.bf16.mxu0 %v992
      %2254 = vmatpush1.bf16.msra.mxu0 %v991
      %2255 = vmatprep.subr.bf16.mxu0 %v989
      %2256 = vmatpush1.bf16.msra.mxu0 %v988
      %2257 = vmatprep.subr.bf16.mxu0 0
      %2258 = vmatpush2.bf16.msra.mxu0 0
      %2259 = vmatprep.subr.bf16.mxu0 0
      %2260 = vmatpush2.bf16.msra.mxu0 0
      %2261 = vmatprep.subr.bf16.mxu0 0
      %2262 = vmatpush2.bf16.msra.mxu0 0
      %2263 = vmatprep.subr.bf16.mxu0 0
      %2264 = vmatpush2.bf16.msra.mxu0 0
      %2265 = vmatprep.subr.bf16.mxu0 0
      %2266 = vmatpush2.bf16.msra.mxu0 0
      %2267 = vmatprep.subr.bf16.mxu0 0
      %2268 = vmatpush2.bf16.msra.mxu0 0
      %2269 = vmatprep.subr.bf16.mxu0 0
      %2270 = vmatpush2.bf16.msra.mxu0 0
      %2271 = vmatprep.subr.bf16.mxu0 0
      %2272 = vmatpush2.bf16.msra.mxu0 0
      %2273 = vmatprep.mubr.bf16.mxu0 0
      %2274 = vmatmul.mubr.bf16.gmra.mxu0 %v2233
      %v2275 = vpop.f32.mrf.mxu0
      %v2276 = vadd.f32 0.0, %v2275
      %v2277 = vpop.f32.mrf.mxu0
      %v2278 = vadd.f32 0.0, %v2277
      %v2279 = vpop.f32.mrf.mxu0
      %v2280 = vadd.f32 0.0, %v2279
      %v2281 = vpop.f32.mrf.mxu0
      %v2282 = vadd.f32 0.0, %v2281
      %2283 = vmatprep.mubr.bf16.mxu0 0
      %2284 = vmatmul.mubr.bf16.gmra.mxu0 %v2236
      %v2285 = vpop.f32.mrf.mxu0
      %v2286 = vadd.f32 0.0, %v2285
      %v2287 = vpop.f32.mrf.mxu0
      %v2288 = vadd.f32 0.0, %v2287
      %v2289 = vpop.f32.mrf.mxu0
      %v2290 = vadd.f32 0.0, %v2289
      %v2291 = vpop.f32.mrf.mxu0
      %v2292 = vadd.f32 0.0, %v2291
      %2293 = vmatprep.mubr.bf16.mxu0 0
      %2294 = vmatmul.mubr.bf16.gmra.mxu0 %v2239
      %v2295 = vpop.f32.mrf.mxu0
      %v2296 = vadd.f32 0.0, %v2295
      %v2297 = vpop.f32.mrf.mxu0
      %v2298 = vadd.f32 0.0, %v2297
      %v2299 = vpop.f32.mrf.mxu0
      %v2300 = vpop.f32.mrf.mxu0
      %2301 = vdwg.mxu0
      %2302 = vmatprep.subr.bf16.mxu0 0
      %2303 = vmatpush1.bf16.msra.mxu0 0
      %2304 = vmatprep.subr.bf16.mxu0 0
      %2305 = vmatpush1.bf16.msra.mxu0 0
      %2306 = vmatprep.subr.bf16.mxu0 0
      %2307 = vmatpush1.bf16.msra.mxu0 0
      %2308 = vmatprep.subr.bf16.mxu0 0
      %2309 = vmatpush1.bf16.msra.mxu0 0
      %2310 = vmatprep.subr.bf16.mxu0 0
      %2311 = vmatpush1.bf16.msra.mxu0 0
      %2312 = vmatprep.subr.bf16.mxu0 0
      %2313 = vmatpush1.bf16.msra.mxu0 0
      %2314 = vmatprep.subr.bf16.mxu0 0
      %2315 = vmatpush1.bf16.msra.mxu0 %v993
      %2316 = vmatprep.subr.bf16.mxu0 0
      %2317 = vmatpush1.bf16.msra.mxu0 %v990
      %2318 = vmatprep.subr.bf16.mxu0 0
      %2319 = vmatpush2.bf16.msra.mxu0 0
      %2320 = vmatprep.subr.bf16.mxu0 0
      %2321 = vmatpush2.bf16.msra.mxu0 0
      %2322 = vmatprep.subr.bf16.mxu0 0
      %2323 = vmatpush2.bf16.msra.mxu0 0
      %2324 = vmatprep.subr.bf16.mxu0 0
      %2325 = vmatpush2.bf16.msra.mxu0 0
      %2326 = vmatprep.subr.bf16.mxu0 0
      %2327 = vmatpush2.bf16.msra.mxu0 0
      %2328 = vmatprep.subr.bf16.mxu0 0
      %2329 = vmatpush2.bf16.msra.mxu0 0
      %2330 = vmatprep.subr.bf16.mxu0 0
      %2331 = vmatpush2.bf16.msra.mxu0 0
      %2332 = vmatprep.subr.bf16.mxu0 0
      %2333 = vmatpush2.bf16.msra.mxu0 0
      %2334 = vmatprep.mubr.bf16.mxu0 0
      %2335 = vmatmul.mubr.bf16.gmra.mxu0 %v2233
      %v2336 = vpop.f32.mrf.mxu0
      %v2337 = vadd.f32 0.0, %v2336
      %v2338 = vpop.f32.mrf.mxu0
      %v2339 = vpop.f32.mrf.mxu0
      %v2340 = vadd.f32 0.0, %v2339
      %v2341 = vpop.f32.mrf.mxu0
      %2342 = vmatprep.mubr.bf16.mxu0 0
      %2343 = vmatmul.mubr.bf16.gmra.mxu0 %v2236
      %v2344 = vpop.f32.mrf.mxu0
      %v2345 = vadd.f32 0.0, %v2344
      %v2346 = vpop.f32.mrf.mxu0
      %v2347 = vpop.f32.mrf.mxu0
      %v2348 = vadd.f32 0.0, %v2347
      %v2349 = vpop.f32.mrf.mxu0
      %2350 = vmatprep.mubr.bf16.mxu0 0
      %2351 = vmatmul.mubr.bf16.gmra.mxu0 %v2239
      %v2352 = vpop.f32.mrf.mxu0
      %v2353 = vadd.f32 0.0, %v2352
      %v2354 = vpop.f32.mrf.mxu0
      %v2355 = vpop.f32.mrf.mxu0
      %v2356 = vpop.f32.mrf.mxu0
      %2357 = vdwg.mxu0
      %v2358 = vmul.f32 %v2137, %v2276
      %v2359 = vmul.f32 %v2139, %v2278
      %v2360 = vmul.f32 %v2198, %v2337
      %v2361 = vmul.f32 %v2141, %v2280
      %v2362 = vmul.f32 %v2143, %v2282
      %v2363 = vmul.f32 %v2201, %v2340
      %v2364 = vmul.f32 %v2147, %v2286
      %v2365 = vmul.f32 %v2149, %v2288
      %v2366 = vmul.f32 %v2206, %v2345
      %v2367 = vmul.f32 %v2151, %v2290
      %v2368 = vmul.f32 %v2153, %v2292
      %v2369 = vmul.f32 %v2209, %v2348
      %v2370 = vmul.f32 %v2157, %v2296
      %v2371 = vmul.f32 %v2159, %v2298
      %v2372 = vmul.f32 %v2214, %v2353
      %v2373 = vadd.f32 %v2066, %v2358
      %v2374 = vadd.f32 %v2067, %v2359
      %v2375 = vadd.f32 %v2068, %v2360
      %v2376 = vadd.f32 %v2069, %v2361
      %v2377 = vadd.f32 %v2070, %v2362
      %v2378 = vadd.f32 %v2071, %v2363
      %v2379 = vadd.f32 %v2072, %v2364
      %v2380 = vadd.f32 %v2073, %v2365
      %v2381 = vadd.f32 %v2074, %v2366
      %v2382 = vadd.f32 %v2075, %v2367
      %v2383 = vadd.f32 %v2076, %v2368
      %v2384 = vadd.f32 %v2077, %v2369
      %v2385 = vadd.f32 %v2078, %v2370
      %v2386 = vadd.f32 %v2079, %v2371
      %v2387 = vadd.f32 %v2080, %v2372
      %v2388 = vld [vmem:[%s8] sm:$0xff]
      %v2389 = vld [vmem:[%s8 + $0x8] sm:$0xff]
      %v2390 = vld [vmem:[%s8 + $0x10] sm:$0xff]
      %v2391 = vld [vmem:[%s8 + $0x18] sm:$0xff]
      %v2392 = vld [vmem:[%s8 + $0x20] sm:$0xff]
      %v2393 = vld [vmem:[%s8 + $0x28] sm:$0xff]
      %v2394 = vld [vmem:[%s8 + $0x30] sm:$0xff]
      %v2395 = vld [vmem:[%s8 + $0x38] sm:$0xff]
      %v2396 = vld [vmem:[%s8 + $0x40] sm:$0xff]
      %v2397 = vld [vmem:[%s8 + $0x48] sm:$0xff]
      %v2398 = vld [vmem:[%s8 + $0x50] sm:$0xff]
      %v2399 = vld [vmem:[%s8 + $0x58] sm:$0xff]
      %v2400 = vld [vmem:[%s8 + $0x60] sm:$0xff]
      %v2401 = vld [vmem:[%s8 + $0x68] sm:$0xff]
      %v2402 = vld [vmem:[%s8 + $0x70] sm:$0xff]
      %v2403 = vld [vmem:[%s8 + $0x78] sm:$0xff]
      %v2404 = vld [vmem:[%s8 + $0x80] sm:$0xff]
      %v2405 = vld [vmem:[%s8 + $0x88] sm:$0xff]
      %v2406 = vld [vmem:[%s8 + $0x90] sm:$0xff]
      %v2407 = vld [vmem:[%s8 + $0x98] sm:$0xff]
      %v2408 = vld [vmem:[%s8 + $0xa0] sm:$0xff]
      %v2409 = vld [vmem:[%s8 + $0xa8] sm:$0xff]
      %v2410 = vld [vmem:[%s8 + $0xb0] sm:$0xff]
      %v2411 = vld [vmem:[%s8 + $0xb8] sm:$0xff]
      %v2412 = vld [vmem:[%s8 + $0xc0] sm:$0xff]
      %v2413 = vld [vmem:[%s8 + $0xc8] sm:$0xff]
      %v2414 = vld [vmem:[%s8 + $0xd0] sm:$0xff]
      %v2415 = vld [vmem:[%s8 + $0xd8] sm:$0xff]
      %v2416 = vld [vmem:[%s8 + $0xe0] sm:$0xff]
      %v2417 = vld [vmem:[%s8 + $0xe8] sm:$0xff]
      %v2418 = vld [vmem:[%s8 + $0xf0] sm:$0xff]
      %v2419 = vld [vmem:[%s8 + $0xf8] sm:$0xff]
      %v2420 = vld [vmem:[%s8 + $0x100] sm:$0xff]
      %v2421 = vld [vmem:[%s8 + $0x108] sm:$0xff]
      %v2422 = vld [vmem:[%s8 + $0x110] sm:$0xff]
      %v2423 = vld [vmem:[%s8 + $0x118] sm:$0xff]
      %v2425 = vsel %vm1000, %v2375, 0
      %v2428 = vsel %vm1000, %v2378, 0
      %v2431 = vsel %vm1000, %v2381, 0
      %v2434 = vsel %vm1000, %v2384, 0
      %v2437 = vsel %vm1000, %v2387, 0
      %2439 = vmatprep.subr.mxu0 0.0
      %2440 = vmatpush1.msra.mxu0 %v2403
      %2441 = vmatprep.subr.mxu0 0.0
      %2442 = vmatpush1.msra.mxu0 %v2402
      %2443 = vmatprep.subr.mxu0 0.0
      %2444 = vmatpush1.msra.mxu0 %v2401
      %2445 = vmatprep.subr.mxu0 0.0
      %2446 = vmatpush1.msra.mxu0 %v2400
      %2447 = vmatprep.subr.mxu0 0.0
      %2448 = vmatpush1.msra.mxu0 %v2399
      %2449 = vmatprep.subr.mxu0 0.0
      %2450 = vmatpush1.msra.mxu0 %v2398
      %2451 = vmatprep.subr.mxu0 0.0
      %2452 = vmatpush1.msra.mxu0 %v2397
      %2453 = vmatprep.subr.mxu0 0.0
      %2454 = vmatpush1.msra.mxu0 %v2396
      %2455 = vmatprep.subr.mxu0 0.0
      %2456 = vmatpush1.msra.mxu0 %v2395
      %2457 = vmatprep.subr.mxu0 0.0
      %2458 = vmatpush1.msra.mxu0 %v2394
      %2459 = vmatprep.subr.mxu0 0.0
      %2460 = vmatpush1.msra.mxu0 %v2393
      %2461 = vmatprep.subr.mxu0 0.0
      %2462 = vmatpush1.msra.mxu0 %v2392
      %2463 = vmatprep.subr.mxu0 0.0
      %2464 = vmatpush1.msra.mxu0 %v2391
      %2465 = vmatprep.subr.mxu0 0.0
      %2466 = vmatpush1.msra.mxu0 %v2390
      %2467 = vmatprep.subr.mxu0 0.0
      %2468 = vmatpush1.msra.mxu0 %v2389
      %2469 = vmatprep.subr.mxu0 0.0
      %2470 = vmatpush1.msra.mxu0 %v2388
      %2471 = vmatprep.subr.mxu0 0.0
      %2472 = vmatpush2.msra.mxu0 %v2419
      %2473 = vmatprep.subr.mxu0 0.0
      %2474 = vmatpush2.msra.mxu0 %v2418
      %2475 = vmatprep.subr.mxu0 0.0
      %2476 = vmatpush2.msra.mxu0 %v2417
      %2477 = vmatprep.subr.mxu0 0.0
      %2478 = vmatpush2.msra.mxu0 %v2416
      %2479 = vmatprep.subr.mxu0 0.0
      %2480 = vmatpush2.msra.mxu0 %v2415
      %2481 = vmatprep.subr.mxu0 0.0
      %2482 = vmatpush2.msra.mxu0 %v2414
      %2483 = vmatprep.subr.mxu0 0.0
      %2484 = vmatpush2.msra.mxu0 %v2413
      %2485 = vmatprep.subr.mxu0 0.0
      %2486 = vmatpush2.msra.mxu0 %v2412
      %2487 = vmatprep.subr.mxu0 0.0
      %2488 = vmatpush2.msra.mxu0 %v2411
      %2489 = vmatprep.subr.mxu0 0.0
      %2490 = vmatpush2.msra.mxu0 %v2410
      %2491 = vmatprep.subr.mxu0 0.0
      %2492 = vmatpush2.msra.mxu0 %v2409
      %2493 = vmatprep.subr.mxu0 0.0
      %2494 = vmatpush2.msra.mxu0 %v2408
      %2495 = vmatprep.subr.mxu0 0.0
      %2496 = vmatpush2.msra.mxu0 %v2407
      %2497 = vmatprep.subr.mxu0 0.0
      %2498 = vmatpush2.msra.mxu0 %v2406
      %2499 = vmatprep.subr.mxu0 0.0
      %2500 = vmatpush2.msra.mxu0 %v2405
      %2501 = vmatprep.subr.mxu0 0.0
      %2502 = vmatpush2.msra.mxu0 %v2404
      %2503 = vmatprep.mubr.f32.mxu0 %v2374
      %2504 = vmatmul.mubr.f32.gmra.mxu0 %v2373
      %v2505 = vpop.f32.mrf.mxu0
      %v2506 = vadd.f32 0.0, %v2505
      %v2507 = vpop.f32.mrf.mxu0
      %2508 = vmatprep.mubr.f32.mxu0 %v2377
      %2509 = vmatmul.mubr.f32.gmra.mxu0 %v2376
      %v2510 = vpop.f32.mrf.mxu0
      %v2511 = vadd.f32 0.0, %v2510
      %v2512 = vpop.f32.mrf.mxu0
      %2513 = vmatprep.mubr.f32.mxu0 %v2380
      %2514 = vmatmul.mubr.f32.gmra.mxu0 %v2379
      %v2515 = vpop.f32.mrf.mxu0
      %v2516 = vadd.f32 0.0, %v2515
      %v2517 = vpop.f32.mrf.mxu0
      %2518 = vmatprep.mubr.f32.mxu0 %v2383
      %2519 = vmatmul.mubr.f32.gmra.mxu0 %v2382
      %v2520 = vpop.f32.mrf.mxu0
      %v2521 = vadd.f32 0.0, %v2520
      %v2522 = vpop.f32.mrf.mxu0
      %2523 = vmatprep.mubr.f32.mxu0 %v2386
      %2524 = vmatmul.mubr.f32.gmra.mxu0 %v2385
      %v2525 = vpop.f32.mrf.mxu0
      %v2526 = vadd.f32 0.0, %v2525
      %v2527 = vpop.f32.mrf.mxu0
      %2528 = vdwg.mxu0
      %2529 = vmatprep.subr.mxu0 0.0
      %2530 = vmatpush1.msra.mxu0 0.0
      %2531 = vmatprep.subr.mxu0 0.0
      %2532 = vmatpush1.msra.mxu0 0.0
      %2533 = vmatprep.subr.mxu0 0.0
      %2534 = vmatpush1.msra.mxu0 0.0
      %2535 = vmatprep.subr.mxu0 0.0
      %2536 = vmatpush1.msra.mxu0 0.0
      %2537 = vmatprep.subr.mxu0 0.0
      %2538 = vmatpush1.msra.mxu0 0.0
      %2539 = vmatprep.subr.mxu0 0.0
      %2540 = vmatpush1.msra.mxu0 0.0
      %2541 = vmatprep.subr.mxu0 0.0
      %2542 = vmatpush1.msra.mxu0 0.0
      %2543 = vmatprep.subr.mxu0 0.0
      %2544 = vmatpush1.msra.mxu0 0.0
      %2545 = vmatprep.subr.mxu0 0.0
      %2546 = vmatpush1.msra.mxu0 0.0
      %2547 = vmatprep.subr.mxu0 0.0
      %2548 = vmatpush1.msra.mxu0 0.0
      %2549 = vmatprep.subr.mxu0 0.0
      %2550 = vmatpush1.msra.mxu0 0.0
      %2551 = vmatprep.subr.mxu0 0.0
      %2552 = vmatpush1.msra.mxu0 0.0
      %2553 = vmatprep.subr.mxu0 0.0
      %2554 = vmatpush1.msra.mxu0 %v2423
      %2555 = vmatprep.subr.mxu0 0.0
      %2556 = vmatpush1.msra.mxu0 %v2422
      %2557 = vmatprep.subr.mxu0 0.0
      %2558 = vmatpush1.msra.mxu0 %v2421
      %2559 = vmatprep.subr.mxu0 0.0
      %2560 = vmatpush1.msra.mxu0 %v2420
      %2561 = vmatprep.subr.mxu0 0.0
      %2562 = vmatpush2.msra.mxu0 0.0
      %2563 = vmatprep.subr.mxu0 0.0
      %2564 = vmatpush2.msra.mxu0 0.0
      %2565 = vmatprep.subr.mxu0 0.0
      %2566 = vmatpush2.msra.mxu0 0.0
      %2567 = vmatprep.subr.mxu0 0.0
      %2568 = vmatpush2.msra.mxu0 0.0
      %2569 = vmatprep.subr.mxu0 0.0
      %2570 = vmatpush2.msra.mxu0 0.0
      %2571 = vmatprep.subr.mxu0 0.0
      %2572 = vmatpush2.msra.mxu0 0.0
      %2573 = vmatprep.subr.mxu0 0.0
      %2574 = vmatpush2.msra.mxu0 0.0
      %2575 = vmatprep.subr.mxu0 0.0
      %2576 = vmatpush2.msra.mxu0 0.0
      %2577 = vmatprep.subr.mxu0 0.0
      %2578 = vmatpush2.msra.mxu0 0.0
      %2579 = vmatprep.subr.mxu0 0.0
      %2580 = vmatpush2.msra.mxu0 0.0
      %2581 = vmatprep.subr.mxu0 0.0
      %2582 = vmatpush2.msra.mxu0 0.0
      %2583 = vmatprep.subr.mxu0 0.0
      %2584 = vmatpush2.msra.mxu0 0.0
      %2585 = vmatprep.subr.mxu0 0.0
      %2586 = vmatpush2.msra.mxu0 0.0
      %2587 = vmatprep.subr.mxu0 0.0
      %2588 = vmatpush2.msra.mxu0 0.0
      %2589 = vmatprep.subr.mxu0 0.0
      %2590 = vmatpush2.msra.mxu0 0.0
      %2591 = vmatprep.subr.mxu0 0.0
      %2592 = vmatpush2.msra.mxu0 0.0
      %2593 = vmatprep.mubr.f32.mxu0 0.0
      %2594 = vmatmul.mubr.f32.gmra.mxu0 %v2425
      %v2595 = vpop.f32.mrf.mxu0
      %v2596 = vadd.f32 %v2506, %v2595
      %v2597 = vpop.f32.mrf.mxu0
      %2598 = vmatprep.mubr.f32.mxu0 0.0
      %2599 = vmatmul.mubr.f32.gmra.mxu0 %v2428
      %v2600 = vpop.f32.mrf.mxu0
      %v2601 = vadd.f32 %v2511, %v2600
      %v2602 = vpop.f32.mrf.mxu0
      %2603 = vmatprep.mubr.f32.mxu0 0.0
      %2604 = vmatmul.mubr.f32.gmra.mxu0 %v2431
      %v2605 = vpop.f32.mrf.mxu0
      %v2606 = vadd.f32 %v2516, %v2605
      %v2607 = vpop.f32.mrf.mxu0
      %2608 = vmatprep.mubr.f32.mxu0 0.0
      %2609 = vmatmul.mubr.f32.gmra.mxu0 %v2434
      %v2610 = vpop.f32.mrf.mxu0
      %v2611 = vadd.f32 %v2521, %v2610
      %v2612 = vpop.f32.mrf.mxu0
      %2613 = vmatprep.mubr.f32.mxu0 0.0
      %2614 = vmatmul.mubr.f32.gmra.mxu0 %v2437
      %v2615 = vpop.f32.mrf.mxu0
      %v2616 = vadd.f32 %v2526, %v2615
      %v2617 = vpop.f32.mrf.mxu0
      %2618 = vdwg.mxu0
      %vm2619 = vcmp.ge.f32.partialorder %v2596, 0.0
      %vm2620 = vcmp.ge.f32.partialorder %v2601, 0.0
      %vm2621 = vcmp.ge.f32.partialorder %v2606, 0.0
      %vm2622 = vcmp.ge.f32.partialorder %v2611, 0.0
      %vm2623 = vcmp.ge.f32.partialorder %v2616, 0.0
      %v2624 = vmul.f32 %v2596, 0.1
      %v2625 = vmul.f32 %v2601, 0.1
      %v2626 = vmul.f32 %v2606, 0.1
      %v2627 = vmul.f32 %v2611, 0.1
      %v2628 = vmul.f32 %v2616, 0.1
      %v2629 = vsel %vm2619, %v2596, %v2624
      %v2630 = vsel %vm2620, %v2601, %v2625
      %v2631 = vsel %vm2621, %v2606, %v2626
      %v2632 = vsel %vm2622, %v2611, %v2627
      %v2633 = vsel %vm2623, %v2616, %v2628
      %v2634 = vld [vmem:[%s9] sm:$0xff]
      %v2635 = vld [vmem:[%s9 + $0x8] sm:$0xff]
      %v2636 = vld [vmem:[%s9 + $0x10] sm:$0xff]
      %v2637 = vld [vmem:[%s9 + $0x18] sm:$0xff]
      %v2638 = vld [vmem:[%s10] sm:$0x1]
      %v2640 = vlaneseq
      %v2641 = vshrl.u32 %v2640, 7
      %v2642 = vsub.s32 0, %v2641
      %v2643 = vrot.slane %v2638, %v2642
      %v2646 = vsel %vm1000, %v2629, 0
      %v2649 = vsel %vm1000, %v2630, 0
      %v2652 = vsel %vm1000, %v2631, 0
      %v2655 = vsel %vm1000, %v2632, 0
      %v2658 = vsel %vm1000, %v2633, 0
      %2660 = vmatprep.subr.mxu0 0.0
      %2661 = vmatpush1.msra.mxu0 0.0
      %2662 = vmatprep.subr.mxu0 0.0
      %2663 = vmatpush1.msra.mxu0 0.0
      %2664 = vmatprep.subr.mxu0 0.0
      %2665 = vmatpush1.msra.mxu0 0.0
      %2666 = vmatprep.subr.mxu0 0.0
      %2667 = vmatpush1.msra.mxu0 0.0
      %2668 = vmatprep.subr.mxu0 0.0
      %2669 = vmatpush1.msra.mxu0 0.0
      %2670 = vmatprep.subr.mxu0 0.0
      %2671 = vmatpush1.msra.mxu0 0.0
      %2672 = vmatprep.subr.mxu0 0.0
      %2673 = vmatpush1.msra.mxu0 0.0
      %2674 = vmatprep.subr.mxu0 0.0
      %2675 = vmatpush1.msra.mxu0 0.0
      %2676 = vmatprep.subr.mxu0 0.0
      %2677 = vmatpush1.msra.mxu0 0.0
      %2678 = vmatprep.subr.mxu0 0.0
      %2679 = vmatpush1.msra.mxu0 0.0
      %2680 = vmatprep.subr.mxu0 0.0
      %2681 = vmatpush1.msra.mxu0 0.0
      %2682 = vmatprep.subr.mxu0 0.0
      %2683 = vmatpush1.msra.mxu0 0.0
      %2684 = vmatprep.subr.mxu0 0.0
      %2685 = vmatpush1.msra.mxu0 %v2637
      %2686 = vmatprep.subr.mxu0 0.0
      %2687 = vmatpush1.msra.mxu0 %v2636
      %2688 = vmatprep.subr.mxu0 0.0
      %2689 = vmatpush1.msra.mxu0 %v2635
      %2690 = vmatprep.subr.mxu0 0.0
      %2691 = vmatpush1.msra.mxu0 %v2634
      %2692 = vmatprep.subr.mxu0 0.0
      %2693 = vmatpush2.msra.mxu0 0.0
      %2694 = vmatprep.subr.mxu0 0.0
      %2695 = vmatpush2.msra.mxu0 0.0
      %2696 = vmatprep.subr.mxu0 0.0
      %2697 = vmatpush2.msra.mxu0 0.0
      %2698 = vmatprep.subr.mxu0 0.0
      %2699 = vmatpush2.msra.mxu0 0.0
      %2700 = vmatprep.subr.mxu0 0.0
      %2701 = vmatpush2.msra.mxu0 0.0
      %2702 = vmatprep.subr.mxu0 0.0
      %2703 = vmatpush2.msra.mxu0 0.0
      %2704 = vmatprep.subr.mxu0 0.0
      %2705 = vmatpush2.msra.mxu0 0.0
      %2706 = vmatprep.subr.mxu0 0.0
      %2707 = vmatpush2.msra.mxu0 0.0
      %2708 = vmatprep.subr.mxu0 0.0
      %2709 = vmatpush2.msra.mxu0 0.0
      %2710 = vmatprep.subr.mxu0 0.0
      %2711 = vmatpush2.msra.mxu0 0.0
      %2712 = vmatprep.subr.mxu0 0.0
      %2713 = vmatpush2.msra.mxu0 0.0
      %2714 = vmatprep.subr.mxu0 0.0
      %2715 = vmatpush2.msra.mxu0 0.0
      %2716 = vmatprep.subr.mxu0 0.0
      %2717 = vmatpush2.msra.mxu0 0.0
      %2718 = vmatprep.subr.mxu0 0.0
      %2719 = vmatpush2.msra.mxu0 0.0
      %2720 = vmatprep.subr.mxu0 0.0
      %2721 = vmatpush2.msra.mxu0 0.0
      %2722 = vmatprep.subr.mxu0 0.0
      %2723 = vmatpush2.msra.mxu0 0.0
      %2724 = vmatprep.mubr.f32.mxu0 0.0
      %2725 = vmatmul.mubr.f32.gmra.mxu0 %v2646
      %v2726 = vpop.f32.mrf.mxu0
      %v2727 = vadd.f32 %v2643, %v2726
      %v2728 = vpop.f32.mrf.mxu0
      %2729 = vmatprep.mubr.f32.mxu0 0.0
      %2730 = vmatmul.mubr.f32.gmra.mxu0 %v2649
      %v2731 = vpop.f32.mrf.mxu0
      %v2732 = vadd.f32 %v2643, %v2731
      %v2733 = vpop.f32.mrf.mxu0
      %2734 = vmatprep.mubr.f32.mxu0 0.0
      %2735 = vmatmul.mubr.f32.gmra.mxu0 %v2652
      %v2736 = vpop.f32.mrf.mxu0
      %v2737 = vadd.f32 %v2643, %v2736
      %v2738 = vpop.f32.mrf.mxu0
      %2739 = vmatprep.mubr.f32.mxu0 0.0
      %2740 = vmatmul.mubr.f32.gmra.mxu0 %v2655
      %v2741 = vpop.f32.mrf.mxu0
      %v2742 = vadd.f32 %v2643, %v2741
      %v2743 = vpop.f32.mrf.mxu0
      %2744 = vmatprep.mubr.f32.mxu0 0.0
      %2745 = vmatmul.mubr.f32.gmra.mxu0 %v2658
      %v2746 = vpop.f32.mrf.mxu0
      %v2747 = vadd.f32 %v2643, %v2746
      %v2748 = vpop.f32.mrf.mxu0
      %2749 = vdwg.mxu0
      %v2750 = vmax.f32 %v2727, 0.0
      %v2751 = vmax.f32 %v2732, 0.0
      %v2752 = vmax.f32 %v2737, 0.0
      %v2753 = vmax.f32 %v2742, 0.0
      %v2754 = vmax.f32 %v2747, 0.0
      %v2755 = vand.u32 2147483647, %v2727
      %v2756 = vand.u32 2147483647, %v2732
      %v2757 = vand.u32 2147483647, %v2737
      %v2758 = vand.u32 2147483647, %v2742
      %v2759 = vand.u32 2147483647, %v2747
      %v2760 = vsub.f32 0.0, %v2755
      %v2761 = vsub.f32 0.0, %v2756
      %v2762 = vsub.f32 0.0, %v2757
      %v2763 = vsub.f32 0.0, %v2758
      %v2764 = vsub.f32 0.0, %v2759
      %v2765 = vmul.f32 %v2760, 1.442695
      %v2766 = vpow.pop %v2765
      %v2767 = vmul.f32 %v2761, 1.442695
      %v2768 = vpow.pop %v2767
      %v2769 = vmul.f32 %v2762, 1.442695
      %v2770 = vpow.pop %v2769
      %v2771 = vmul.f32 %v2763, 1.442695
      %v2772 = vpow.pop %v2771
      %v2773 = vmul.f32 %v2764, 1.442695
      %v2774 = vpow.pop %v2773
      %v2775 = vadd.f32 %v2766, 1.0
      %v2776 = vlog2.pop %v2775
      %v2777 = vmul.f32 %v2776, 0.6931472
      %v2778 = vmul.f32 -0.5, %v2766
      %v2779 = vadd.f32 %v2778, 1.0
      %v2780 = vmul.f32 %v2779, %v2766
      %v2781 = vand.u32 2147483647, %v2766
      %vm2782 = vcmp.lt.f32.partialorder %v2781, 0.0004427343
      %v2783 = vsel %vm2782, %v2780, %v2777
      %v2784 = vadd.f32 %v2768, 1.0
      %v2785 = vlog2.pop %v2784
      %v2786 = vmul.f32 %v2785, 0.6931472
      %v2787 = vmul.f32 -0.5, %v2768
      %v2788 = vadd.f32 %v2787, 1.0
      %v2789 = vmul.f32 %v2788, %v2768
      %v2790 = vand.u32 2147483647, %v2768
      %vm2791 = vcmp.lt.f32.partialorder %v2790, 0.0004427343
      %v2792 = vsel %vm2791, %v2789, %v2786
      %v2793 = vadd.f32 %v2770, 1.0
      %v2794 = vlog2.pop %v2793
      %v2795 = vmul.f32 %v2794, 0.6931472
      %v2796 = vmul.f32 -0.5, %v2770
      %v2797 = vadd.f32 %v2796, 1.0
      %v2798 = vmul.f32 %v2797, %v2770
      %v2799 = vand.u32 2147483647, %v2770
      %vm2800 = vcmp.lt.f32.partialorder %v2799, 0.0004427343
      %v2801 = vsel %vm2800, %v2798, %v2795
      %v2802 = vadd.f32 %v2772, 1.0
      %v2803 = vlog2.pop %v2802
      %v2804 = vmul.f32 %v2803, 0.6931472
      %v2805 = vmul.f32 -0.5, %v2772
      %v2806 = vadd.f32 %v2805, 1.0
      %v2807 = vmul.f32 %v2806, %v2772
      %v2808 = vand.u32 2147483647, %v2772
      %vm2809 = vcmp.lt.f32.partialorder %v2808, 0.0004427343
      %v2810 = vsel %vm2809, %v2807, %v2804
      %v2811 = vadd.f32 %v2774, 1.0
      %v2812 = vlog2.pop %v2811
      %v2813 = vmul.f32 %v2812, 0.6931472
      %v2814 = vmul.f32 -0.5, %v2774
      %v2815 = vadd.f32 %v2814, 1.0
      %v2816 = vmul.f32 %v2815, %v2774
      %v2817 = vand.u32 2147483647, %v2774
      %vm2818 = vcmp.lt.f32.partialorder %v2817, 0.0004427343
      %v2819 = vsel %vm2818, %v2816, %v2813
      %v2820 = vadd.f32 %v2750, %v2783
      %v2821 = vadd.f32 %v2751, %v2792
      %v2822 = vadd.f32 %v2752, %v2801
      %v2823 = vadd.f32 %v2753, %v2810
      %v2824 = vadd.f32 %v2754, %v2819
      %v2825 = vld [vmem:[%s11] sm:$0x1]
      %v2827 = vlaneseq
      %v2828 = vshrl.u32 %v2827, 7
      %v2829 = vsub.s32 0, %v2828
      %v2830 = vrot.slane %v2825, %v2829
      %v2832 = vmul.f32 %v2820, %v2830
      %v2833 = vmul.f32 %v2821, %v2830
      %v2834 = vmul.f32 %v2822, %v2830
      %v2835 = vmul.f32 %v2823, %v2830
      %v2836 = vmul.f32 %v2824, %v2830
      %2837 = vst.msk [vmem:[%s523] sm:$0xff] %vm544, %v2832
      %2838 = vst.msk [vmem:[%s523 + $0x8] sm:$0xff] %vm544, %v2833
      %2839 = vst.msk [vmem:[%s523 + $0x10] sm:$0xff] %vm544, %v2834
      %2840 = vst.msk [vmem:[%s523 + $0x18] sm:$0xff] %vm544, %v2835
      %2841 = vst.msk [vmem:[%s523 + $0x20] sm:$0xff] %vm544, %v2836
      %s2842 = smul.u32 5, %s28
      %p2843 = scmp.lt.s32.totalorder %s27, 1
      %s2844 = scalar_select %p2843, %s27, 1
      %p2845 = scmp.lt.s32.totalorder %s2842, 4
      %s2846 = scalar_select %p2845, %s2842, 4
      %s2847 = smul.addr %s2844, 5
      %s2848 = sadd.s32 %s2846, %s2847
      %s2849 = smul.addr %s2848, 8
      %s2850 = scalar_lea.vmem %s12, %s2849
      // Predicated region
      $region69: #{tpu_custom_call.1} parent=67 // pred_check
        %p2851 = pneg %p328
      $region70: #{tpu_custom_call.1} parent=67 // pred_check_branch
        %2853 = sbr.rel (%p2851) target = $region72
      $region71: #{tpu_custom_call.1} parent=67 // pred_region
        %s2854 = smul.u32 5, %s28
      $region72: #{tpu_custom_call.1} parent=67 // pred_fallthru
        _
    $region68: #{tpu_custom_call.1} parent=5 // pred_fallthru
      _
    %p2855 = scmp.le.s32.totalorder 2, %s18
    // Predicated region
    $region73: #{tpu_custom_call.1} parent=5 // pred_check
      %p2856 = pneg %p2855
    $region74: #{tpu_custom_call.1} parent=5 // pred_check_branch
      %2858 = sbr.rel (%p2856) target = $region76
    $region75: #{tpu_custom_call.1} parent=5 // pred_region
      %s2859 = ssub.s32 %s18, 2
      // Predicated region
      $region77: #{tpu_custom_call.1} parent=75 // pred_check
        %p2860 = pneg %p334
      $region78: #{tpu_custom_call.1} parent=75 // pred_check_branch
        %2862 = sbr.rel (%p2860) target = $region80
      $region79: #{tpu_custom_call.1} parent=75 // pred_region
        %s2863 = smul.u32 5, %s30
        %p2864 = scmp.lt.s32.totalorder %s29, 1
        %s2865 = scalar_select %p2864, %s29, 1
        %p2866 = scmp.lt.s32.totalorder %s2863, 4
        %s2867 = scalar_select %p2866, %s2863, 4
        %s2868 = smul.addr %s2865, 5
        %s2869 = sadd.s32 %s2867, %s2868
        %s2870 = smul.addr %s2869, 8
        %s2871 = scalar_lea.vmem %s12, %s2870
      $region80: #{tpu_custom_call.1} parent=75 // pred_fallthru
        _
    $region76: #{tpu_custom_call.1} parent=5 // pred_fallthru
      _
  $region6: #{tpu_custom_call.1} parent=0 // loop_footer
    %s22 = sadd.s32 1, %s18
  $region7: #{tpu_custom_call.1} parent=0 // loop_footer_branch
    %17 = sbr.rel target = $region3
  $region8: #{tpu_custom_call.1} parent=0 // loop_exit
    _

</llo_original>
